<compile_context>
chip_gen: v7x
topology: tpu7x:2x2x1
jax: 0.10.0
libtpu: 0.0.40
codegen_flags: <defaults>
</compile_context>

<pallas_src>
import jax
import jax.numpy as jnp
from jax.experimental import pallas as pl
from jax.experimental.pallas import tpu as pltpu

ACTION_SPACE_SIZE = 2
KERNEL1 = 8
KERNEL2 = 4
NUM_INPUT_CHANNELS = 4
STRIDE1 = 4
STRIDE2 = 2

CONV1_OUT = 16
CONV2_OUT = 32
HIDDEN = 256
FLAT = 2592            # 32 * 9 * 9  (forces 84x84 inputs)
OUT_PAD = 128          # lane-dense padded width for the 2-wide output layer
CONV1_TILE = 400       # one image's 20x20 positions per conv1 grid step
HEAD_SPLIT = 2         # hidden dim split into 2 x 128 columns (v7x megacore)


# ----------------------------------------------------------------------------
# Pallas kernels
# ----------------------------------------------------------------------------
def _conv_kernel(x_ref, w_ref, b_ref, o_ref):
    """o = relu(x @ w + b) for one [tm, K] row-tile of im2col patches."""
    acc = jnp.dot(x_ref[...], w_ref[...], preferred_element_type=jnp.float32)
    o_ref[...] = jnp.maximum(acc + b_ref[...], 0.0).astype(o_ref.dtype)


def _head_kernel(x_ref, wl_ref, bl_ref, wo_ref, o_ref):
    """One 128-wide hidden-column chunk: relu(x @ wl_chunk + bl_chunk) @ wo_chunk."""
    h = jnp.dot(x_ref[...], wl_ref[...], preferred_element_type=jnp.float32)
    h = jnp.maximum(h + bl_ref[...], 0.0).astype(jnp.bfloat16)
    o_ref[0] = jnp.dot(h, wo_ref[...], preferred_element_type=jnp.float32)


# ----------------------------------------------------------------------------
# Kernel wrappers
# ----------------------------------------------------------------------------
def conv_matmul(patches, w, b, *, tm):
    """patches: [M, K] bf16, w: [K, N] bf16, b: [1, N] f32 -> relu(patches@w+b): [M, N] bf16."""
    M, K = patches.shape
    K2, N = w.shape
    assert K == K2 and M % tm == 0, (patches.shape, w.shape, tm)
    grid_m = M // tm
    flops = 2 * M * K * N
    bytes_accessed = 2 * (M * K + K * N + M * N) + 4 * N
    return pl.pallas_call(
        _conv_kernel,
        out_shape=jax.ShapeDtypeStruct((M, N), jnp.bfloat16),
        grid_spec=pltpu.PrefetchScalarGridSpec(
            num_scalar_prefetch=0,
            grid=(grid_m,),
            in_specs=[
                pl.BlockSpec((tm, K), lambda i: (i, 0)),   # patch row-tile
                pl.BlockSpec((K, N), lambda i: (0, 0)),     # full weight (VMEM resident)
                pl.BlockSpec((1, N), lambda i: (0, 0)),     # bias row
            ],
            out_specs=pl.BlockSpec((tm, N), lambda i: (i, 0)),
        ),
        compiler_params=pltpu.CompilerParams(
            dimension_semantics=("parallel",)),
        cost_estimate=pl.CostEstimate(
            flops=flops, transcendentals=0, bytes_accessed=bytes_accessed),
    )(patches, w, b)


def head(flat, wl, bl, wo):
    """flat: [B, 2592] bf16 -> two partial outputs [2, B, 128] f32 (summed outside)."""
    B, K = flat.shape
    K2, H = wl.shape
    H2, NO = wo.shape
    assert K == K2 and H == H2 and H % HEAD_SPLIT == 0
    hb = H // HEAD_SPLIT
    flops = 2 * B * (K * H + H * NO)
    bytes_accessed = 2 * (B * K + K * H + H * NO) + 4 * (H + HEAD_SPLIT * B * NO)
    return pl.pallas_call(
        _head_kernel,
        out_shape=jax.ShapeDtypeStruct((HEAD_SPLIT, B, NO), jnp.float32),
        grid_spec=pltpu.PrefetchScalarGridSpec(
            num_scalar_prefetch=0,
            grid=(HEAD_SPLIT,),
            in_specs=[
                pl.BlockSpec((B, K), lambda i: (0, 0)),     # activations (shared)
                pl.BlockSpec((K, hb), lambda i: (0, i)),    # hidden-weight column chunk
                pl.BlockSpec((1, hb), lambda i: (0, i)),    # hidden-bias chunk
                pl.BlockSpec((hb, NO), lambda i: (i, 0)),   # output-weight row chunk
            ],
            out_specs=pl.BlockSpec((1, B, NO), lambda i: (i, 0, 0)),
        ),
        compiler_params=pltpu.CompilerParams(
            dimension_semantics=("parallel",)),
        cost_estimate=pl.CostEstimate(
            flops=flops, transcendentals=0, bytes_accessed=bytes_accessed),
    )(flat, wl, bl, wo)


# ----------------------------------------------------------------------------
# DQN forward (XLA glue: one merged transpose + 4-tap im2col per conv)
# ----------------------------------------------------------------------------
def dqn_forward(x_nchw, prep):
    B, C, H, W = x_nchw.shape
    assert C == NUM_INPUT_CHANNELS and H == 84 and W == 84, x_nchw.shape
    x = x_nchw.astype(jnp.bfloat16)

    # conv1: merged NCHW->NHWC + space-to-depth(4): [B,4,84,84] -> [B,21,21,64]
    # (s2d channel order = (di, dj, c); matched by prep["w1"]).
    xs = x.reshape(B, NUM_INPUT_CHANNELS, 21, STRIDE1, 21, STRIDE1)
    xs = jnp.transpose(xs, (0, 2, 4, 3, 5, 1)).reshape(B, 21, 21, 64)
    # 2x2 window, stride 1 -> [B, 20, 20, 256] -> [B*400, 256]
    p1 = jnp.concatenate(
        [xs[:, th:th + 20, tw:tw + 20, :] for th in range(2) for tw in range(2)],
        axis=-1).reshape(B * 400, KERNEL1 * KERNEL1 * NUM_INPUT_CHANNELS)
    out1 = conv_matmul(p1, prep["w1"], prep["b1"], tm=CONV1_TILE)    # [B*400, 16] bf16

    # conv2: space-to-depth(2): [B,20,20,16] -> [B,10,10,64], then 4 taps.
    o1 = out1.reshape(B, 10, STRIDE2, 10, STRIDE2, CONV1_OUT)
    o1 = jnp.transpose(o1, (0, 1, 3, 2, 4, 5)).reshape(B, 10, 10, 4 * CONV1_OUT)
    p2 = jnp.concatenate(
        [o1[:, th:th + 9, tw:tw + 9, :] for th in range(2) for tw in range(2)],
        axis=-1).reshape(B * 81, KERNEL2 * KERNEL2 * CONV1_OUT)
    out2 = conv_matmul(p2, prep["w2"], prep["b2"], tm=B * 81)        # [B*81, 32] bf16

    # flatten in (h, w, c) order (the torch (c, h, w) order is folded into wl)
    flat = out2.reshape(B, FLAT)                                     # [B, 2592] bf16

    # fused hidden Linear + ReLU + output layer, 2 parallel hidden-column chunks
    partials = head(flat, prep["wl"], prep["bl"], prep["wo"])        # [2, B, 128] f32
    return partials.sum(axis=0)[:, :ACTION_SPACE_SIZE] + prep["bo"]  # [B, 2]


# ----------------------------------------------------------------------------
# One-time parameter re-layout (done once, outside the jitted forward)
# ----------------------------------------------------------------------------
def prepare_params(params):
    f32, bf16 = jnp.float32, jnp.bfloat16
    r1 = KERNEL1 // STRIDE1   # 2
    r2 = KERNEL2 // STRIDE2   # 2

    # conv1: torch [Cout, Cin, KH, KW] -> [(th, tw, di, dj, cin), Cout]
    # matching the s2d 4-tap patch order (kh = 4*th + di, kw = 4*tw + dj).
    w1 = params["conv1_w"].astype(f32).reshape(
        CONV1_OUT, NUM_INPUT_CHANNELS, r1, STRIDE1, r1, STRIDE1)
    w1 = jnp.transpose(w1, (2, 4, 3, 5, 1, 0)).reshape(
        KERNEL1 * KERNEL1 * NUM_INPUT_CHANNELS, CONV1_OUT).astype(bf16)

    # conv2: same trick with kh = 2*th + di, kw = 2*tw + dj.
    w2 = params["conv2_w"].astype(f32).reshape(
        CONV2_OUT, CONV1_OUT, r2, STRIDE2, r2, STRIDE2)
    w2 = jnp.transpose(w2, (2, 4, 3, 5, 1, 0)).reshape(
        KERNEL2 * KERNEL2 * CONV1_OUT, CONV2_OUT).astype(bf16)

    # hidden linear: fold torch's (c, h, w) flatten into the kernel-side
    # (h, w, c) flatten:  wl[(h*9 + w)*32 + c, n] = lin_w[n, c*81 + h*9 + w]
    wl = params["lin_w"].astype(f32).reshape(HIDDEN, CONV2_OUT, 9, 9)
    wl = jnp.transpose(wl, (2, 3, 1, 0)).reshape(FLAT, HIDDEN).astype(bf16)

    # output layer: zero-pad 2 -> 128 columns so the head store is lane-dense.
    wo = jnp.zeros((HIDDEN, OUT_PAD), bf16)
    wo = wo.at[:, :ACTION_SPACE_SIZE].set(params["out_w"].T.astype(bf16))

    return {
        "w1": w1, "b1": params["conv1_b"].reshape(1, CONV1_OUT).astype(f32),
        "w2": w2, "b2": params["conv2_b"].reshape(1, CONV2_OUT).astype(f32),
        "wl": wl, "bl": params["lin_b"].reshape(1, HIDDEN).astype(f32),
        "wo": wo, "bo": params["out_b"].astype(f32),   # added in XLA after the partial sum
    }


# ----------------------------------------------------------------------------
# Deterministic synthetic parameters (torch-layout shapes)
# ----------------------------------------------------------------------------
def init_params(key):
    ks = jax.random.split(key, 8)

    def u(k, shape, fan_in):
        bound = 1.0 / jnp.sqrt(fan_in)
        return jax.random.uniform(k, shape, jnp.float32, -bound, bound)

    return {
        "conv1_w": u(ks[0], (CONV1_OUT, NUM_INPUT_CHANNELS, KERNEL1, KERNEL1),
                     NUM_INPUT_CHANNELS * KERNEL1 * KERNEL1),
        "conv1_b": u(ks[1], (CONV1_OUT,), NUM_INPUT_CHANNELS * KERNEL1 * KERNEL1),
        "conv2_w": u(ks[2], (CONV2_OUT, CONV1_OUT, KERNEL2, KERNEL2),
                     CONV1_OUT * KERNEL2 * KERNEL2),
        "conv2_b": u(ks[3], (CONV2_OUT,), CONV1_OUT * KERNEL2 * KERNEL2),
        "lin_w":   u(ks[4], (HIDDEN, FLAT), FLAT),
        "lin_b":   u(ks[5], (HIDDEN,), FLAT),
        "out_w":   u(ks[6], (ACTION_SPACE_SIZE, HIDDEN), HIDDEN),
        "out_b":   u(ks[7], (ACTION_SPACE_SIZE,), HIDDEN),
    }


if __name__ == "__main__":
    key = jax.random.PRNGKey(0)
    k_param, k_x = jax.random.split(key)
    params = init_params(k_param)
    prep = prepare_params(params)          # one-time weight re-layout

    # Input spatial size 84x84 is forced by Linear(2592, ...) (32*9*9 = 2592).
    B = 2
    x = jax.random.normal(k_x, (B, NUM_INPUT_CHANNELS, 84, 84), jnp.float32)

    y = jax.jit(dqn_forward)(x, prep)
    jax.block_until_ready(y)
    assert y.shape == (B, ACTION_SPACE_SIZE), y.shape
    print("KERNEL_OK")
</pallas_src>

<mosaic_0001>
module attributes {stable_mosaic.version = 11 : i64} {
  func.func @_conv_kernel(%arg0: i32, %arg1: memref<400x256xbf16, #tpu.memory_space<vmem>>, %arg2: memref<256x16xbf16, #tpu.memory_space<vmem>>, %arg3: memref<1x16xf32, #tpu.memory_space<vmem>>, %arg4: memref<400x16xbf16, #tpu.memory_space<vmem>>) attributes {dimension_semantics = [#tpu.dimension_semantics<parallel>], iteration_bounds = array<i64: 2>, scalar_prefetch = 0 : i64, scratch_operands = 0 : i64, tpu.core_type = #tpu.core_type<tc>, window_params = [{transform_indices = @transform_0, window_bounds = array<i64: 400, 256>}, {pipeline_mode = #tpu.pipeline_mode<synchronous>, transform_indices = @transform_1, window_bounds = array<i64: 256, 16>}, {pipeline_mode = #tpu.pipeline_mode<synchronous>, transform_indices = @transform_2, window_bounds = array<i64: 1, 16>}, {transform_indices = @transform_3, window_bounds = array<i64: 400, 16>}]} {
    %c0 = arith.constant 0 : index
    %c0_0 = arith.constant 0 : index
    %0 = vector.load %arg1[%c0, %c0_0] : memref<400x256xbf16, #tpu.memory_space<vmem>>, vector<400x256xbf16>
    %c0_1 = arith.constant 0 : index
    %c0_2 = arith.constant 0 : index
    %1 = vector.load %arg2[%c0_1, %c0_2] : memref<256x16xbf16, #tpu.memory_space<vmem>>, vector<256x16xbf16>
    %cst = arith.constant dense<0.000000e+00> : vector<400x16xf32>
    %2 = tpu.matmul %0, %1, %cst {dimension_numbers = #tpu.dot_dimension_numbers<[1], [0], [0], [1], [0, 0, 1, 1], [], []>} : vector<400x256xbf16>, vector<256x16xbf16>, vector<400x16xf32> -> vector<400x16xf32>
    %c0_3 = arith.constant 0 : index
    %c0_4 = arith.constant 0 : index
    %3 = vector.load %arg3[%c0_3, %c0_4] : memref<1x16xf32, #tpu.memory_space<vmem>>, vector<1x16xf32>
    %4 = vector.broadcast %3 : vector<1x16xf32> to vector<400x16xf32>
    %5 = arith.addf %2, %4 : vector<400x16xf32>
    %cst_5 = arith.constant 0.000000e+00 : f32
    %6 = vector.broadcast %cst_5 : f32 to vector<400x16xf32>
    %7 = arith.maximumf %5, %6 : vector<400x16xf32>
    %8 = arith.truncf %7 : vector<400x16xf32> to vector<400x16xbf16>
    %c0_6 = arith.constant 0 : index
    %c0_7 = arith.constant 0 : index
    %9 = vector.load %arg4[%c0_6, %c0_7] : memref<400x16xbf16, #tpu.memory_space<vmem>>, vector<400x16xbf16>
    tpu.vector_store %arg4[%c0_6, %c0_7], %8 {strides = array<i32>} : memref<400x16xbf16, #tpu.memory_space<vmem>>, vector<400x16xbf16>,
    return
  }
  func.func @transform_0(%arg0: i32) -> (i32, i32) {
    %c0_i32 = arith.constant 0 : i32
    %c0_i32_0 = arith.constant 0 : i32
    return %arg0, %c0_i32 : i32, i32
  }
  func.func @transform_1(%arg0: i32) -> (i32, i32) {
    %c0_i32 = arith.constant 0 : i32
    %c0_i32_0 = arith.constant 0 : i32
    %c0_i32_1 = arith.constant 0 : i32
    return %c0_i32, %c0_i32_0 : i32, i32
  }
  func.func @transform_2(%arg0: i32) -> (i32, i32) {
    %c0_i32 = arith.constant 0 : i32
    %c0_i32_0 = arith.constant 0 : i32
    %c0_i32_1 = arith.constant 0 : i32
    return %c0_i32, %c0_i32_0 : i32, i32
  }
  func.func @transform_3(%arg0: i32) -> (i32, i32) {
    %c0_i32 = arith.constant 0 : i32
    %c0_i32_0 = arith.constant 0 : i32
    return %arg0, %c0_i32 : i32, i32
  }
}

module attributes {stable_mosaic.version = 11 : i64} {
  func.func @_conv_kernel(%arg0: i32, %arg1: memref<162x256xbf16, #tpu.memory_space<vmem>>, %arg2: memref<256x32xbf16, #tpu.memory_space<vmem>>, %arg3: memref<1x32xf32, #tpu.memory_space<vmem>>, %arg4: memref<162x32xbf16, #tpu.memory_space<vmem>>) attributes {dimension_semantics = [#tpu.dimension_semantics<parallel>], iteration_bounds = array<i64: 1>, scalar_prefetch = 0 : i64, scratch_operands = 0 : i64, tpu.core_type = #tpu.core_type<tc>, window_params = [{transform_indices = @transform_0, window_bounds = array<i64: 162, 256>}, {pipeline_mode = #tpu.pipeline_mode<synchronous>, transform_indices = @transform_1, window_bounds = array<i64: 256, 32>}, {pipeline_mode = #tpu.pipeline_mode<synchronous>, transform_indices = @transform_2, window_bounds = array<i64: 1, 32>}, {transform_indices = @transform_3, window_bounds = array<i64: 162, 32>}]} {
    %c0 = arith.constant 0 : index
    %c0_0 = arith.constant 0 : index
    %0 = vector.load %arg1[%c0, %c0_0] : memref<162x256xbf16, #tpu.memory_space<vmem>>, vector<162x256xbf16>
    %c0_1 = arith.constant 0 : index
    %c0_2 = arith.constant 0 : index
    %1 = vector.load %arg2[%c0_1, %c0_2] : memref<256x32xbf16, #tpu.memory_space<vmem>>, vector<256x32xbf16>
    %cst = arith.constant dense<0.000000e+00> : vector<162x32xf32>
    %2 = tpu.matmul %0, %1, %cst {dimension_numbers = #tpu.dot_dimension_numbers<[1], [0], [0], [1], [0, 0, 1, 1], [], []>} : vector<162x256xbf16>, vector<256x32xbf16>, vector<162x32xf32> -> vector<162x32xf32>
    %c0_3 = arith.constant 0 : index
    %c0_4 = arith.constant 0 : index
    %3 = vector.load %arg3[%c0_3, %c0_4] : memref<1x32xf32, #tpu.memory_space<vmem>>, vector<1x32xf32>
    %4 = vector.broadcast %3 : vector<1x32xf32> to vector<162x32xf32>
    %5 = arith.addf %2, %4 : vector<162x32xf32>
    %cst_5 = arith.constant 0.000000e+00 : f32
    %6 = vector.broadcast %cst_5 : f32 to vector<162x32xf32>
    %7 = arith.maximumf %5, %6 : vector<162x32xf32>
    %8 = arith.truncf %7 : vector<162x32xf32> to vector<162x32xbf16>
    %c0_6 = arith.constant 0 : index
    %c0_7 = arith.constant 0 : index
    %9 = vector.load %arg4[%c0_6, %c0_7] : memref<162x32xbf16, #tpu.memory_space<vmem>>, vector<162x32xbf16>
    tpu.vector_store %arg4[%c0_6, %c0_7], %8 {strides = array<i32>} : memref<162x32xbf16, #tpu.memory_space<vmem>>, vector<162x32xbf16>,
    return
  }
  func.func @transform_0(%arg0: i32) -> (i32, i32) {
    %c0_i32 = arith.constant 0 : i32
    %c0_i32_0 = arith.constant 0 : i32
    return %arg0, %c0_i32 : i32, i32
  }
  func.func @transform_1(%arg0: i32) -> (i32, i32) {
    %c0_i32 = arith.constant 0 : i32
    %c0_i32_0 = arith.constant 0 : i32
    %c0_i32_1 = arith.constant 0 : i32
    return %c0_i32, %c0_i32_0 : i32, i32
  }
  func.func @transform_2(%arg0: i32) -> (i32, i32) {
    %c0_i32 = arith.constant 0 : i32
    %c0_i32_0 = arith.constant 0 : i32
    %c0_i32_1 = arith.constant 0 : i32
    return %c0_i32, %c0_i32_0 : i32, i32
  }
  func.func @transform_3(%arg0: i32) -> (i32, i32) {
    %c0_i32 = arith.constant 0 : i32
    %c0_i32_0 = arith.constant 0 : i32
    return %arg0, %c0_i32 : i32, i32
  }
}

module attributes {stable_mosaic.version = 11 : i64} {
  func.func @_head_kernel(%arg0: i32, %arg1: memref<2x2592xbf16, #tpu.memory_space<vmem>>, %arg2: memref<2592x128xbf16, #tpu.memory_space<vmem>>, %arg3: memref<1x128xf32, #tpu.memory_space<vmem>>, %arg4: memref<128x128xbf16, #tpu.memory_space<vmem>>, %arg5: memref<1x2x128xf32, #tpu.memory_space<vmem>>) attributes {dimension_semantics = [#tpu.dimension_semantics<parallel>], iteration_bounds = array<i64: 2>, scalar_prefetch = 0 : i64, scratch_operands = 0 : i64, tpu.core_type = #tpu.core_type<tc>, window_params = [{pipeline_mode = #tpu.pipeline_mode<synchronous>, transform_indices = @transform_0, window_bounds = array<i64: 2, 2592>}, {transform_indices = @transform_1, window_bounds = array<i64: 2592, 128>}, {transform_indices = @transform_2, window_bounds = array<i64: 1, 128>}, {transform_indices = @transform_3, window_bounds = array<i64: 128, 128>}, {transform_indices = @transform_4, window_bounds = array<i64: 1, 2, 128>}]} {
    %c0 = arith.constant 0 : index
    %c0_0 = arith.constant 0 : index
    %0 = vector.load %arg1[%c0, %c0_0] : memref<2x2592xbf16, #tpu.memory_space<vmem>>, vector<2x2592xbf16>
    %c0_1 = arith.constant 0 : index
    %c0_2 = arith.constant 0 : index
    %1 = vector.load %arg2[%c0_1, %c0_2] : memref<2592x128xbf16, #tpu.memory_space<vmem>>, vector<2592x128xbf16>
    %cst = arith.constant dense<0.000000e+00> : vector<2x128xf32>
    %2 = tpu.matmul %0, %1, %cst {dimension_numbers = #tpu.dot_dimension_numbers<[1], [0], [0], [1], [0, 0, 1, 1], [], []>} : vector<2x2592xbf16>, vector<2592x128xbf16>, vector<2x128xf32> -> vector<2x128xf32>
    %c0_3 = arith.constant 0 : index
    %c0_4 = arith.constant 0 : index
    %3 = vector.load %arg3[%c0_3, %c0_4] : memref<1x128xf32, #tpu.memory_space<vmem>>, vector<1x128xf32>
    %4 = vector.broadcast %3 : vector<1x128xf32> to vector<2x128xf32>
    %5 = arith.addf %2, %4 : vector<2x128xf32>
    %cst_5 = arith.constant 0.000000e+00 : f32
    %6 = vector.broadcast %cst_5 : f32 to vector<2x128xf32>
    %7 = arith.maximumf %5, %6 : vector<2x128xf32>
    %8 = arith.truncf %7 : vector<2x128xf32> to vector<2x128xbf16>
    %c0_6 = arith.constant 0 : index
    %c0_7 = arith.constant 0 : index
    %9 = vector.load %arg4[%c0_6, %c0_7] : memref<128x128xbf16, #tpu.memory_space<vmem>>, vector<128x128xbf16>
    %cst_8 = arith.constant dense<0.000000e+00> : vector<2x128xf32>
    %10 = tpu.matmul %8, %9, %cst_8 {dimension_numbers = #tpu.dot_dimension_numbers<[1], [0], [0], [1], [0, 0, 1, 1], [], []>} : vector<2x128xbf16>, vector<128x128xbf16>, vector<2x128xf32> -> vector<2x128xf32>
    %c0_9 = arith.constant 0 : index
    %c0_10 = arith.constant 0 : index
    %c0_11 = arith.constant 0 : index
    %11 = vector.load %arg5[%c0_9, %c0_10, %c0_11] : memref<1x2x128xf32, #tpu.memory_space<vmem>>, vector<1x2x128xf32>
    %12 = vector.shape_cast %11 : vector<1x2x128xf32> to vector<2x128xf32>
    %13 = vector.shape_cast %10 : vector<2x128xf32> to vector<1x2x128xf32>
    tpu.vector_store %arg5[%c0_9, %c0_10, %c0_11], %13 {strides = array<i32>} : memref<1x2x128xf32, #tpu.memory_space<vmem>>, vector<1x2x128xf32>,
    return
  }
  func.func @transform_0(%arg0: i32) -> (i32, i32) {
    %c0_i32 = arith.constant 0 : i32
    %c0_i32_0 = arith.constant 0 : i32
    %c0_i32_1 = arith.constant 0 : i32
    return %c0_i32, %c0_i32_0 : i32, i32
  }
  func.func @transform_1(%arg0: i32) -> (i32, i32) {
    %c0_i32 = arith.constant 0 : i32
    %c0_i32_0 = arith.constant 0 : i32
    return %c0_i32, %arg0 : i32, i32
  }
  func.func @transform_2(%arg0: i32) -> (i32, i32) {
    %c0_i32 = arith.constant 0 : i32
    %c0_i32_0 = arith.constant 0 : i32
    return %c0_i32, %arg0 : i32, i32
  }
  func.func @transform_3(%arg0: i32) -> (i32, i32) {
    %c0_i32 = arith.constant 0 : i32
    %c0_i32_0 = arith.constant 0 : i32
    return %arg0, %c0_i32 : i32, i32
  }
  func.func @transform_4(%arg0: i32) -> (i32, i32, i32) {
    %c0_i32 = arith.constant 0 : i32
    %c0_i32_0 = arith.constant 0 : i32
    %c0_i32_1 = arith.constant 0 : i32
    return %arg0, %c0_i32, %c0_i32_0 : i32, i32, i32
  }
}

</mosaic_0001>

<llo_original>
// kernel: dqn_forward.3
$region0: #{dqn_forward.3}
  #allocation0 [shape = 'u32[]', space=smem, size = 0x4, offset = 0x4, fixed_abs, tag = 'smem constant byte address 0x4 - core index']
  #allocation1 [shape = 'u32[144,128]{1,0:T(1,128)}', space=vmem, size = 0x12000, scoped, tag = 'internal scratch']
  %s0 = inlined_call_operand.vmem [shape: bf16[800,256], index: 0, kind: input, shape index: {}]
  %s1 = inlined_call_operand.vmem [shape: bf16[256,16], index: 1, kind: input, shape index: {}]
  %s2 = inlined_call_operand.vmem [shape: f32[1,16], index: 2, kind: input, shape index: {}]
  %s3 = inlined_call_operand.vmem [shape: bf16[800,16], index: 3, kind: output, shape index: {}]
  %s4 = sld [smem:[#allocation0]]
  $region45: #{dqn_forward.3} parent=0
    _
  %s6 = ssub.s32 1, %s4
  %s7 = scalar_select 0, %s6, %s4
  loop: start=0, step=1, limit=4
  $region2: #{dqn_forward.3} parent=0 // loop_pre_header
    _
  $region3: #{dqn_forward.3} parent=0 // loop_header
    %s9 = sphi 0, %s13
    %p10 = scmp.ge.s32.totalorder %s9, 4
    %s19 = sphi 0, %s21
    %s22 = sphi 0, %s19
    %s23 = sphi 0, %s22
    %s39 = sphi 0, %s23
    %s43 = sphi 0, %s43
    %s45 = sphi 0, %s43
    %s46 = sphi 0, %s45
    %s60 = sphi 0, %s46
    %s64 = sphi 0, %s64
    %s66 = sphi 0, %s64
    %s67 = sphi 0, %s66
    %s81 = sphi 0, %s67
    %s87 = sphi 0, %s89
    %s90 = sphi 0, %s87
    %s91 = sphi 0, %s90
    %s107 = sphi 0, %s91
  $region4: #{dqn_forward.3} parent=0 // loop_header_branch
    %12 = sbr.rel (%p10) target = $region8
  $region5: #{dqn_forward.3} parent=0 // loop_body
    %s14 = ssub.s32 %s9, 1
    %s15 = ssub.s32 %s9, 2
    %s16 = sadd.s32 %s9, 1
    %s17 = ssub.s32 %s9, %s16
    %p18 = scmp.eq.s32.totalorder %s17, 0
    %s20 = sadd.s32 %s19, 1
    %s21 = scalar_select %p18, %s19, %s20
    %p24 = pneg %p18
    %p25 = scmp.eq.s32.totalorder %s9, 1
    %p26 = por %p24, %p25
    %p27 = scmp.ne.s32.totalorder %s19, %s22
    %p28 = scmp.eq.s32.totalorder %s9, 0
    %p29 = por %p27, %p28
    %p30 = scmp.ne.s32.totalorder %s19, %s22
    %p31 = scmp.eq.s32.totalorder %s14, 1
    %p32 = por %p30, %p31
    %p33 = scmp.ne.s32.totalorder %s22, %s23
    %p34 = scmp.eq.s32.totalorder %s14, 0
    %p35 = por %p33, %p34
    %p36 = scmp.ne.s32.totalorder %s22, %s23
    %p37 = scmp.eq.s32.totalorder %s15, 1
    %p38 = por %p36, %p37
    %p40 = scmp.ne.s32.totalorder %s23, %s39
    %p41 = scmp.eq.s32.totalorder %s15, 0
    %p42 = por %p40, %p41
    %s44 = sadd.s32 %s43, 1
    %p47 = scmp.eq.s32.totalorder %s9, 1
    %p48 = scmp.ne.s32.totalorder %s43, %s45
    %p49 = scmp.eq.s32.totalorder %s9, 0
    %p50 = por %p48, %p49
    %p51 = scmp.ne.s32.totalorder %s43, %s45
    %p52 = scmp.eq.s32.totalorder %s14, 1
    %p53 = por %p51, %p52
    %p54 = scmp.ne.s32.totalorder %s45, %s46
    %p55 = scmp.eq.s32.totalorder %s14, 0
    %p56 = por %p54, %p55
    %p57 = scmp.ne.s32.totalorder %s45, %s46
    %p58 = scmp.eq.s32.totalorder %s15, 1
    %p59 = por %p57, %p58
    %p61 = scmp.ne.s32.totalorder %s46, %s60
    %p62 = scmp.eq.s32.totalorder %s15, 0
    %p63 = por %p61, %p62
    %s65 = sadd.s32 %s64, 1
    %p68 = scmp.eq.s32.totalorder %s9, 1
    %p69 = scmp.ne.s32.totalorder %s64, %s66
    %p70 = scmp.eq.s32.totalorder %s9, 0
    %p71 = por %p69, %p70
    %p72 = scmp.ne.s32.totalorder %s64, %s66
    %p73 = scmp.eq.s32.totalorder %s14, 1
    %p74 = por %p72, %p73
    %p75 = scmp.ne.s32.totalorder %s66, %s67
    %p76 = scmp.eq.s32.totalorder %s14, 0
    %p77 = por %p75, %p76
    %p78 = scmp.ne.s32.totalorder %s66, %s67
    %p79 = scmp.eq.s32.totalorder %s15, 1
    %p80 = por %p78, %p79
    %p82 = scmp.ne.s32.totalorder %s67, %s81
    %p83 = scmp.eq.s32.totalorder %s15, 0
    %p84 = por %p82, %p83
    %s85 = ssub.s32 %s9, %s16
    %p86 = scmp.eq.s32.totalorder %s85, 0
    %s88 = sadd.s32 %s87, 1
    %s89 = scalar_select %p86, %s87, %s88
    %p92 = pneg %p86
    %p93 = scmp.eq.s32.totalorder %s9, 1
    %p94 = por %p92, %p93
    %p95 = scmp.ne.s32.totalorder %s87, %s90
    %p96 = scmp.eq.s32.totalorder %s9, 0
    %p97 = por %p95, %p96
    %p98 = scmp.ne.s32.totalorder %s87, %s90
    %p99 = scmp.eq.s32.totalorder %s14, 1
    %p100 = por %p98, %p99
    %p101 = scmp.ne.s32.totalorder %s90, %s91
    %p102 = scmp.eq.s32.totalorder %s14, 0
    %p103 = por %p101, %p102
    %p104 = scmp.ne.s32.totalorder %s90, %s91
    %p105 = scmp.eq.s32.totalorder %s15, 1
    %p106 = por %p104, %p105
    %p108 = scmp.ne.s32.totalorder %s91, %s107
    %p109 = scmp.eq.s32.totalorder %s15, 0
    %p110 = por %p108, %p109
    %p111 = scmp.le.s32.totalorder 1, %s9
    %p112 = scmp.lt.s32.totalorder %s9, 3
    %p113 = pnand %p111, %p112
    %p114 = pneg %p113
    // Predicated region
    $region9: #{dqn_forward.3} parent=5 // pred_check
      _
    $region10: #{dqn_forward.3} parent=5 // pred_check_branch
      %116 = sbr.rel (%p113) target = $region12
    $region11: #{dqn_forward.3} parent=5 // pred_region
      %s117 = ssub.s32 %s9, 1
      // Predicated region
      $region13: #{dqn_forward.3} parent=11 // pred_check
        %p118 = pneg %p56
      $region14: #{dqn_forward.3} parent=11 // pred_check_branch
        %120 = sbr.rel (%p118) target = $region16
      $region15: #{dqn_forward.3} parent=11 // pred_region
        _
      $region16: #{dqn_forward.3} parent=11 // pred_fallthru
        _
      // Predicated region
      $region17: #{dqn_forward.3} parent=11 // pred_check
        %p121 = pneg %p77
      $region18: #{dqn_forward.3} parent=11 // pred_check_branch
        %123 = sbr.rel (%p121) target = $region20
      $region19: #{dqn_forward.3} parent=11 // pred_region
        _
      $region20: #{dqn_forward.3} parent=11 // pred_fallthru
        _
    $region12: #{dqn_forward.3} parent=5 // pred_fallthru
      _
    %p124 = scmp.lt.s32.totalorder %s9, 2
    // Predicated region
    $region21: #{dqn_forward.3} parent=5 // pred_check
      %p125 = pneg %p124
    $region22: #{dqn_forward.3} parent=5 // pred_check_branch
      %127 = sbr.rel (%p125) target = $region24
    $region23: #{dqn_forward.3} parent=5 // pred_region
      // Predicated region
      $region25: #{dqn_forward.3} parent=23 // pred_check
        %p128 = pneg %p29
      $region26: #{dqn_forward.3} parent=23 // pred_check_branch
        %130 = sbr.rel (%p128) target = $region28
      $region27: #{dqn_forward.3} parent=23 // pred_region
        %s131 = smul.u32 50, %s9
        %p132 = scmp.lt.s32.totalorder %s131, 99
        %s133 = scalar_select %p132, %s131, 99
        %s134 = smul.addr %s133, 2
        %s135 = smul.addr %s134, 4
        %s136 = scalar_lea.vmem %s0, %s135
        %s137 = smul.u32 50, %s9
      $region28: #{dqn_forward.3} parent=23 // pred_fallthru
        _
    $region24: #{dqn_forward.3} parent=5 // pred_fallthru
      _
    %p138 = scmp.le.s32.totalorder 1, %s9
    %p139 = scmp.lt.s32.totalorder %s9, 3
    %p140 = pnand %p138, %p139
    %p141 = pneg %p140
    // Predicated region
    $region29: #{dqn_forward.3} parent=5 // pred_check
      _
    $region30: #{dqn_forward.3} parent=5 // pred_check_branch
      %143 = sbr.rel (%p140) target = $region32
    $region31: #{dqn_forward.3} parent=5 // pred_region
      %s144 = ssub.s32 %s9, 1
      %s145 = smul.u32 50, %s14
      %p146 = scmp.lt.s32.totalorder %s145, 99
      %s147 = scalar_select %p146, %s145, 99
      %s148 = smul.addr %s147, 2
      %s149 = smul.addr %s148, 4
      %s150 = scalar_lea.vmem %s0, %s149
      %p151 = pneg %p35
      %p152 = pneg %p32
      %p153 = pneg %p56
      %p154 = pneg %p53
      %p155 = pneg %p77
      %p156 = pneg %p74
      %p157 = pneg %p103
      %p158 = pneg %p100
      %s159 = smul.u32 50, %s14
      %p160 = scmp.lt.s32.totalorder %s159, 99
      %s161 = scalar_select %p160, %s159, 99
      %s162 = smul.addr %s161, 4
      %s163 = scalar_lea.vmem %s3, %s162
      %s164 = smul.u32 50, %s14
      %p165 = scmp.lt.s32.totalorder %s164, 99
      %s166 = scalar_select %p165, %s164, 99
      %s167 = smul.addr %s166, 2
      %s168 = smul.addr %s167, 4
      %s169 = scalar_lea.vmem %s0, %s168
      %s170 = smul.u32 50, %s14
      %s171 = smul.u32 50, %s14
      %p172 = scmp.lt.s32.totalorder %s171, 99
      %s173 = scalar_select %p172, %s171, 99
      %s174 = smul.addr %s173, 4
      %s175 = scalar_lea.vmem %s3, %s174
      %s176 = smul.u32 50, %s14
      %v178 = vld [vmem:[%s169] sm:$0xff]
      %v179 = vld [vmem:[%s169 + $0x8] sm:$0xff]
      %v180 = vld [vmem:[%s169 + $0x10] sm:$0xff]
      %v181 = vld [vmem:[%s169 + $0x18] sm:$0xff]
      %v182 = vld [vmem:[%s169 + $0x20] sm:$0xff]
      %v183 = vld [vmem:[%s169 + $0x28] sm:$0xff]
      %v184 = vld [vmem:[%s169 + $0x30] sm:$0xff]
      %v185 = vld [vmem:[%s169 + $0x38] sm:$0xff]
      %v186 = vld [vmem:[%s169 + $0x40] sm:$0xff]
      %v187 = vld [vmem:[%s169 + $0x48] sm:$0xff]
      %v188 = vld [vmem:[%s169 + $0x50] sm:$0xff]
      %v189 = vld [vmem:[%s169 + $0x58] sm:$0xff]
      %v190 = vld [vmem:[%s169 + $0x60] sm:$0xff]
      %v191 = vld [vmem:[%s169 + $0x68] sm:$0xff]
      %v192 = vld [vmem:[%s169 + $0x70] sm:$0xff]
      %v193 = vld [vmem:[%s169 + $0x78] sm:$0xff]
      %v194 = vld [vmem:[%s169 + $0x80] sm:$0xff]
      %v195 = vld [vmem:[%s169 + $0x88] sm:$0xff]
      %v196 = vld [vmem:[%s169 + $0x90] sm:$0xff]
      %v197 = vld [vmem:[%s169 + $0x98] sm:$0xff]
      %v198 = vld [vmem:[%s169 + $0xa0] sm:$0xff]
      %v199 = vld [vmem:[%s169 + $0xa8] sm:$0xff]
      %v200 = vld [vmem:[%s169 + $0xb0] sm:$0xff]
      %v201 = vld [vmem:[%s169 + $0xb8] sm:$0xff]
      %v202 = vld [vmem:[%s169 + $0xc0] sm:$0xff]
      %v203 = vld [vmem:[%s169 + $0xc8] sm:$0xff]
      %v204 = vld [vmem:[%s169 + $0xd0] sm:$0xff]
      %v205 = vld [vmem:[%s169 + $0xd8] sm:$0xff]
      %v206 = vld [vmem:[%s169 + $0xe0] sm:$0xff]
      %v207 = vld [vmem:[%s169 + $0xe8] sm:$0xff]
      %v208 = vld [vmem:[%s169 + $0xf0] sm:$0xff]
      %v209 = vld [vmem:[%s169 + $0xf8] sm:$0xff]
      %v210 = vld [vmem:[%s169 + $0x100] sm:$0xff]
      %v211 = vld [vmem:[%s169 + $0x108] sm:$0xff]
      %v212 = vld [vmem:[%s169 + $0x110] sm:$0xff]
      %v213 = vld [vmem:[%s169 + $0x118] sm:$0xff]
      %v214 = vld [vmem:[%s169 + $0x120] sm:$0xff]
      %v215 = vld [vmem:[%s169 + $0x128] sm:$0xff]
      %v216 = vld [vmem:[%s169 + $0x130] sm:$0xff]
      %v217 = vld [vmem:[%s169 + $0x138] sm:$0xff]
      %v218 = vld [vmem:[%s169 + $0x140] sm:$0xff]
      %v219 = vld [vmem:[%s169 + $0x148] sm:$0xff]
      %v220 = vld [vmem:[%s169 + $0x150] sm:$0xff]
      %v221 = vld [vmem:[%s169 + $0x158] sm:$0xff]
      %v222 = vld [vmem:[%s169 + $0x160] sm:$0xff]
      %v223 = vld [vmem:[%s169 + $0x168] sm:$0xff]
      %v224 = vld [vmem:[%s169 + $0x170] sm:$0xff]
      %v225 = vld [vmem:[%s169 + $0x178] sm:$0xff]
      %v226 = vld [vmem:[%s169 + $0x180] sm:$0xff]
      %v227 = vld [vmem:[%s169 + $0x188] sm:$0xff]
      %v228 = vld [vmem:[%s1] sm:$0xf]
      %v229 = vld [vmem:[%s1 + $0x4] sm:$0xf]
      %v230 = vld [vmem:[%s1 + $0x8] sm:$0xf]
      %v231 = vld [vmem:[%s1 + $0xc] sm:$0xf]
      %v232 = vld [vmem:[%s1 + $0x10] sm:$0xf]
      %v233 = vld [vmem:[%s1 + $0x14] sm:$0xf]
      %v234 = vld [vmem:[%s1 + $0x18] sm:$0xf]
      %v235 = vld [vmem:[%s1 + $0x1c] sm:$0xf]
      %v236 = vld [vmem:[%s1 + $0x20] sm:$0xf]
      %v237 = vld [vmem:[%s1 + $0x24] sm:$0xf]
      %v238 = vld [vmem:[%s1 + $0x28] sm:$0xf]
      %v239 = vld [vmem:[%s1 + $0x2c] sm:$0xf]
      %v240 = vld [vmem:[%s1 + $0x30] sm:$0xf]
      %v241 = vld [vmem:[%s1 + $0x34] sm:$0xf]
      %v242 = vld [vmem:[%s1 + $0x38] sm:$0xf]
      %v243 = vld [vmem:[%s1 + $0x3c] sm:$0xf]
      %v244 = vld [vmem:[%s1 + $0x40] sm:$0xf]
      %v245 = vld [vmem:[%s1 + $0x44] sm:$0xf]
      %v246 = vld [vmem:[%s1 + $0x48] sm:$0xf]
      %v247 = vld [vmem:[%s1 + $0x4c] sm:$0xf]
      %v248 = vld [vmem:[%s1 + $0x50] sm:$0xf]
      %v249 = vld [vmem:[%s1 + $0x54] sm:$0xf]
      %v250 = vld [vmem:[%s1 + $0x58] sm:$0xf]
      %v251 = vld [vmem:[%s1 + $0x5c] sm:$0xf]
      %v252 = vld [vmem:[%s1 + $0x60] sm:$0xf]
      %v253 = vld [vmem:[%s1 + $0x64] sm:$0xf]
      %v254 = vld [vmem:[%s1 + $0x68] sm:$0xf]
      %v255 = vld [vmem:[%s1 + $0x6c] sm:$0xf]
      %v256 = vld [vmem:[%s1 + $0x70] sm:$0xf]
      %v257 = vld [vmem:[%s1 + $0x74] sm:$0xf]
      %v258 = vld [vmem:[%s1 + $0x78] sm:$0xf]
      %v259 = vld [vmem:[%s1 + $0x7c] sm:$0xf]
      %v260 = vld [vmem:[%s2] sm:$0x1]
      %v262 = vlaneseq
      %v263 = vshrl.u32 %v262, 7
      %v264 = vsub.s32 0, %v263
      %v265 = vrot.slane %v260, %v264
      %v317 = vunpack.c.l.b16 %v178
      %v318 = vunpack.c.h.b16 %v178
      %v319 = vunpack.c.l.b16 %v179
      %v320 = vunpack.c.h.b16 %v179
      %v321 = vunpack.c.l.b16 %v180
      %v322 = vunpack.c.h.b16 %v180
      %v323 = vunpack.c.l.b16 %v181
      %v324 = vunpack.c.h.b16 %v181
      %v325 = vunpack.c.l.b16 %v182
      %v326 = vunpack.c.h.b16 %v182
      %v327 = vunpack.c.l.b16 %v183
      %v328 = vunpack.c.h.b16 %v183
      %v329 = vunpack.c.l.b16 %v184
      %v330 = vunpack.c.h.b16 %v184
      %v331 = vunpack.c.l.b16 %v185
      %v332 = vunpack.c.h.b16 %v185
      %v333 = vunpack.c.l.b16 %v186
      %v334 = vunpack.c.h.b16 %v186
      %v335 = vunpack.c.l.b16 %v187
      %v336 = vunpack.c.h.b16 %v187
      %v337 = vunpack.c.l.b16 %v188
      %v338 = vunpack.c.h.b16 %v188
      %v339 = vunpack.c.l.b16 %v189
      %v340 = vunpack.c.h.b16 %v189
      %v341 = vunpack.c.l.b16 %v190
      %v342 = vunpack.c.h.b16 %v190
      %v343 = vunpack.c.l.b16 %v191
      %v344 = vunpack.c.h.b16 %v191
      %v345 = vunpack.c.l.b16 %v192
      %v346 = vunpack.c.h.b16 %v192
      %v347 = vunpack.c.l.b16 %v193
      %v348 = vunpack.c.h.b16 %v193
      %v349 = vunpack.c.l.b16 %v194
      %v350 = vunpack.c.h.b16 %v194
      %v351 = vunpack.c.l.b16 %v195
      %v352 = vunpack.c.h.b16 %v195
      %v353 = vunpack.c.l.b16 %v196
      %v354 = vunpack.c.h.b16 %v196
      %v355 = vunpack.c.l.b16 %v197
      %v356 = vunpack.c.h.b16 %v197
      %v357 = vunpack.c.l.b16 %v198
      %v358 = vunpack.c.h.b16 %v198
      %v359 = vunpack.c.l.b16 %v199
      %v360 = vunpack.c.h.b16 %v199
      %v361 = vunpack.c.l.b16 %v200
      %v362 = vunpack.c.h.b16 %v200
      %v363 = vunpack.c.l.b16 %v201
      %v364 = vunpack.c.h.b16 %v201
      %v365 = vunpack.c.l.b16 %v202
      %v366 = vunpack.c.h.b16 %v202
      %v367 = vunpack.c.l.b16 %v203
      %v368 = vunpack.c.h.b16 %v203
      %v369 = vunpack.c.l.b16 %v204
      %v370 = vunpack.c.h.b16 %v204
      %v371 = vunpack.c.l.b16 %v205
      %v372 = vunpack.c.h.b16 %v205
      %v373 = vunpack.c.l.b16 %v206
      %v374 = vunpack.c.h.b16 %v206
      %v375 = vunpack.c.l.b16 %v207
      %v376 = vunpack.c.h.b16 %v207
      %v377 = vunpack.c.l.b16 %v208
      %v378 = vunpack.c.h.b16 %v208
      %v379 = vunpack.c.l.b16 %v209
      %v380 = vunpack.c.h.b16 %v209
      %v381 = vunpack.c.l.b16 %v210
      %v382 = vunpack.c.h.b16 %v210
      %v383 = vunpack.c.l.b16 %v211
      %v384 = vunpack.c.h.b16 %v211
      %v385 = vunpack.c.l.b16 %v212
      %v386 = vunpack.c.h.b16 %v212
      %v387 = vunpack.c.l.b16 %v213
      %v388 = vunpack.c.h.b16 %v213
      %v389 = vunpack.c.l.b16 %v214
      %v390 = vunpack.c.h.b16 %v214
      %v391 = vunpack.c.l.b16 %v215
      %v392 = vunpack.c.h.b16 %v215
      %v393 = vunpack.c.l.b16 %v216
      %v394 = vunpack.c.h.b16 %v216
      %v395 = vunpack.c.l.b16 %v217
      %v396 = vunpack.c.h.b16 %v217
      %v397 = vunpack.c.l.b16 %v218
      %v398 = vunpack.c.h.b16 %v218
      %v399 = vunpack.c.l.b16 %v219
      %v400 = vunpack.c.h.b16 %v219
      %v401 = vunpack.c.l.b16 %v220
      %v402 = vunpack.c.h.b16 %v220
      %v403 = vunpack.c.l.b16 %v221
      %v404 = vunpack.c.h.b16 %v221
      %v405 = vunpack.c.l.b16 %v222
      %v406 = vunpack.c.h.b16 %v222
      %v407 = vunpack.c.l.b16 %v223
      %v408 = vunpack.c.h.b16 %v223
      %v409 = vunpack.c.l.b16 %v224
      %v410 = vunpack.c.h.b16 %v224
      %v411 = vunpack.c.l.b16 %v225
      %v412 = vunpack.c.h.b16 %v225
      %v413 = vunpack.c.l.b16 %v226
      %v414 = vunpack.c.h.b16 %v226
      %v415 = vunpack.c.l.b16 %v227
      %v416 = vunpack.c.h.b16 %v227
      %v417 = vpack.c.b16 %v319, %v317
      %v418 = vpack.c.b16 %v320, %v318
      %v419 = vpack.c.b16 %v323, %v321
      %v420 = vpack.c.b16 %v324, %v322
      %v421 = vpack.c.b16 %v327, %v325
      %v422 = vpack.c.b16 %v328, %v326
      %v423 = vpack.c.b16 %v331, %v329
      %v424 = vpack.c.b16 %v332, %v330
      %v425 = vpack.c.b16 %v335, %v333
      %v426 = vpack.c.b16 %v336, %v334
      %v427 = vpack.c.b16 %v339, %v337
      %v428 = vpack.c.b16 %v340, %v338
      %v429 = vpack.c.b16 %v343, %v341
      %v430 = vpack.c.b16 %v344, %v342
      %v431 = vpack.c.b16 %v347, %v345
      %v432 = vpack.c.b16 %v348, %v346
      %v433 = vpack.c.b16 %v351, %v349
      %v434 = vpack.c.b16 %v352, %v350
      %v435 = vpack.c.b16 %v355, %v353
      %v436 = vpack.c.b16 %v356, %v354
      %v437 = vpack.c.b16 %v359, %v357
      %v438 = vpack.c.b16 %v360, %v358
      %v439 = vpack.c.b16 %v363, %v361
      %v440 = vpack.c.b16 %v364, %v362
      %v441 = vpack.c.b16 %v367, %v365
      %v442 = vpack.c.b16 %v368, %v366
      %v443 = vpack.c.b16 %v371, %v369
      %v444 = vpack.c.b16 %v372, %v370
      %v445 = vpack.c.b16 %v375, %v373
      %v446 = vpack.c.b16 %v376, %v374
      %v447 = vpack.c.b16 %v379, %v377
      %v448 = vpack.c.b16 %v380, %v378
      %v449 = vpack.c.b16 %v383, %v381
      %v450 = vpack.c.b16 %v384, %v382
      %v451 = vpack.c.b16 %v387, %v385
      %v452 = vpack.c.b16 %v388, %v386
      %v453 = vpack.c.b16 %v391, %v389
      %v454 = vpack.c.b16 %v392, %v390
      %v455 = vpack.c.b16 %v395, %v393
      %v456 = vpack.c.b16 %v396, %v394
      %v457 = vpack.c.b16 %v399, %v397
      %v458 = vpack.c.b16 %v400, %v398
      %v459 = vpack.c.b16 %v403, %v401
      %v460 = vpack.c.b16 %v404, %v402
      %v461 = vpack.c.b16 %v407, %v405
      %v462 = vpack.c.b16 %v408, %v406
      %v463 = vpack.c.b16 %v411, %v409
      %v464 = vpack.c.b16 %v412, %v410
      %v465 = vpack.c.b16 %v415, %v413
      %v466 = vpack.c.b16 %v416, %v414
      %v549 = vunpack.c.l.b16 %v228
      %v550 = vunpack.c.l.b16 %v229
      %v551 = vunpack.c.l.b16 %v230
      %v552 = vunpack.c.l.b16 %v231
      %v553 = vunpack.c.l.b16 %v232
      %v554 = vunpack.c.l.b16 %v233
      %v555 = vunpack.c.l.b16 %v234
      %v556 = vunpack.c.l.b16 %v235
      %v557 = vunpack.c.l.b16 %v236
      %v558 = vunpack.c.l.b16 %v237
      %v559 = vunpack.c.l.b16 %v238
      %v560 = vunpack.c.l.b16 %v239
      %v561 = vunpack.c.l.b16 %v240
      %v562 = vunpack.c.l.b16 %v241
      %v563 = vunpack.c.l.b16 %v242
      %v564 = vunpack.c.l.b16 %v243
      %v565 = vunpack.c.l.b16 %v244
      %v566 = vunpack.c.l.b16 %v245
      %v567 = vunpack.c.l.b16 %v246
      %v568 = vunpack.c.l.b16 %v247
      %v569 = vunpack.c.l.b16 %v248
      %v570 = vunpack.c.l.b16 %v249
      %v571 = vunpack.c.l.b16 %v250
      %v572 = vunpack.c.l.b16 %v251
      %v573 = vunpack.c.l.b16 %v252
      %v574 = vunpack.c.l.b16 %v253
      %v575 = vunpack.c.l.b16 %v254
      %v576 = vunpack.c.l.b16 %v255
      %v577 = vunpack.c.l.b16 %v256
      %v578 = vunpack.c.l.b16 %v257
      %v579 = vunpack.c.l.b16 %v258
      %v580 = vunpack.c.l.b16 %v259
      %v581 = vpack.c.b16 %v550, %v549
      %v582 = vpack.c.b16 %v552, %v551
      %v583 = vpack.c.b16 %v554, %v553
      %v584 = vpack.c.b16 %v556, %v555
      %v585 = vpack.c.b16 %v558, %v557
      %v586 = vpack.c.b16 %v560, %v559
      %v587 = vpack.c.b16 %v562, %v561
      %v588 = vpack.c.b16 %v564, %v563
      %v589 = vpack.c.b16 %v566, %v565
      %v590 = vpack.c.b16 %v568, %v567
      %v591 = vpack.c.b16 %v570, %v569
      %v592 = vpack.c.b16 %v572, %v571
      %v593 = vpack.c.b16 %v574, %v573
      %v594 = vpack.c.b16 %v576, %v575
      %v595 = vpack.c.b16 %v578, %v577
      %v596 = vpack.c.b16 %v580, %v579
      %613 = vmatprep.subr.bf16.mxu0 0
      %614 = vmatpush1.bf16.msra.mxu0 %v581
      %615 = vmatprep.subr.bf16.mxu0 0
      %616 = vmatpush1.bf16.msra.mxu0 %v582
      %617 = vmatprep.subr.bf16.mxu0 0
      %618 = vmatpush1.bf16.msra.mxu0 %v583
      %619 = vmatprep.subr.bf16.mxu0 0
      %620 = vmatpush1.bf16.msra.mxu0 %v584
      %621 = vmatprep.subr.bf16.mxu0 0
      %622 = vmatpush1.bf16.msra.mxu0 %v585
      %623 = vmatprep.subr.bf16.mxu0 0
      %624 = vmatpush1.bf16.msra.mxu0 %v586
      %625 = vmatprep.subr.bf16.mxu0 0
      %626 = vmatpush1.bf16.msra.mxu0 %v587
      %627 = vmatprep.subr.bf16.mxu0 0
      %628 = vmatpush1.bf16.msra.mxu0 %v588
      %629 = vmatprep.subr.bf16.mxu0 0
      %630 = vmatpush1.bf16.msra.mxu0 %v589
      %631 = vmatprep.subr.bf16.mxu0 0
      %632 = vmatpush1.bf16.msra.mxu0 %v590
      %633 = vmatprep.subr.bf16.mxu0 0
      %634 = vmatpush1.bf16.msra.mxu0 %v591
      %635 = vmatprep.subr.bf16.mxu0 0
      %636 = vmatpush1.bf16.msra.mxu0 %v592
      %637 = vmatprep.subr.bf16.mxu0 0
      %638 = vmatpush1.bf16.msra.mxu0 %v593
      %639 = vmatprep.subr.bf16.mxu0 0
      %640 = vmatpush1.bf16.msra.mxu0 %v594
      %641 = vmatprep.subr.bf16.mxu0 0
      %642 = vmatpush1.bf16.msra.mxu0 %v595
      %643 = vmatprep.subr.bf16.mxu0 0
      %644 = vmatpush1.bf16.msra.mxu0 %v596
      %645 = vmatprep.mubr.bf16.mxu0 %v418
      %646 = vmatmul.mubr.bf16.gmra.mrb[0].mxu0 %v417
      %v647 = vpop.f32.mrb[0].mxu0
      %v648 = vadd.f32 %v265, %v647
      %v649 = vpop.f32.mrb[0].mxu0
      %v650 = vpop.f32.mrb[0].mxu0
      %v651 = vadd.f32 %v265, %v650
      %v652 = vpop.f32.mrb[0].mxu0
      %653 = vmatprep.mubr.bf16.mxu0 %v420
      %654 = vmatmul.mubr.bf16.gmra.mrb[0].mxu0 %v419
      %v655 = vpop.f32.mrb[0].mxu0
      %v656 = vadd.f32 %v265, %v655
      %v657 = vpop.f32.mrb[0].mxu0
      %v658 = vpop.f32.mrb[0].mxu0
      %v659 = vadd.f32 %v265, %v658
      %v660 = vpop.f32.mrb[0].mxu0
      %661 = vmatprep.mubr.bf16.mxu0 %v422
      %662 = vmatmul.mubr.bf16.gmra.mrb[0].mxu0 %v421
      %v663 = vpop.f32.mrb[0].mxu0
      %v664 = vadd.f32 %v265, %v663
      %v665 = vpop.f32.mrb[0].mxu0
      %v666 = vpop.f32.mrb[0].mxu0
      %v667 = vadd.f32 %v265, %v666
      %v668 = vpop.f32.mrb[0].mxu0
      %669 = vmatprep.mubr.bf16.mxu0 %v424
      %670 = vmatmul.mubr.bf16.gmra.mrb[0].mxu0 %v423
      %v671 = vpop.f32.mrb[0].mxu0
      %v672 = vadd.f32 %v265, %v671
      %v673 = vpop.f32.mrb[0].mxu0
      %v674 = vpop.f32.mrb[0].mxu0
      %v675 = vadd.f32 %v265, %v674
      %v676 = vpop.f32.mrb[0].mxu0
      %677 = vmatprep.mubr.bf16.mxu0 %v426
      %678 = vmatmul.mubr.bf16.gmra.mrb[0].mxu0 %v425
      %v679 = vpop.f32.mrb[0].mxu0
      %v680 = vadd.f32 %v265, %v679
      %v681 = vpop.f32.mrb[0].mxu0
      %v682 = vpop.f32.mrb[0].mxu0
      %v683 = vadd.f32 %v265, %v682
      %v684 = vpop.f32.mrb[0].mxu0
      %685 = vmatprep.mubr.bf16.mxu0 %v428
      %686 = vmatmul.mubr.bf16.gmra.mrb[0].mxu0 %v427
      %v687 = vpop.f32.mrb[0].mxu0
      %v688 = vadd.f32 %v265, %v687
      %v689 = vpop.f32.mrb[0].mxu0
      %v690 = vpop.f32.mrb[0].mxu0
      %v691 = vadd.f32 %v265, %v690
      %v692 = vpop.f32.mrb[0].mxu0
      %693 = vmatprep.mubr.bf16.mxu0 %v430
      %694 = vmatmul.mubr.bf16.gmra.mrb[0].mxu0 %v429
      %v695 = vpop.f32.mrb[0].mxu0
      %v696 = vadd.f32 %v265, %v695
      %v697 = vpop.f32.mrb[0].mxu0
      %v698 = vpop.f32.mrb[0].mxu0
      %v699 = vadd.f32 %v265, %v698
      %v700 = vpop.f32.mrb[0].mxu0
      %701 = vmatprep.mubr.bf16.mxu0 %v432
      %702 = vmatmul.mubr.bf16.gmra.mrb[0].mxu0 %v431
      %v703 = vpop.f32.mrb[0].mxu0
      %v704 = vadd.f32 %v265, %v703
      %v705 = vpop.f32.mrb[0].mxu0
      %v706 = vpop.f32.mrb[0].mxu0
      %v707 = vadd.f32 %v265, %v706
      %v708 = vpop.f32.mrb[0].mxu0
      %709 = vmatprep.mubr.bf16.mxu0 %v434
      %710 = vmatmul.mubr.bf16.gmra.mrb[0].mxu0 %v433
      %v711 = vpop.f32.mrb[0].mxu0
      %v712 = vadd.f32 %v265, %v711
      %v713 = vpop.f32.mrb[0].mxu0
      %v714 = vpop.f32.mrb[0].mxu0
      %v715 = vadd.f32 %v265, %v714
      %v716 = vpop.f32.mrb[0].mxu0
      %717 = vmatprep.mubr.bf16.mxu0 %v436
      %718 = vmatmul.mubr.bf16.gmra.mrb[0].mxu0 %v435
      %v719 = vpop.f32.mrb[0].mxu0
      %v720 = vadd.f32 %v265, %v719
      %v721 = vpop.f32.mrb[0].mxu0
      %v722 = vpop.f32.mrb[0].mxu0
      %v723 = vadd.f32 %v265, %v722
      %v724 = vpop.f32.mrb[0].mxu0
      %725 = vmatprep.mubr.bf16.mxu0 %v438
      %726 = vmatmul.mubr.bf16.gmra.mrb[0].mxu0 %v437
      %v727 = vpop.f32.mrb[0].mxu0
      %v728 = vadd.f32 %v265, %v727
      %v729 = vpop.f32.mrb[0].mxu0
      %v730 = vpop.f32.mrb[0].mxu0
      %v731 = vadd.f32 %v265, %v730
      %v732 = vpop.f32.mrb[0].mxu0
      %733 = vmatprep.mubr.bf16.mxu0 %v440
      %734 = vmatmul.mubr.bf16.gmra.mrb[0].mxu0 %v439
      %v735 = vpop.f32.mrb[0].mxu0
      %v736 = vadd.f32 %v265, %v735
      %v737 = vpop.f32.mrb[0].mxu0
      %v738 = vpop.f32.mrb[0].mxu0
      %v739 = vadd.f32 %v265, %v738
      %v740 = vpop.f32.mrb[0].mxu0
      %741 = vmatprep.mubr.bf16.mxu0 %v442
      %742 = vmatmul.mubr.bf16.gmra.mrb[0].mxu0 %v441
      %v743 = vpop.f32.mrb[0].mxu0
      %v744 = vadd.f32 %v265, %v743
      %v745 = vpop.f32.mrb[0].mxu0
      %v746 = vpop.f32.mrb[0].mxu0
      %v747 = vadd.f32 %v265, %v746
      %v748 = vpop.f32.mrb[0].mxu0
      %749 = vmatprep.mubr.bf16.mxu0 %v444
      %750 = vmatmul.mubr.bf16.gmra.mrb[0].mxu0 %v443
      %v751 = vpop.f32.mrb[0].mxu0
      %v752 = vadd.f32 %v265, %v751
      %v753 = vpop.f32.mrb[0].mxu0
      %v754 = vpop.f32.mrb[0].mxu0
      %v755 = vadd.f32 %v265, %v754
      %v756 = vpop.f32.mrb[0].mxu0
      %757 = vmatprep.mubr.bf16.mxu0 %v446
      %758 = vmatmul.mubr.bf16.gmra.mrb[0].mxu0 %v445
      %v759 = vpop.f32.mrb[0].mxu0
      %v760 = vadd.f32 %v265, %v759
      %v761 = vpop.f32.mrb[0].mxu0
      %v762 = vpop.f32.mrb[0].mxu0
      %v763 = vadd.f32 %v265, %v762
      %v764 = vpop.f32.mrb[0].mxu0
      %765 = vmatprep.mubr.bf16.mxu0 %v448
      %766 = vmatmul.mubr.bf16.gmra.mrb[0].mxu0 %v447
      %v767 = vpop.f32.mrb[0].mxu0
      %v768 = vadd.f32 %v265, %v767
      %v769 = vpop.f32.mrb[0].mxu0
      %v770 = vpop.f32.mrb[0].mxu0
      %v771 = vadd.f32 %v265, %v770
      %v772 = vpop.f32.mrb[0].mxu0
      %773 = vmatprep.mubr.bf16.mxu0 %v450
      %774 = vmatmul.mubr.bf16.gmra.mrb[0].mxu0 %v449
      %v775 = vpop.f32.mrb[0].mxu0
      %v776 = vadd.f32 %v265, %v775
      %v777 = vpop.f32.mrb[0].mxu0
      %v778 = vpop.f32.mrb[0].mxu0
      %v779 = vadd.f32 %v265, %v778
      %v780 = vpop.f32.mrb[0].mxu0
      %781 = vmatprep.mubr.bf16.mxu0 %v452
      %782 = vmatmul.mubr.bf16.gmra.mrb[0].mxu0 %v451
      %v783 = vpop.f32.mrb[0].mxu0
      %v784 = vadd.f32 %v265, %v783
      %v785 = vpop.f32.mrb[0].mxu0
      %v786 = vpop.f32.mrb[0].mxu0
      %v787 = vadd.f32 %v265, %v786
      %v788 = vpop.f32.mrb[0].mxu0
      %789 = vmatprep.mubr.bf16.mxu0 %v454
      %790 = vmatmul.mubr.bf16.gmra.mrb[0].mxu0 %v453
      %v791 = vpop.f32.mrb[0].mxu0
      %v792 = vadd.f32 %v265, %v791
      %v793 = vpop.f32.mrb[0].mxu0
      %v794 = vpop.f32.mrb[0].mxu0
      %v795 = vadd.f32 %v265, %v794
      %v796 = vpop.f32.mrb[0].mxu0
      %797 = vmatprep.mubr.bf16.mxu0 %v456
      %798 = vmatmul.mubr.bf16.gmra.mrb[0].mxu0 %v455
      %v799 = vpop.f32.mrb[0].mxu0
      %v800 = vadd.f32 %v265, %v799
      %v801 = vpop.f32.mrb[0].mxu0
      %v802 = vpop.f32.mrb[0].mxu0
      %v803 = vadd.f32 %v265, %v802
      %v804 = vpop.f32.mrb[0].mxu0
      %805 = vmatprep.mubr.bf16.mxu0 %v458
      %806 = vmatmul.mubr.bf16.gmra.mrb[0].mxu0 %v457
      %v807 = vpop.f32.mrb[0].mxu0
      %v808 = vadd.f32 %v265, %v807
      %v809 = vpop.f32.mrb[0].mxu0
      %v810 = vpop.f32.mrb[0].mxu0
      %v811 = vadd.f32 %v265, %v810
      %v812 = vpop.f32.mrb[0].mxu0
      %813 = vmatprep.mubr.bf16.mxu0 %v460
      %814 = vmatmul.mubr.bf16.gmra.mrb[0].mxu0 %v459
      %v815 = vpop.f32.mrb[0].mxu0
      %v816 = vadd.f32 %v265, %v815
      %v817 = vpop.f32.mrb[0].mxu0
      %v818 = vpop.f32.mrb[0].mxu0
      %v819 = vadd.f32 %v265, %v818
      %v820 = vpop.f32.mrb[0].mxu0
      %821 = vmatprep.mubr.bf16.mxu0 %v462
      %822 = vmatmul.mubr.bf16.gmra.mrb[0].mxu0 %v461
      %v823 = vpop.f32.mrb[0].mxu0
      %v824 = vadd.f32 %v265, %v823
      %v825 = vpop.f32.mrb[0].mxu0
      %v826 = vpop.f32.mrb[0].mxu0
      %v827 = vadd.f32 %v265, %v826
      %v828 = vpop.f32.mrb[0].mxu0
      %829 = vmatprep.mubr.bf16.mxu0 %v464
      %830 = vmatmul.mubr.bf16.gmra.mrb[0].mxu0 %v463
      %v831 = vpop.f32.mrb[0].mxu0
      %v832 = vadd.f32 %v265, %v831
      %v833 = vpop.f32.mrb[0].mxu0
      %v834 = vpop.f32.mrb[0].mxu0
      %v835 = vadd.f32 %v265, %v834
      %v836 = vpop.f32.mrb[0].mxu0
      %837 = vmatprep.mubr.bf16.mxu0 %v466
      %838 = vmatmul.mubr.bf16.gmra.mrb[0].mxu0 %v465
      %v839 = vpop.f32.mrb[0].mxu0
      %v840 = vadd.f32 %v265, %v839
      %v841 = vpop.f32.mrb[0].mxu0
      %v842 = vpop.f32.mrb[0].mxu0
      %v843 = vadd.f32 %v265, %v842
      %v844 = vpop.f32.mrb[0].mxu0
      %845 = vdwg.mxu0
      %v846 = vmax.f32 %v648, 0.0
      %v847 = vmax.f32 %v651, 0.0
      %v848 = vmax.f32 %v656, 0.0
      %v849 = vmax.f32 %v659, 0.0
      %v850 = vmax.f32 %v664, 0.0
      %v851 = vmax.f32 %v667, 0.0
      %v852 = vmax.f32 %v672, 0.0
      %v853 = vmax.f32 %v675, 0.0
      %v854 = vmax.f32 %v680, 0.0
      %v855 = vmax.f32 %v683, 0.0
      %v856 = vmax.f32 %v688, 0.0
      %v857 = vmax.f32 %v691, 0.0
      %v858 = vmax.f32 %v696, 0.0
      %v859 = vmax.f32 %v699, 0.0
      %v860 = vmax.f32 %v704, 0.0
      %v861 = vmax.f32 %v707, 0.0
      %v862 = vmax.f32 %v712, 0.0
      %v863 = vmax.f32 %v715, 0.0
      %v864 = vmax.f32 %v720, 0.0
      %v865 = vmax.f32 %v723, 0.0
      %v866 = vmax.f32 %v728, 0.0
      %v867 = vmax.f32 %v731, 0.0
      %v868 = vmax.f32 %v736, 0.0
      %v869 = vmax.f32 %v739, 0.0
      %v870 = vmax.f32 %v744, 0.0
      %v871 = vmax.f32 %v747, 0.0
      %v872 = vmax.f32 %v752, 0.0
      %v873 = vmax.f32 %v755, 0.0
      %v874 = vmax.f32 %v760, 0.0
      %v875 = vmax.f32 %v763, 0.0
      %v876 = vmax.f32 %v768, 0.0
      %v877 = vmax.f32 %v771, 0.0
      %v878 = vmax.f32 %v776, 0.0
      %v879 = vmax.f32 %v779, 0.0
      %v880 = vmax.f32 %v784, 0.0
      %v881 = vmax.f32 %v787, 0.0
      %v882 = vmax.f32 %v792, 0.0
      %v883 = vmax.f32 %v795, 0.0
      %v884 = vmax.f32 %v800, 0.0
      %v885 = vmax.f32 %v803, 0.0
      %v886 = vmax.f32 %v808, 0.0
      %v887 = vmax.f32 %v811, 0.0
      %v888 = vmax.f32 %v816, 0.0
      %v889 = vmax.f32 %v819, 0.0
      %v890 = vmax.f32 %v824, 0.0
      %v891 = vmax.f32 %v827, 0.0
      %v892 = vmax.f32 %v832, 0.0
      %v893 = vmax.f32 %v835, 0.0
      %v894 = vmax.f32 %v840, 0.0
      %v895 = vmax.f32 %v843, 0.0
      %v896 = vpack.c.bf16 %v847, %v846
      %v897 = vpack.c.bf16 %v849, %v848
      %v898 = vpack.c.bf16 %v851, %v850
      %v899 = vpack.c.bf16 %v853, %v852
      %v900 = vpack.c.bf16 %v855, %v854
      %v901 = vpack.c.bf16 %v857, %v856
      %v902 = vpack.c.bf16 %v859, %v858
      %v903 = vpack.c.bf16 %v861, %v860
      %v904 = vpack.c.bf16 %v863, %v862
      %v905 = vpack.c.bf16 %v865, %v864
      %v906 = vpack.c.bf16 %v867, %v866
      %v907 = vpack.c.bf16 %v869, %v868
      %v908 = vpack.c.bf16 %v871, %v870
      %v909 = vpack.c.bf16 %v873, %v872
      %v910 = vpack.c.bf16 %v875, %v874
      %v911 = vpack.c.bf16 %v877, %v876
      %v912 = vpack.c.bf16 %v879, %v878
      %v913 = vpack.c.bf16 %v881, %v880
      %v914 = vpack.c.bf16 %v883, %v882
      %v915 = vpack.c.bf16 %v885, %v884
      %v916 = vpack.c.bf16 %v887, %v886
      %v917 = vpack.c.bf16 %v889, %v888
      %v918 = vpack.c.bf16 %v891, %v890
      %v919 = vpack.c.bf16 %v893, %v892
      %v920 = vpack.c.bf16 %v895, %v894
      %v946 = vunpack.c.l.b16 %v896
      %v947 = vunpack.c.h.b16 %v896
      %v948 = vunpack.c.l.b16 %v897
      %v949 = vunpack.c.h.b16 %v897
      %v950 = vunpack.c.l.b16 %v898
      %v951 = vunpack.c.h.b16 %v898
      %v952 = vunpack.c.l.b16 %v899
      %v953 = vunpack.c.h.b16 %v899
      %v954 = vunpack.c.l.b16 %v900
      %v955 = vunpack.c.h.b16 %v900
      %v956 = vunpack.c.l.b16 %v901
      %v957 = vunpack.c.h.b16 %v901
      %v958 = vunpack.c.l.b16 %v902
      %v959 = vunpack.c.h.b16 %v902
      %v960 = vunpack.c.l.b16 %v903
      %v961 = vunpack.c.h.b16 %v903
      %v962 = vunpack.c.l.b16 %v904
      %v963 = vunpack.c.h.b16 %v904
      %v964 = vunpack.c.l.b16 %v905
      %v965 = vunpack.c.h.b16 %v905
      %v966 = vunpack.c.l.b16 %v906
      %v967 = vunpack.c.h.b16 %v906
      %v968 = vunpack.c.l.b16 %v907
      %v969 = vunpack.c.h.b16 %v907
      %v970 = vunpack.c.l.b16 %v908
      %v971 = vunpack.c.h.b16 %v908
      %v972 = vunpack.c.l.b16 %v909
      %v973 = vunpack.c.h.b16 %v909
      %v974 = vunpack.c.l.b16 %v910
      %v975 = vunpack.c.h.b16 %v910
      %v976 = vunpack.c.l.b16 %v911
      %v977 = vunpack.c.h.b16 %v911
      %v978 = vunpack.c.l.b16 %v912
      %v979 = vunpack.c.h.b16 %v912
      %v980 = vunpack.c.l.b16 %v913
      %v981 = vunpack.c.h.b16 %v913
      %v982 = vunpack.c.l.b16 %v914
      %v983 = vunpack.c.h.b16 %v914
      %v984 = vunpack.c.l.b16 %v915
      %v985 = vunpack.c.h.b16 %v915
      %v986 = vunpack.c.l.b16 %v916
      %v987 = vunpack.c.h.b16 %v916
      %v988 = vunpack.c.l.b16 %v917
      %v989 = vunpack.c.h.b16 %v917
      %v990 = vunpack.c.l.b16 %v918
      %v991 = vunpack.c.h.b16 %v918
      %v992 = vunpack.c.l.b16 %v919
      %v993 = vunpack.c.h.b16 %v919
      %v994 = vunpack.c.l.b16 %v920
      %v995 = vunpack.c.h.b16 %v920
      %v996 = vpack.c.b16 %v946, %v946
      %v997 = vpack.c.b16 %v947, %v947
      %v998 = vpack.c.b16 %v948, %v948
      %v999 = vpack.c.b16 %v949, %v949
      %v1000 = vpack.c.b16 %v950, %v950
      %v1001 = vpack.c.b16 %v951, %v951
      %v1002 = vpack.c.b16 %v952, %v952
      %v1003 = vpack.c.b16 %v953, %v953
      %v1004 = vpack.c.b16 %v954, %v954
      %v1005 = vpack.c.b16 %v955, %v955
      %v1006 = vpack.c.b16 %v956, %v956
      %v1007 = vpack.c.b16 %v957, %v957
      %v1008 = vpack.c.b16 %v958, %v958
      %v1009 = vpack.c.b16 %v959, %v959
      %v1010 = vpack.c.b16 %v960, %v960
      %v1011 = vpack.c.b16 %v961, %v961
      %v1012 = vpack.c.b16 %v962, %v962
      %v1013 = vpack.c.b16 %v963, %v963
      %v1014 = vpack.c.b16 %v964, %v964
      %v1015 = vpack.c.b16 %v965, %v965
      %v1016 = vpack.c.b16 %v966, %v966
      %v1017 = vpack.c.b16 %v967, %v967
      %v1018 = vpack.c.b16 %v968, %v968
      %v1019 = vpack.c.b16 %v969, %v969
      %v1020 = vpack.c.b16 %v970, %v970
      %v1021 = vpack.c.b16 %v971, %v971
      %v1022 = vpack.c.b16 %v972, %v972
      %v1023 = vpack.c.b16 %v973, %v973
      %v1024 = vpack.c.b16 %v974, %v974
      %v1025 = vpack.c.b16 %v975, %v975
      %v1026 = vpack.c.b16 %v976, %v976
      %v1027 = vpack.c.b16 %v977, %v977
      %v1028 = vpack.c.b16 %v978, %v978
      %v1029 = vpack.c.b16 %v979, %v979
      %v1030 = vpack.c.b16 %v980, %v980
      %v1031 = vpack.c.b16 %v981, %v981
      %v1032 = vpack.c.b16 %v982, %v982
      %v1033 = vpack.c.b16 %v983, %v983
      %v1034 = vpack.c.b16 %v984, %v984
      %v1035 = vpack.c.b16 %v985, %v985
      %v1036 = vpack.c.b16 %v986, %v986
      %v1037 = vpack.c.b16 %v987, %v987
      %v1038 = vpack.c.b16 %v988, %v988
      %v1039 = vpack.c.b16 %v989, %v989
      %v1040 = vpack.c.b16 %v990, %v990
      %v1041 = vpack.c.b16 %v991, %v991
      %v1042 = vpack.c.b16 %v992, %v992
      %v1043 = vpack.c.b16 %v993, %v993
      %v1044 = vpack.c.b16 %v994, %v994
      %v1045 = vpack.c.b16 %v995, %v995
      %vm1096 = vcmask 125952
      %1097 = vst.msk [vmem:[%s175] sm:$0xf] %vm1096, %v996
      %1098 = vst.msk [vmem:[%s175 + $0x4] sm:$0xf] %vm1096, %v997
      %1099 = vst.msk [vmem:[%s175 + $0x8] sm:$0xf] %vm1096, %v998
      %1100 = vst.msk [vmem:[%s175 + $0xc] sm:$0xf] %vm1096, %v999
      %1101 = vst.msk [vmem:[%s175 + $0x10] sm:$0xf] %vm1096, %v1000
      %1102 = vst.msk [vmem:[%s175 + $0x14] sm:$0xf] %vm1096, %v1001
      %1103 = vst.msk [vmem:[%s175 + $0x18] sm:$0xf] %vm1096, %v1002
      %1104 = vst.msk [vmem:[%s175 + $0x1c] sm:$0xf] %vm1096, %v1003
      %1105 = vst.msk [vmem:[%s175 + $0x20] sm:$0xf] %vm1096, %v1004
      %1106 = vst.msk [vmem:[%s175 + $0x24] sm:$0xf] %vm1096, %v1005
      %1107 = vst.msk [vmem:[%s175 + $0x28] sm:$0xf] %vm1096, %v1006
      %1108 = vst.msk [vmem:[%s175 + $0x2c] sm:$0xf] %vm1096, %v1007
      %1109 = vst.msk [vmem:[%s175 + $0x30] sm:$0xf] %vm1096, %v1008
      %1110 = vst.msk [vmem:[%s175 + $0x34] sm:$0xf] %vm1096, %v1009
      %1111 = vst.msk [vmem:[%s175 + $0x38] sm:$0xf] %vm1096, %v1010
      %1112 = vst.msk [vmem:[%s175 + $0x3c] sm:$0xf] %vm1096, %v1011
      %1113 = vst.msk [vmem:[%s175 + $0x40] sm:$0xf] %vm1096, %v1012
      %1114 = vst.msk [vmem:[%s175 + $0x44] sm:$0xf] %vm1096, %v1013
      %1115 = vst.msk [vmem:[%s175 + $0x48] sm:$0xf] %vm1096, %v1014
      %1116 = vst.msk [vmem:[%s175 + $0x4c] sm:$0xf] %vm1096, %v1015
      %1117 = vst.msk [vmem:[%s175 + $0x50] sm:$0xf] %vm1096, %v1016
      %1118 = vst.msk [vmem:[%s175 + $0x54] sm:$0xf] %vm1096, %v1017
      %1119 = vst.msk [vmem:[%s175 + $0x58] sm:$0xf] %vm1096, %v1018
      %1120 = vst.msk [vmem:[%s175 + $0x5c] sm:$0xf] %vm1096, %v1019
      %1121 = vst.msk [vmem:[%s175 + $0x60] sm:$0xf] %vm1096, %v1020
      %1122 = vst.msk [vmem:[%s175 + $0x64] sm:$0xf] %vm1096, %v1021
      %1123 = vst.msk [vmem:[%s175 + $0x68] sm:$0xf] %vm1096, %v1022
      %1124 = vst.msk [vmem:[%s175 + $0x6c] sm:$0xf] %vm1096, %v1023
      %1125 = vst.msk [vmem:[%s175 + $0x70] sm:$0xf] %vm1096, %v1024
      %1126 = vst.msk [vmem:[%s175 + $0x74] sm:$0xf] %vm1096, %v1025
      %1127 = vst.msk [vmem:[%s175 + $0x78] sm:$0xf] %vm1096, %v1026
      %1128 = vst.msk [vmem:[%s175 + $0x7c] sm:$0xf] %vm1096, %v1027
      %1129 = vst.msk [vmem:[%s175 + $0x80] sm:$0xf] %vm1096, %v1028
      %1130 = vst.msk [vmem:[%s175 + $0x84] sm:$0xf] %vm1096, %v1029
      %1131 = vst.msk [vmem:[%s175 + $0x88] sm:$0xf] %vm1096, %v1030
      %1132 = vst.msk [vmem:[%s175 + $0x8c] sm:$0xf] %vm1096, %v1031
      %1133 = vst.msk [vmem:[%s175 + $0x90] sm:$0xf] %vm1096, %v1032
      %1134 = vst.msk [vmem:[%s175 + $0x94] sm:$0xf] %vm1096, %v1033
      %1135 = vst.msk [vmem:[%s175 + $0x98] sm:$0xf] %vm1096, %v1034
      %1136 = vst.msk [vmem:[%s175 + $0x9c] sm:$0xf] %vm1096, %v1035
      %1137 = vst.msk [vmem:[%s175 + $0xa0] sm:$0xf] %vm1096, %v1036
      %1138 = vst.msk [vmem:[%s175 + $0xa4] sm:$0xf] %vm1096, %v1037
      %1139 = vst.msk [vmem:[%s175 + $0xa8] sm:$0xf] %vm1096, %v1038
      %1140 = vst.msk [vmem:[%s175 + $0xac] sm:$0xf] %vm1096, %v1039
      %1141 = vst.msk [vmem:[%s175 + $0xb0] sm:$0xf] %vm1096, %v1040
      %1142 = vst.msk [vmem:[%s175 + $0xb4] sm:$0xf] %vm1096, %v1041
      %1143 = vst.msk [vmem:[%s175 + $0xb8] sm:$0xf] %vm1096, %v1042
      %1144 = vst.msk [vmem:[%s175 + $0xbc] sm:$0xf] %vm1096, %v1043
      %1145 = vst.msk [vmem:[%s175 + $0xc0] sm:$0xf] %vm1096, %v1044
      %1146 = vst.msk [vmem:[%s175 + $0xc4] sm:$0xf] %vm1096, %v1045
      %s1147 = smul.u32 50, %s14
      %p1148 = scmp.lt.s32.totalorder %s1147, 99
      %s1149 = scalar_select %p1148, %s1147, 99
      %s1150 = smul.addr %s1149, 4
      %s1151 = scalar_lea.vmem %s3, %s1150
      // Predicated region
      $region33: #{dqn_forward.3} parent=31 // pred_check
        %p1152 = pneg %p100
      $region34: #{dqn_forward.3} parent=31 // pred_check_branch
        %1154 = sbr.rel (%p1152) target = $region36
      $region35: #{dqn_forward.3} parent=31 // pred_region
        %s1155 = smul.u32 50, %s14
      $region36: #{dqn_forward.3} parent=31 // pred_fallthru
        _
    $region32: #{dqn_forward.3} parent=5 // pred_fallthru
      _
    %p1156 = scmp.le.s32.totalorder 2, %s9
    // Predicated region
    $region37: #{dqn_forward.3} parent=5 // pred_check
      %p1157 = pneg %p1156
    $region38: #{dqn_forward.3} parent=5 // pred_check_branch
      %1159 = sbr.rel (%p1157) target = $region40
    $region39: #{dqn_forward.3} parent=5 // pred_region
      %s1160 = ssub.s32 %s9, 2
      // Predicated region
      $region41: #{dqn_forward.3} parent=39 // pred_check
        %p1161 = pneg %p106
      $region42: #{dqn_forward.3} parent=39 // pred_check_branch
        %1163 = sbr.rel (%p1161) target = $region44
      $region43: #{dqn_forward.3} parent=39 // pred_region
        %s1164 = smul.u32 50, %s15
        %p1165 = scmp.lt.s32.totalorder %s1164, 99
        %s1166 = scalar_select %p1165, %s1164, 99
        %s1167 = smul.addr %s1166, 4
        %s1168 = scalar_lea.vmem %s3, %s1167
      $region44: #{dqn_forward.3} parent=39 // pred_fallthru
        _
    $region40: #{dqn_forward.3} parent=5 // pred_fallthru
      _
  $region6: #{dqn_forward.3} parent=0 // loop_footer
    %s13 = sadd.s32 1, %s9
  $region7: #{dqn_forward.3} parent=0 // loop_footer_branch
    %8 = sbr.rel target = $region3
  $region8: #{dqn_forward.3} parent=0 // loop_exit
    _

// kernel: dqn_forward.4
$region0: #{dqn_forward.4}
  #allocation0 [shape = 'u32[]', space=smem, size = 0x4, offset = 0x4, fixed_abs, tag = 'smem constant byte address 0x4 - core index']
  #allocation1 [shape = 'u32[144,128]{1,0:T(1,128)}', space=vmem, size = 0x12000, scoped, tag = 'internal scratch']
  %s0 = inlined_call_operand.vmem [shape: bf16[162,256], index: 0, kind: input, shape index: {}]
  %s1 = inlined_call_operand.vmem [shape: bf16[256,32], index: 1, kind: input, shape index: {}]
  %s2 = inlined_call_operand.vmem [shape: f32[1,32], index: 2, kind: input, shape index: {}]
  %s3 = inlined_call_operand.vmem [shape: bf16[162,32], index: 3, kind: output, shape index: {}]
  %s4 = sld [smem:[#allocation0]]
  $region22: #{dqn_forward.4} parent=0
    _
  %s6 = ssub.s32 1, %s4
  %s7 = scalar_select 0, %s6, %s4
  // Predicated region
  $region2: #{dqn_forward.4} parent=0 // pred_check
    _
  $region3: #{dqn_forward.4} parent=0 // pred_check_branch
    %9 = sbr.rel (0) target = $region5
  $region4: #{dqn_forward.4} parent=0 // pred_region
    _
  $region5: #{dqn_forward.4} parent=0 // pred_fallthru
    _
  // Predicated region
  $region6: #{dqn_forward.4} parent=0 // pred_check
    _
  $region7: #{dqn_forward.4} parent=0 // pred_check_branch
    %11 = sbr.rel (0) target = $region9
  $region8: #{dqn_forward.4} parent=0 // pred_region
    _
  $region9: #{dqn_forward.4} parent=0 // pred_fallthru
    _
  // Predicated region
  $region10: #{dqn_forward.4} parent=0 // pred_check
    _
  $region11: #{dqn_forward.4} parent=0 // pred_check_branch
    %13 = sbr.rel (0) target = $region13
  $region12: #{dqn_forward.4} parent=0 // pred_region
    _
  $region13: #{dqn_forward.4} parent=0 // pred_fallthru
    _
  %v15 = vld [vmem:[%s0] sm:$0xff]
  %v16 = vld [vmem:[%s0 + $0x8] sm:$0xff]
  %v17 = vld [vmem:[%s0 + $0x10] sm:$0xff]
  %v18 = vld [vmem:[%s0 + $0x18] sm:$0xff]
  %v19 = vld [vmem:[%s0 + $0x20] sm:$0xff]
  %v20 = vld [vmem:[%s0 + $0x28] sm:$0xff]
  %v21 = vld [vmem:[%s0 + $0x30] sm:$0xff]
  %v22 = vld [vmem:[%s0 + $0x38] sm:$0xff]
  %v23 = vld [vmem:[%s0 + $0x40] sm:$0xff]
  %v24 = vld [vmem:[%s0 + $0x48] sm:$0xff]
  %v25 = vld [vmem:[%s0 + $0x50] sm:$0xff]
  %v26 = vld [vmem:[%s0 + $0x58] sm:$0xff]
  %v27 = vld [vmem:[%s0 + $0x60] sm:$0xff]
  %v28 = vld [vmem:[%s0 + $0x68] sm:$0xff]
  %v29 = vld [vmem:[%s0 + $0x70] sm:$0xff]
  %v30 = vld [vmem:[%s0 + $0x78] sm:$0xff]
  %v31 = vld [vmem:[%s0 + $0x80] sm:$0xff]
  %v32 = vld [vmem:[%s0 + $0x88] sm:$0xff]
  %v33 = vld [vmem:[%s0 + $0x90] sm:$0xff]
  %v34 = vld [vmem:[%s0 + $0x98] sm:$0xff]
  %v35 = vld [vmem:[%s0 + $0xa0] sm:$0x11]
  %v36 = vld [vmem:[%s1] sm:$0xf]
  %v37 = vld [vmem:[%s1 + $0x4] sm:$0xf]
  %v38 = vld [vmem:[%s1 + $0x8] sm:$0xf]
  %v39 = vld [vmem:[%s1 + $0xc] sm:$0xf]
  %v40 = vld [vmem:[%s1 + $0x10] sm:$0xf]
  %v41 = vld [vmem:[%s1 + $0x14] sm:$0xf]
  %v42 = vld [vmem:[%s1 + $0x18] sm:$0xf]
  %v43 = vld [vmem:[%s1 + $0x1c] sm:$0xf]
  %v44 = vld [vmem:[%s1 + $0x20] sm:$0xf]
  %v45 = vld [vmem:[%s1 + $0x24] sm:$0xf]
  %v46 = vld [vmem:[%s1 + $0x28] sm:$0xf]
  %v47 = vld [vmem:[%s1 + $0x2c] sm:$0xf]
  %v48 = vld [vmem:[%s1 + $0x30] sm:$0xf]
  %v49 = vld [vmem:[%s1 + $0x34] sm:$0xf]
  %v50 = vld [vmem:[%s1 + $0x38] sm:$0xf]
  %v51 = vld [vmem:[%s1 + $0x3c] sm:$0xf]
  %v52 = vld [vmem:[%s1 + $0x40] sm:$0xf]
  %v53 = vld [vmem:[%s1 + $0x44] sm:$0xf]
  %v54 = vld [vmem:[%s1 + $0x48] sm:$0xf]
  %v55 = vld [vmem:[%s1 + $0x4c] sm:$0xf]
  %v56 = vld [vmem:[%s1 + $0x50] sm:$0xf]
  %v57 = vld [vmem:[%s1 + $0x54] sm:$0xf]
  %v58 = vld [vmem:[%s1 + $0x58] sm:$0xf]
  %v59 = vld [vmem:[%s1 + $0x5c] sm:$0xf]
  %v60 = vld [vmem:[%s1 + $0x60] sm:$0xf]
  %v61 = vld [vmem:[%s1 + $0x64] sm:$0xf]
  %v62 = vld [vmem:[%s1 + $0x68] sm:$0xf]
  %v63 = vld [vmem:[%s1 + $0x6c] sm:$0xf]
  %v64 = vld [vmem:[%s1 + $0x70] sm:$0xf]
  %v65 = vld [vmem:[%s1 + $0x74] sm:$0xf]
  %v66 = vld [vmem:[%s1 + $0x78] sm:$0xf]
  %v67 = vld [vmem:[%s1 + $0x7c] sm:$0xf]
  %v68 = vld [vmem:[%s2] sm:$0x1]
  %v70 = vlaneseq
  %v71 = vshrl.u32 %v70, 7
  %v72 = vsub.s32 0, %v71
  %v73 = vrot.slane %v68, %v72
  %v96 = vunpack.c.l.b16 %v15
  %v97 = vunpack.c.h.b16 %v15
  %v98 = vunpack.c.l.b16 %v16
  %v99 = vunpack.c.h.b16 %v16
  %v100 = vunpack.c.l.b16 %v17
  %v101 = vunpack.c.h.b16 %v17
  %v102 = vunpack.c.l.b16 %v18
  %v103 = vunpack.c.h.b16 %v18
  %v104 = vunpack.c.l.b16 %v19
  %v105 = vunpack.c.h.b16 %v19
  %v106 = vunpack.c.l.b16 %v20
  %v107 = vunpack.c.h.b16 %v20
  %v108 = vunpack.c.l.b16 %v21
  %v109 = vunpack.c.h.b16 %v21
  %v110 = vunpack.c.l.b16 %v22
  %v111 = vunpack.c.h.b16 %v22
  %v112 = vunpack.c.l.b16 %v23
  %v113 = vunpack.c.h.b16 %v23
  %v114 = vunpack.c.l.b16 %v24
  %v115 = vunpack.c.h.b16 %v24
  %v116 = vunpack.c.l.b16 %v25
  %v117 = vunpack.c.h.b16 %v25
  %v118 = vunpack.c.l.b16 %v26
  %v119 = vunpack.c.h.b16 %v26
  %v120 = vunpack.c.l.b16 %v27
  %v121 = vunpack.c.h.b16 %v27
  %v122 = vunpack.c.l.b16 %v28
  %v123 = vunpack.c.h.b16 %v28
  %v124 = vunpack.c.l.b16 %v29
  %v125 = vunpack.c.h.b16 %v29
  %v126 = vunpack.c.l.b16 %v30
  %v127 = vunpack.c.h.b16 %v30
  %v128 = vunpack.c.l.b16 %v31
  %v129 = vunpack.c.h.b16 %v31
  %v130 = vunpack.c.l.b16 %v32
  %v131 = vunpack.c.h.b16 %v32
  %v132 = vunpack.c.l.b16 %v33
  %v133 = vunpack.c.h.b16 %v33
  %v134 = vunpack.c.l.b16 %v34
  %v135 = vunpack.c.h.b16 %v34
  %v136 = vunpack.c.l.b16 %v35
  %v137 = vunpack.c.h.b16 %v35
  %v138 = vpack.c.b16 %v98, %v96
  %v139 = vpack.c.b16 %v99, %v97
  %v140 = vpack.c.b16 %v102, %v100
  %v141 = vpack.c.b16 %v103, %v101
  %v142 = vpack.c.b16 %v106, %v104
  %v143 = vpack.c.b16 %v107, %v105
  %v144 = vpack.c.b16 %v110, %v108
  %v145 = vpack.c.b16 %v111, %v109
  %v146 = vpack.c.b16 %v114, %v112
  %v147 = vpack.c.b16 %v115, %v113
  %v148 = vpack.c.b16 %v118, %v116
  %v149 = vpack.c.b16 %v119, %v117
  %v150 = vpack.c.b16 %v122, %v120
  %v151 = vpack.c.b16 %v123, %v121
  %v152 = vpack.c.b16 %v126, %v124
  %v153 = vpack.c.b16 %v127, %v125
  %v154 = vpack.c.b16 %v130, %v128
  %v155 = vpack.c.b16 %v131, %v129
  %v156 = vpack.c.b16 %v134, %v132
  %v157 = vpack.c.b16 %v135, %v133
  %v158 = vpack.c.b16 %v136, %v136
  %v159 = vpack.c.b16 %v137, %v137
  %v214 = vunpack.c.l.b16 %v36
  %v215 = vunpack.c.l.b16 %v37
  %v216 = vunpack.c.l.b16 %v38
  %v217 = vunpack.c.l.b16 %v39
  %v218 = vunpack.c.l.b16 %v40
  %v219 = vunpack.c.l.b16 %v41
  %v220 = vunpack.c.l.b16 %v42
  %v221 = vunpack.c.l.b16 %v43
  %v222 = vunpack.c.l.b16 %v44
  %v223 = vunpack.c.l.b16 %v45
  %v224 = vunpack.c.l.b16 %v46
  %v225 = vunpack.c.l.b16 %v47
  %v226 = vunpack.c.l.b16 %v48
  %v227 = vunpack.c.l.b16 %v49
  %v228 = vunpack.c.l.b16 %v50
  %v229 = vunpack.c.l.b16 %v51
  %v230 = vunpack.c.l.b16 %v52
  %v231 = vunpack.c.l.b16 %v53
  %v232 = vunpack.c.l.b16 %v54
  %v233 = vunpack.c.l.b16 %v55
  %v234 = vunpack.c.l.b16 %v56
  %v235 = vunpack.c.l.b16 %v57
  %v236 = vunpack.c.l.b16 %v58
  %v237 = vunpack.c.l.b16 %v59
  %v238 = vunpack.c.l.b16 %v60
  %v239 = vunpack.c.l.b16 %v61
  %v240 = vunpack.c.l.b16 %v62
  %v241 = vunpack.c.l.b16 %v63
  %v242 = vunpack.c.l.b16 %v64
  %v243 = vunpack.c.l.b16 %v65
  %v244 = vunpack.c.l.b16 %v66
  %v245 = vunpack.c.l.b16 %v67
  %v246 = vpack.c.b16 %v215, %v214
  %v247 = vpack.c.b16 %v217, %v216
  %v248 = vpack.c.b16 %v219, %v218
  %v249 = vpack.c.b16 %v221, %v220
  %v250 = vpack.c.b16 %v223, %v222
  %v251 = vpack.c.b16 %v225, %v224
  %v252 = vpack.c.b16 %v227, %v226
  %v253 = vpack.c.b16 %v229, %v228
  %v254 = vpack.c.b16 %v231, %v230
  %v255 = vpack.c.b16 %v233, %v232
  %v256 = vpack.c.b16 %v235, %v234
  %v257 = vpack.c.b16 %v237, %v236
  %v258 = vpack.c.b16 %v239, %v238
  %v259 = vpack.c.b16 %v241, %v240
  %v260 = vpack.c.b16 %v243, %v242
  %v261 = vpack.c.b16 %v245, %v244
  %278 = vmatprep.subr.bf16.mxu0 0
  %279 = vmatpush1.bf16.msra.mxu0 %v246
  %280 = vmatprep.subr.bf16.mxu0 0
  %281 = vmatpush1.bf16.msra.mxu0 %v247
  %282 = vmatprep.subr.bf16.mxu0 0
  %283 = vmatpush1.bf16.msra.mxu0 %v248
  %284 = vmatprep.subr.bf16.mxu0 0
  %285 = vmatpush1.bf16.msra.mxu0 %v249
  %286 = vmatprep.subr.bf16.mxu0 0
  %287 = vmatpush1.bf16.msra.mxu0 %v250
  %288 = vmatprep.subr.bf16.mxu0 0
  %289 = vmatpush1.bf16.msra.mxu0 %v251
  %290 = vmatprep.subr.bf16.mxu0 0
  %291 = vmatpush1.bf16.msra.mxu0 %v252
  %292 = vmatprep.subr.bf16.mxu0 0
  %293 = vmatpush1.bf16.msra.mxu0 %v253
  %294 = vmatprep.subr.bf16.mxu0 0
  %295 = vmatpush1.bf16.msra.mxu0 %v254
  %296 = vmatprep.subr.bf16.mxu0 0
  %297 = vmatpush1.bf16.msra.mxu0 %v255
  %298 = vmatprep.subr.bf16.mxu0 0
  %299 = vmatpush1.bf16.msra.mxu0 %v256
  %300 = vmatprep.subr.bf16.mxu0 0
  %301 = vmatpush1.bf16.msra.mxu0 %v257
  %302 = vmatprep.subr.bf16.mxu0 0
  %303 = vmatpush1.bf16.msra.mxu0 %v258
  %304 = vmatprep.subr.bf16.mxu0 0
  %305 = vmatpush1.bf16.msra.mxu0 %v259
  %306 = vmatprep.subr.bf16.mxu0 0
  %307 = vmatpush1.bf16.msra.mxu0 %v260
  %308 = vmatprep.subr.bf16.mxu0 0
  %309 = vmatpush1.bf16.msra.mxu0 %v261
  %310 = vmatprep.mubr.bf16.mxu0 %v139
  %311 = vmatmul.mubr.bf16.gmra.mrb[0].mxu0 %v138
  %v312 = vpop.f32.mrb[0].mxu0
  %v313 = vadd.f32 %v73, %v312
  %v314 = vpop.f32.mrb[0].mxu0
  %v315 = vpop.f32.mrb[0].mxu0
  %v316 = vadd.f32 %v73, %v315
  %v317 = vpop.f32.mrb[0].mxu0
  %318 = vmatprep.mubr.bf16.mxu0 %v141
  %319 = vmatmul.mubr.bf16.gmra.mrb[0].mxu0 %v140
  %v320 = vpop.f32.mrb[0].mxu0
  %v321 = vadd.f32 %v73, %v320
  %v322 = vpop.f32.mrb[0].mxu0
  %v323 = vpop.f32.mrb[0].mxu0
  %v324 = vadd.f32 %v73, %v323
  %v325 = vpop.f32.mrb[0].mxu0
  %326 = vmatprep.mubr.bf16.mxu0 %v143
  %327 = vmatmul.mubr.bf16.gmra.mrb[0].mxu0 %v142
  %v328 = vpop.f32.mrb[0].mxu0
  %v329 = vadd.f32 %v73, %v328
  %v330 = vpop.f32.mrb[0].mxu0
  %v331 = vpop.f32.mrb[0].mxu0
  %v332 = vadd.f32 %v73, %v331
  %v333 = vpop.f32.mrb[0].mxu0
  %334 = vmatprep.mubr.bf16.mxu0 %v145
  %335 = vmatmul.mubr.bf16.gmra.mrb[0].mxu0 %v144
  %v336 = vpop.f32.mrb[0].mxu0
  %v337 = vadd.f32 %v73, %v336
  %v338 = vpop.f32.mrb[0].mxu0
  %v339 = vpop.f32.mrb[0].mxu0
  %v340 = vadd.f32 %v73, %v339
  %v341 = vpop.f32.mrb[0].mxu0
  %342 = vmatprep.mubr.bf16.mxu0 %v147
  %343 = vmatmul.mubr.bf16.gmra.mrb[0].mxu0 %v146
  %v344 = vpop.f32.mrb[0].mxu0
  %v345 = vadd.f32 %v73, %v344
  %v346 = vpop.f32.mrb[0].mxu0
  %v347 = vpop.f32.mrb[0].mxu0
  %v348 = vadd.f32 %v73, %v347
  %v349 = vpop.f32.mrb[0].mxu0
  %350 = vmatprep.mubr.bf16.mxu0 %v149
  %351 = vmatmul.mubr.bf16.gmra.mrb[0].mxu0 %v148
  %v352 = vpop.f32.mrb[0].mxu0
  %v353 = vadd.f32 %v73, %v352
  %v354 = vpop.f32.mrb[0].mxu0
  %v355 = vpop.f32.mrb[0].mxu0
  %v356 = vadd.f32 %v73, %v355
  %v357 = vpop.f32.mrb[0].mxu0
  %358 = vmatprep.mubr.bf16.mxu0 %v151
  %359 = vmatmul.mubr.bf16.gmra.mrb[0].mxu0 %v150
  %v360 = vpop.f32.mrb[0].mxu0
  %v361 = vadd.f32 %v73, %v360
  %v362 = vpop.f32.mrb[0].mxu0
  %v363 = vpop.f32.mrb[0].mxu0
  %v364 = vadd.f32 %v73, %v363
  %v365 = vpop.f32.mrb[0].mxu0
  %366 = vmatprep.mubr.bf16.mxu0 %v153
  %367 = vmatmul.mubr.bf16.gmra.mrb[0].mxu0 %v152
  %v368 = vpop.f32.mrb[0].mxu0
  %v369 = vadd.f32 %v73, %v368
  %v370 = vpop.f32.mrb[0].mxu0
  %v371 = vpop.f32.mrb[0].mxu0
  %v372 = vadd.f32 %v73, %v371
  %v373 = vpop.f32.mrb[0].mxu0
  %374 = vmatprep.mubr.bf16.mxu0 %v155
  %375 = vmatmul.mubr.bf16.gmra.mrb[0].mxu0 %v154
  %v376 = vpop.f32.mrb[0].mxu0
  %v377 = vadd.f32 %v73, %v376
  %v378 = vpop.f32.mrb[0].mxu0
  %v379 = vpop.f32.mrb[0].mxu0
  %v380 = vadd.f32 %v73, %v379
  %v381 = vpop.f32.mrb[0].mxu0
  %382 = vmatprep.mubr.bf16.mxu0 %v157
  %383 = vmatmul.mubr.bf16.gmra.mrb[0].mxu0 %v156
  %v384 = vpop.f32.mrb[0].mxu0
  %v385 = vadd.f32 %v73, %v384
  %v386 = vpop.f32.mrb[0].mxu0
  %v387 = vpop.f32.mrb[0].mxu0
  %v388 = vadd.f32 %v73, %v387
  %v389 = vpop.f32.mrb[0].mxu0
  %390 = vmatprep.mubr.bf16.mxu0 %v159
  %391 = vmatmul.mubr.bf16.gmra.mrb[0].mxu0 %v158
  %v392 = vpop.f32.mrb[0].mxu0
  %v393 = vadd.f32 %v73, %v392
  %v394 = vpop.f32.mrb[0].mxu0
  %v395 = vpop.f32.mrb[0].mxu0
  %v396 = vpop.f32.mrb[0].mxu0
  %397 = vdwg.mxu0
  %v398 = vmax.f32 %v313, 0.0
  %v399 = vmax.f32 %v316, 0.0
  %v400 = vmax.f32 %v321, 0.0
  %v401 = vmax.f32 %v324, 0.0
  %v402 = vmax.f32 %v329, 0.0
  %v403 = vmax.f32 %v332, 0.0
  %v404 = vmax.f32 %v337, 0.0
  %v405 = vmax.f32 %v340, 0.0
  %v406 = vmax.f32 %v345, 0.0
  %v407 = vmax.f32 %v348, 0.0
  %v408 = vmax.f32 %v353, 0.0
  %v409 = vmax.f32 %v356, 0.0
  %v410 = vmax.f32 %v361, 0.0
  %v411 = vmax.f32 %v364, 0.0
  %v412 = vmax.f32 %v369, 0.0
  %v413 = vmax.f32 %v372, 0.0
  %v414 = vmax.f32 %v377, 0.0
  %v415 = vmax.f32 %v380, 0.0
  %v416 = vmax.f32 %v385, 0.0
  %v417 = vmax.f32 %v388, 0.0
  %v418 = vmax.f32 %v393, 0.0
  %v419 = vpack.c.bf16 %v399, %v398
  %v420 = vpack.c.bf16 %v401, %v400
  %v421 = vpack.c.bf16 %v403, %v402
  %v422 = vpack.c.bf16 %v405, %v404
  %v423 = vpack.c.bf16 %v407, %v406
  %v424 = vpack.c.bf16 %v409, %v408
  %v425 = vpack.c.bf16 %v411, %v410
  %v426 = vpack.c.bf16 %v413, %v412
  %v427 = vpack.c.bf16 %v415, %v414
  %v428 = vpack.c.bf16 %v417, %v416
  %v429 = vpack.c.bf16 %v418, %v418
  %v441 = vunpack.c.l.b16 %v419
  %v442 = vunpack.c.h.b16 %v419
  %v443 = vunpack.c.l.b16 %v420
  %v444 = vunpack.c.h.b16 %v420
  %v445 = vunpack.c.l.b16 %v421
  %v446 = vunpack.c.h.b16 %v421
  %v447 = vunpack.c.l.b16 %v422
  %v448 = vunpack.c.h.b16 %v422
  %v449 = vunpack.c.l.b16 %v423
  %v450 = vunpack.c.h.b16 %v423
  %v451 = vunpack.c.l.b16 %v424
  %v452 = vunpack.c.h.b16 %v424
  %v453 = vunpack.c.l.b16 %v425
  %v454 = vunpack.c.h.b16 %v425
  %v455 = vunpack.c.l.b16 %v426
  %v456 = vunpack.c.h.b16 %v426
  %v457 = vunpack.c.l.b16 %v427
  %v458 = vunpack.c.h.b16 %v427
  %v459 = vunpack.c.l.b16 %v428
  %v460 = vunpack.c.h.b16 %v428
  %v461 = vunpack.c.l.b16 %v429
  %v462 = vpack.c.b16 %v441, %v441
  %v463 = vpack.c.b16 %v442, %v442
  %v464 = vpack.c.b16 %v443, %v443
  %v465 = vpack.c.b16 %v444, %v444
  %v466 = vpack.c.b16 %v445, %v445
  %v467 = vpack.c.b16 %v446, %v446
  %v468 = vpack.c.b16 %v447, %v447
  %v469 = vpack.c.b16 %v448, %v448
  %v470 = vpack.c.b16 %v449, %v449
  %v471 = vpack.c.b16 %v450, %v450
  %v472 = vpack.c.b16 %v451, %v451
  %v473 = vpack.c.b16 %v452, %v452
  %v474 = vpack.c.b16 %v453, %v453
  %v475 = vpack.c.b16 %v454, %v454
  %v476 = vpack.c.b16 %v455, %v455
  %v477 = vpack.c.b16 %v456, %v456
  %v478 = vpack.c.b16 %v457, %v457
  %v479 = vpack.c.b16 %v458, %v458
  %v480 = vpack.c.b16 %v459, %v459
  %v481 = vpack.c.b16 %v460, %v460
  %v482 = vpack.c.b16 %v461, %v461
  %vm504 = vcmask 257024
  %505 = vst.msk [vmem:[%s3] sm:$0xf] %vm504, %v462
  %506 = vst.msk [vmem:[%s3 + $0x4] sm:$0xf] %vm504, %v463
  %507 = vst.msk [vmem:[%s3 + $0x8] sm:$0xf] %vm504, %v464
  %508 = vst.msk [vmem:[%s3 + $0xc] sm:$0xf] %vm504, %v465
  %509 = vst.msk [vmem:[%s3 + $0x10] sm:$0xf] %vm504, %v466
  %510 = vst.msk [vmem:[%s3 + $0x14] sm:$0xf] %vm504, %v467
  %511 = vst.msk [vmem:[%s3 + $0x18] sm:$0xf] %vm504, %v468
  %512 = vst.msk [vmem:[%s3 + $0x1c] sm:$0xf] %vm504, %v469
  %513 = vst.msk [vmem:[%s3 + $0x20] sm:$0xf] %vm504, %v470
  %514 = vst.msk [vmem:[%s3 + $0x24] sm:$0xf] %vm504, %v471
  %515 = vst.msk [vmem:[%s3 + $0x28] sm:$0xf] %vm504, %v472
  %516 = vst.msk [vmem:[%s3 + $0x2c] sm:$0xf] %vm504, %v473
  %517 = vst.msk [vmem:[%s3 + $0x30] sm:$0xf] %vm504, %v474
  %518 = vst.msk [vmem:[%s3 + $0x34] sm:$0xf] %vm504, %v475
  %519 = vst.msk [vmem:[%s3 + $0x38] sm:$0xf] %vm504, %v476
  %520 = vst.msk [vmem:[%s3 + $0x3c] sm:$0xf] %vm504, %v477
  %521 = vst.msk [vmem:[%s3 + $0x40] sm:$0xf] %vm504, %v478
  %522 = vst.msk [vmem:[%s3 + $0x44] sm:$0xf] %vm504, %v479
  %523 = vst.msk [vmem:[%s3 + $0x48] sm:$0xf] %vm504, %v480
  %524 = vst.msk [vmem:[%s3 + $0x4c] sm:$0xf] %vm504, %v481
  %vm525 = vcmask 253952
  %526 = vst.msk [vmem:[%s3 + $0x50] sm:$0x1] %vm525, %v482
  // Predicated region
  $region14: #{dqn_forward.4} parent=0 // pred_check
    _
  $region15: #{dqn_forward.4} parent=0 // pred_check_branch
    %528 = sbr.rel (0) target = $region17
  $region16: #{dqn_forward.4} parent=0 // pred_region
    _
  $region17: #{dqn_forward.4} parent=0 // pred_fallthru
    _
  // Predicated region
  $region18: #{dqn_forward.4} parent=0 // pred_check
    _
  $region19: #{dqn_forward.4} parent=0 // pred_check_branch
    %530 = sbr.rel (0) target = $region21
  $region20: #{dqn_forward.4} parent=0 // pred_region
    _
  $region21: #{dqn_forward.4} parent=0 // pred_fallthru
    _

// kernel: dqn_forward.5
$region0: #{dqn_forward.5}
  #allocation0 [shape = 'u32[]', space=smem, size = 0x4, offset = 0x4, fixed_abs, tag = 'smem constant byte address 0x4 - core index']
  #allocation1 [shape = 'u32[144,128]{1,0:T(1,128)}', space=vmem, size = 0x12000, scoped, tag = 'internal scratch']
  %s0 = inlined_call_operand.vmem [shape: bf16[2,2592], index: 0, kind: input, shape index: {}]
  %s1 = inlined_call_operand.vmem [shape: bf16[2592,256], index: 1, kind: input, shape index: {}]
  %s2 = inlined_call_operand.vmem [shape: f32[1,256], index: 2, kind: input, shape index: {}]
  %s3 = inlined_call_operand.vmem [shape: bf16[256,128], index: 3, kind: input, shape index: {}]
  %s4 = inlined_call_operand.vmem [shape: f32[2,2,128], index: 4, kind: output, shape index: {}]
  %s5 = sld [smem:[#allocation0]]
  $region90: #{dqn_forward.5} parent=0
    _
  %s7 = ssub.s32 1, %s5
  %s8 = scalar_select 0, %s7, %s5
  $region1: #{dqn_forward.5} parent=0
    #allocation2 [shape = 'u8[1327104]{0}', space=vmem, size = 0x144000, scoped, tag = 'input window, operand 1']
    loop: start=0, step=1, limit=4
    $region2: #{dqn_forward.5} parent=1 // loop_pre_header
      _
    $region3: #{dqn_forward.5} parent=1 // loop_header
      %s10 = sphi 0, %s14
      %p11 = scmp.ge.s32.totalorder %s10, 4
      %s18 = sphi 0, %s18
      %s20 = sphi 0, %s18
      %s21 = sphi 0, %s20
      %s35 = sphi 0, %s21
      %s41 = sphi 0, %s43
      %s44 = sphi 0, %s41
      %s45 = sphi 0, %s44
      %s61 = sphi 0, %s45
      %s67 = sphi 0, %s69
      %s70 = sphi 0, %s67
      %s71 = sphi 0, %s70
      %s87 = sphi 0, %s71
      %s93 = sphi 0, %s95
      %s96 = sphi 0, %s93
      %s97 = sphi 0, %s96
      %s113 = sphi 0, %s97
      %s119 = sphi 0, %s121
      %s122 = sphi 0, %s119
      %s123 = sphi 0, %s122
      %s139 = sphi 0, %s123
    $region4: #{dqn_forward.5} parent=1 // loop_header_branch
      %13 = sbr.rel (%p11) target = $region8
    $region5: #{dqn_forward.5} parent=1 // loop_body
      %s15 = ssub.s32 %s10, 1
      %s16 = ssub.s32 %s10, 2
      %s17 = sadd.s32 %s10, 1
      %s19 = sadd.s32 %s18, 1
      %p22 = scmp.eq.s32.totalorder %s10, 1
      %p23 = scmp.ne.s32.totalorder %s18, %s20
      %p24 = scmp.eq.s32.totalorder %s10, 0
      %p25 = por %p23, %p24
      %p26 = scmp.ne.s32.totalorder %s18, %s20
      %p27 = scmp.eq.s32.totalorder %s15, 1
      %p28 = por %p26, %p27
      %p29 = scmp.ne.s32.totalorder %s20, %s21
      %p30 = scmp.eq.s32.totalorder %s15, 0
      %p31 = por %p29, %p30
      %p32 = scmp.ne.s32.totalorder %s20, %s21
      %p33 = scmp.eq.s32.totalorder %s16, 1
      %p34 = por %p32, %p33
      %p36 = scmp.ne.s32.totalorder %s21, %s35
      %p37 = scmp.eq.s32.totalorder %s16, 0
      %p38 = por %p36, %p37
      %s39 = ssub.s32 %s10, %s17
      %p40 = scmp.eq.s32.totalorder %s39, 0
      %s42 = sadd.s32 %s41, 1
      %s43 = scalar_select %p40, %s41, %s42
      %p46 = pneg %p40
      %p47 = scmp.eq.s32.totalorder %s10, 1
      %p48 = por %p46, %p47
      %p49 = scmp.ne.s32.totalorder %s41, %s44
      %p50 = scmp.eq.s32.totalorder %s10, 0
      %p51 = por %p49, %p50
      %p52 = scmp.ne.s32.totalorder %s41, %s44
      %p53 = scmp.eq.s32.totalorder %s15, 1
      %p54 = por %p52, %p53
      %p55 = scmp.ne.s32.totalorder %s44, %s45
      %p56 = scmp.eq.s32.totalorder %s15, 0
      %p57 = por %p55, %p56
      %p58 = scmp.ne.s32.totalorder %s44, %s45
      %p59 = scmp.eq.s32.totalorder %s16, 1
      %p60 = por %p58, %p59
      %p62 = scmp.ne.s32.totalorder %s45, %s61
      %p63 = scmp.eq.s32.totalorder %s16, 0
      %p64 = por %p62, %p63
      %s65 = ssub.s32 %s10, %s17
      %p66 = scmp.eq.s32.totalorder %s65, 0
      %s68 = sadd.s32 %s67, 1
      %s69 = scalar_select %p66, %s67, %s68
      %p72 = pneg %p66
      %p73 = scmp.eq.s32.totalorder %s10, 1
      %p74 = por %p72, %p73
      %p75 = scmp.ne.s32.totalorder %s67, %s70
      %p76 = scmp.eq.s32.totalorder %s10, 0
      %p77 = por %p75, %p76
      %p78 = scmp.ne.s32.totalorder %s67, %s70
      %p79 = scmp.eq.s32.totalorder %s15, 1
      %p80 = por %p78, %p79
      %p81 = scmp.ne.s32.totalorder %s70, %s71
      %p82 = scmp.eq.s32.totalorder %s15, 0
      %p83 = por %p81, %p82
      %p84 = scmp.ne.s32.totalorder %s70, %s71
      %p85 = scmp.eq.s32.totalorder %s16, 1
      %p86 = por %p84, %p85
      %p88 = scmp.ne.s32.totalorder %s71, %s87
      %p89 = scmp.eq.s32.totalorder %s16, 0
      %p90 = por %p88, %p89
      %s91 = ssub.s32 %s10, %s17
      %p92 = scmp.eq.s32.totalorder %s91, 0
      %s94 = sadd.s32 %s93, 1
      %s95 = scalar_select %p92, %s93, %s94
      %p98 = pneg %p92
      %p99 = scmp.eq.s32.totalorder %s10, 1
      %p100 = por %p98, %p99
      %p101 = scmp.ne.s32.totalorder %s93, %s96
      %p102 = scmp.eq.s32.totalorder %s10, 0
      %p103 = por %p101, %p102
      %p104 = scmp.ne.s32.totalorder %s93, %s96
      %p105 = scmp.eq.s32.totalorder %s15, 1
      %p106 = por %p104, %p105
      %p107 = scmp.ne.s32.totalorder %s96, %s97
      %p108 = scmp.eq.s32.totalorder %s15, 0
      %p109 = por %p107, %p108
      %p110 = scmp.ne.s32.totalorder %s96, %s97
      %p111 = scmp.eq.s32.totalorder %s16, 1
      %p112 = por %p110, %p111
      %p114 = scmp.ne.s32.totalorder %s97, %s113
      %p115 = scmp.eq.s32.totalorder %s16, 0
      %p116 = por %p114, %p115
      %s117 = ssub.s32 %s10, %s17
      %p118 = scmp.eq.s32.totalorder %s117, 0
      %s120 = sadd.s32 %s119, 1
      %s121 = scalar_select %p118, %s119, %s120
      %p124 = pneg %p118
      %p125 = scmp.eq.s32.totalorder %s10, 1
      %p126 = por %p124, %p125
      %p127 = scmp.ne.s32.totalorder %s119, %s122
      %p128 = scmp.eq.s32.totalorder %s10, 0
      %p129 = por %p127, %p128
      %p130 = scmp.ne.s32.totalorder %s119, %s122
      %p131 = scmp.eq.s32.totalorder %s15, 1
      %p132 = por %p130, %p131
      %p133 = scmp.ne.s32.totalorder %s122, %s123
      %p134 = scmp.eq.s32.totalorder %s15, 0
      %p135 = por %p133, %p134
      %p136 = scmp.ne.s32.totalorder %s122, %s123
      %p137 = scmp.eq.s32.totalorder %s16, 1
      %p138 = por %p136, %p137
      %p140 = scmp.ne.s32.totalorder %s123, %s139
      %p141 = scmp.eq.s32.totalorder %s16, 0
      %p142 = por %p140, %p141
      %p143 = scmp.le.s32.totalorder 1, %s10
      %p144 = scmp.lt.s32.totalorder %s10, 3
      %p145 = pnand %p143, %p144
      %p146 = pneg %p145
      // Predicated region
      $region9: #{dqn_forward.5} parent=5 // pred_check
        _
      $region10: #{dqn_forward.5} parent=5 // pred_check_branch
        %148 = sbr.rel (%p145) target = $region12
      $region11: #{dqn_forward.5} parent=5 // pred_region
        %s149 = ssub.s32 %s10, 1
        // Predicated region
        $region13: #{dqn_forward.5} parent=11 // pred_check
          %p150 = pneg %p31
        $region14: #{dqn_forward.5} parent=11 // pred_check_branch
          %152 = sbr.rel (%p150) target = $region16
        $region15: #{dqn_forward.5} parent=11 // pred_region
          _
        $region16: #{dqn_forward.5} parent=11 // pred_fallthru
          _
      $region12: #{dqn_forward.5} parent=5 // pred_fallthru
        _
      %p153 = scmp.lt.s32.totalorder %s10, 2
      // Predicated region
      $region17: #{dqn_forward.5} parent=5 // pred_check
        %p154 = pneg %p153
      $region18: #{dqn_forward.5} parent=5 // pred_check_branch
        %156 = sbr.rel (%p154) target = $region20
      $region19: #{dqn_forward.5} parent=5 // pred_region
        // Predicated region
        $region21: #{dqn_forward.5} parent=19 // pred_check
          %p157 = pneg %p51
        $region22: #{dqn_forward.5} parent=19 // pred_check_branch
          %159 = sbr.rel (%p157) target = $region24
        $region23: #{dqn_forward.5} parent=19 // pred_region
          %s160 = sand.u32 %s41, 1
          %s161 = sand.u32 %s41, 1
          %s162 = smul.addr %s161, 1296
          %s163 = scalar_lea.vmem [#allocation2], %s162
          %s164 = smul.addr %s10, 4
          %s165 = scalar_lea.vmem %s1, %s164
          // Predicated region
          $region25: #{dqn_forward.5} parent=23 // pred_check
            _
          $region26: #{dqn_forward.5} parent=23 // pred_check_branch
            %167 = sbr.rel (0) target = $region28
          $region27: #{dqn_forward.5} parent=23 // pred_region
            // Predicated region
            $region29: #{dqn_forward.5} parent=27 // pred_check
              _
            $region30: #{dqn_forward.5} parent=27 // pred_check_branch
              %169 = sbr.rel target = $region32
            $region31: #{dqn_forward.5} parent=27 // pred_region
              // Predicated region
              $region44: #{dqn_forward.5} parent=31 // pred_check
                _
              $region45: #{dqn_forward.5} parent=31 // pred_check_branch
                %830 = sbr.rel (0) target = $region47
              $region46: #{dqn_forward.5} parent=31 // pred_region
                loop: start=0, step=1, limit=1
                $region48: #{dqn_forward.5} parent=46 // loop_pre_header
                  _
                $region49: #{dqn_forward.5} parent=46 // loop_header
                  %s832 = sphi 0, %s836
                  %p833 = scmp.ge.s32.totalorder %s832, 1
                  %s837 = sphi %s165, %s165
                  %s838 = sphi %s163, %s163
                $region50: #{dqn_forward.5} parent=46 // loop_header_branch
                  %835 = sbr.rel (%p833) target = $region54
                $region51: #{dqn_forward.5} parent=46 // loop_body
                  _
                $region52: #{dqn_forward.5} parent=46 // loop_footer
                  %s836 = sadd.s32 1, %s832
                $region53: #{dqn_forward.5} parent=46 // loop_footer_branch
                  %831 = sbr.rel target = $region49
                $region54: #{dqn_forward.5} parent=46 // loop_exit
                  _
                loop: start=0, step=1, limit=1
                $region55: #{dqn_forward.5} parent=46 // loop_pre_header
                  _
                $region56: #{dqn_forward.5} parent=46 // loop_header
                  %s841 = sphi 0, %s845
                  %p842 = scmp.ge.s32.totalorder %s841, 1
                  %s846 = sphi %s165, %s165
                  %s847 = sphi %s163, %s163
                $region57: #{dqn_forward.5} parent=46 // loop_header_branch
                  %844 = sbr.rel (%p842) target = $region61
                $region58: #{dqn_forward.5} parent=46 // loop_body
                  %v848 = vld [vmem:[%s846] sm:$0xf]
                  %849 = vst [vmem:[%s847] sm:$0xf] %v848
                  %v850 = vld [vmem:[%s846 + $0x8] sm:$0xf]
                  %851 = vst [vmem:[%s847 + $0x4] sm:$0xf] %v850
                  %v852 = vld [vmem:[%s846 + $0x10] sm:$0xf]
                  %853 = vst [vmem:[%s847 + $0x8] sm:$0xf] %v852
                  %v854 = vld [vmem:[%s846 + $0x18] sm:$0xf]
                  %855 = vst [vmem:[%s847 + $0xc] sm:$0xf] %v854
                  %v856 = vld [vmem:[%s846 + $0x20] sm:$0xf]
                  %857 = vst [vmem:[%s847 + $0x10] sm:$0xf] %v856
                  %v858 = vld [vmem:[%s846 + $0x28] sm:$0xf]
                  %859 = vst [vmem:[%s847 + $0x14] sm:$0xf] %v858
                  %v860 = vld [vmem:[%s846 + $0x30] sm:$0xf]
                  %861 = vst [vmem:[%s847 + $0x18] sm:$0xf] %v860
                  %v862 = vld [vmem:[%s846 + $0x38] sm:$0xf]
                  %863 = vst [vmem:[%s847 + $0x1c] sm:$0xf] %v862
                  %v864 = vld [vmem:[%s846 + $0x40] sm:$0xf]
                  %865 = vst [vmem:[%s847 + $0x20] sm:$0xf] %v864
                  %v866 = vld [vmem:[%s846 + $0x48] sm:$0xf]
                  %867 = vst [vmem:[%s847 + $0x24] sm:$0xf] %v866
                  %v868 = vld [vmem:[%s846 + $0x50] sm:$0xf]
                  %869 = vst [vmem:[%s847 + $0x28] sm:$0xf] %v868
                  %v870 = vld [vmem:[%s846 + $0x58] sm:$0xf]
                  %871 = vst [vmem:[%s847 + $0x2c] sm:$0xf] %v870
                  %v872 = vld [vmem:[%s846 + $0x60] sm:$0xf]
                  %873 = vst [vmem:[%s847 + $0x30] sm:$0xf] %v872
                  %v874 = vld [vmem:[%s846 + $0x68] sm:$0xf]
                  %875 = vst [vmem:[%s847 + $0x34] sm:$0xf] %v874
                  %v876 = vld [vmem:[%s846 + $0x70] sm:$0xf]
                  %877 = vst [vmem:[%s847 + $0x38] sm:$0xf] %v876
                  %v878 = vld [vmem:[%s846 + $0x78] sm:$0xf]
                  %879 = vst [vmem:[%s847 + $0x3c] sm:$0xf] %v878
                  %v880 = vld [vmem:[%s846 + $0x80] sm:$0xf]
                  %881 = vst [vmem:[%s847 + $0x40] sm:$0xf] %v880
                  %v882 = vld [vmem:[%s846 + $0x88] sm:$0xf]
                  %883 = vst [vmem:[%s847 + $0x44] sm:$0xf] %v882
                  %v884 = vld [vmem:[%s846 + $0x90] sm:$0xf]
                  %885 = vst [vmem:[%s847 + $0x48] sm:$0xf] %v884
                  %v886 = vld [vmem:[%s846 + $0x98] sm:$0xf]
                  %887 = vst [vmem:[%s847 + $0x4c] sm:$0xf] %v886
                  %v888 = vld [vmem:[%s846 + $0xa0] sm:$0xf]
                  %889 = vst [vmem:[%s847 + $0x50] sm:$0xf] %v888
                  %v890 = vld [vmem:[%s846 + $0xa8] sm:$0xf]
                  %891 = vst [vmem:[%s847 + $0x54] sm:$0xf] %v890
                  %v892 = vld [vmem:[%s846 + $0xb0] sm:$0xf]
                  %893 = vst [vmem:[%s847 + $0x58] sm:$0xf] %v892
                  %v894 = vld [vmem:[%s846 + $0xb8] sm:$0xf]
                  %895 = vst [vmem:[%s847 + $0x5c] sm:$0xf] %v894
                  %v896 = vld [vmem:[%s846 + $0xc0] sm:$0xf]
                  %897 = vst [vmem:[%s847 + $0x60] sm:$0xf] %v896
                  %v898 = vld [vmem:[%s846 + $0xc8] sm:$0xf]
                  %899 = vst [vmem:[%s847 + $0x64] sm:$0xf] %v898
                  %v900 = vld [vmem:[%s846 + $0xd0] sm:$0xf]
                  %901 = vst [vmem:[%s847 + $0x68] sm:$0xf] %v900
                  %v902 = vld [vmem:[%s846 + $0xd8] sm:$0xf]
                  %903 = vst [vmem:[%s847 + $0x6c] sm:$0xf] %v902
                  %v904 = vld [vmem:[%s846 + $0xe0] sm:$0xf]
                  %905 = vst [vmem:[%s847 + $0x70] sm:$0xf] %v904
                  %v906 = vld [vmem:[%s846 + $0xe8] sm:$0xf]
                  %907 = vst [vmem:[%s847 + $0x74] sm:$0xf] %v906
                  %v908 = vld [vmem:[%s846 + $0xf0] sm:$0xf]
                  %909 = vst [vmem:[%s847 + $0x78] sm:$0xf] %v908
                  %v910 = vld [vmem:[%s846 + $0xf8] sm:$0xf]
                  %911 = vst [vmem:[%s847 + $0x7c] sm:$0xf] %v910
                  %v912 = vld [vmem:[%s846 + $0x100] sm:$0xf]
                  %913 = vst [vmem:[%s847 + $0x80] sm:$0xf] %v912
                  %v914 = vld [vmem:[%s846 + $0x108] sm:$0xf]
                  %915 = vst [vmem:[%s847 + $0x84] sm:$0xf] %v914
                  %v916 = vld [vmem:[%s846 + $0x110] sm:$0xf]
                  %917 = vst [vmem:[%s847 + $0x88] sm:$0xf] %v916
                  %v918 = vld [vmem:[%s846 + $0x118] sm:$0xf]
                  %919 = vst [vmem:[%s847 + $0x8c] sm:$0xf] %v918
                  %v920 = vld [vmem:[%s846 + $0x120] sm:$0xf]
                  %921 = vst [vmem:[%s847 + $0x90] sm:$0xf] %v920
                  %v922 = vld [vmem:[%s846 + $0x128] sm:$0xf]
                  %923 = vst [vmem:[%s847 + $0x94] sm:$0xf] %v922
                  %v924 = vld [vmem:[%s846 + $0x130] sm:$0xf]
                  %925 = vst [vmem:[%s847 + $0x98] sm:$0xf] %v924
                  %v926 = vld [vmem:[%s846 + $0x138] sm:$0xf]
                  %927 = vst [vmem:[%s847 + $0x9c] sm:$0xf] %v926
                  %v928 = vld [vmem:[%s846 + $0x140] sm:$0xf]
                  %929 = vst [vmem:[%s847 + $0xa0] sm:$0xf] %v928
                  %v930 = vld [vmem:[%s846 + $0x148] sm:$0xf]
                  %931 = vst [vmem:[%s847 + $0xa4] sm:$0xf] %v930
                  %v932 = vld [vmem:[%s846 + $0x150] sm:$0xf]
                  %933 = vst [vmem:[%s847 + $0xa8] sm:$0xf] %v932
                  %v934 = vld [vmem:[%s846 + $0x158] sm:$0xf]
                  %935 = vst [vmem:[%s847 + $0xac] sm:$0xf] %v934
                  %v936 = vld [vmem:[%s846 + $0x160] sm:$0xf]
                  %937 = vst [vmem:[%s847 + $0xb0] sm:$0xf] %v936
                  %v938 = vld [vmem:[%s846 + $0x168] sm:$0xf]
                  %939 = vst [vmem:[%s847 + $0xb4] sm:$0xf] %v938
                  %v940 = vld [vmem:[%s846 + $0x170] sm:$0xf]
                  %941 = vst [vmem:[%s847 + $0xb8] sm:$0xf] %v940
                  %v942 = vld [vmem:[%s846 + $0x178] sm:$0xf]
                  %943 = vst [vmem:[%s847 + $0xbc] sm:$0xf] %v942
                  %v944 = vld [vmem:[%s846 + $0x180] sm:$0xf]
                  %945 = vst [vmem:[%s847 + $0xc0] sm:$0xf] %v944
                  %v946 = vld [vmem:[%s846 + $0x188] sm:$0xf]
                  %947 = vst [vmem:[%s847 + $0xc4] sm:$0xf] %v946
                  %v948 = vld [vmem:[%s846 + $0x190] sm:$0xf]
                  %949 = vst [vmem:[%s847 + $0xc8] sm:$0xf] %v948
                  %v950 = vld [vmem:[%s846 + $0x198] sm:$0xf]
                  %951 = vst [vmem:[%s847 + $0xcc] sm:$0xf] %v950
                  %v952 = vld [vmem:[%s846 + $0x1a0] sm:$0xf]
                  %953 = vst [vmem:[%s847 + $0xd0] sm:$0xf] %v952
                  %v954 = vld [vmem:[%s846 + $0x1a8] sm:$0xf]
                  %955 = vst [vmem:[%s847 + $0xd4] sm:$0xf] %v954
                  %v956 = vld [vmem:[%s846 + $0x1b0] sm:$0xf]
                  %957 = vst [vmem:[%s847 + $0xd8] sm:$0xf] %v956
                  %v958 = vld [vmem:[%s846 + $0x1b8] sm:$0xf]
                  %959 = vst [vmem:[%s847 + $0xdc] sm:$0xf] %v958
                  %v960 = vld [vmem:[%s846 + $0x1c0] sm:$0xf]
                  %961 = vst [vmem:[%s847 + $0xe0] sm:$0xf] %v960
                  %v962 = vld [vmem:[%s846 + $0x1c8] sm:$0xf]
                  %963 = vst [vmem:[%s847 + $0xe4] sm:$0xf] %v962
                  %v964 = vld [vmem:[%s846 + $0x1d0] sm:$0xf]
                  %965 = vst [vmem:[%s847 + $0xe8] sm:$0xf] %v964
                  %v966 = vld [vmem:[%s846 + $0x1d8] sm:$0xf]
                  %967 = vst [vmem:[%s847 + $0xec] sm:$0xf] %v966
                  %v968 = vld [vmem:[%s846 + $0x1e0] sm:$0xf]
                  %969 = vst [vmem:[%s847 + $0xf0] sm:$0xf] %v968
                  %v970 = vld [vmem:[%s846 + $0x1e8] sm:$0xf]
                  %971 = vst [vmem:[%s847 + $0xf4] sm:$0xf] %v970
                  %v972 = vld [vmem:[%s846 + $0x1f0] sm:$0xf]
                  %973 = vst [vmem:[%s847 + $0xf8] sm:$0xf] %v972
                  %v974 = vld [vmem:[%s846 + $0x1f8] sm:$0xf]
                  %975 = vst [vmem:[%s847 + $0xfc] sm:$0xf] %v974
                  %v976 = vld [vmem:[%s846 + $0x200] sm:$0xf]
                  %977 = vst [vmem:[%s847 + $0x100] sm:$0xf] %v976
                  %v978 = vld [vmem:[%s846 + $0x208] sm:$0xf]
                  %979 = vst [vmem:[%s847 + $0x104] sm:$0xf] %v978
                  %v980 = vld [vmem:[%s846 + $0x210] sm:$0xf]
                  %981 = vst [vmem:[%s847 + $0x108] sm:$0xf] %v980
                  %v982 = vld [vmem:[%s846 + $0x218] sm:$0xf]
                  %983 = vst [vmem:[%s847 + $0x10c] sm:$0xf] %v982
                  %v984 = vld [vmem:[%s846 + $0x220] sm:$0xf]
                  %985 = vst [vmem:[%s847 + $0x110] sm:$0xf] %v984
                  %v986 = vld [vmem:[%s846 + $0x228] sm:$0xf]
                  %987 = vst [vmem:[%s847 + $0x114] sm:$0xf] %v986
                  %v988 = vld [vmem:[%s846 + $0x230] sm:$0xf]
                  %989 = vst [vmem:[%s847 + $0x118] sm:$0xf] %v988
                  %v990 = vld [vmem:[%s846 + $0x238] sm:$0xf]
                  %991 = vst [vmem:[%s847 + $0x11c] sm:$0xf] %v990
                  %v992 = vld [vmem:[%s846 + $0x240] sm:$0xf]
                  %993 = vst [vmem:[%s847 + $0x120] sm:$0xf] %v992
                  %v994 = vld [vmem:[%s846 + $0x248] sm:$0xf]
                  %995 = vst [vmem:[%s847 + $0x124] sm:$0xf] %v994
                  %v996 = vld [vmem:[%s846 + $0x250] sm:$0xf]
                  %997 = vst [vmem:[%s847 + $0x128] sm:$0xf] %v996
                  %v998 = vld [vmem:[%s846 + $0x258] sm:$0xf]
                  %999 = vst [vmem:[%s847 + $0x12c] sm:$0xf] %v998
                  %v1000 = vld [vmem:[%s846 + $0x260] sm:$0xf]
                  %1001 = vst [vmem:[%s847 + $0x130] sm:$0xf] %v1000
                  %v1002 = vld [vmem:[%s846 + $0x268] sm:$0xf]
                  %1003 = vst [vmem:[%s847 + $0x134] sm:$0xf] %v1002
                  %v1004 = vld [vmem:[%s846 + $0x270] sm:$0xf]
                  %1005 = vst [vmem:[%s847 + $0x138] sm:$0xf] %v1004
                  %v1006 = vld [vmem:[%s846 + $0x278] sm:$0xf]
                  %1007 = vst [vmem:[%s847 + $0x13c] sm:$0xf] %v1006
                  %v1008 = vld [vmem:[%s846 + $0x280] sm:$0xf]
                  %1009 = vst [vmem:[%s847 + $0x140] sm:$0xf] %v1008
                  %v1010 = vld [vmem:[%s846 + $0x288] sm:$0xf]
                  %1011 = vst [vmem:[%s847 + $0x144] sm:$0xf] %v1010
                  %v1012 = vld [vmem:[%s846 + $0x290] sm:$0xf]
                  %1013 = vst [vmem:[%s847 + $0x148] sm:$0xf] %v1012
                  %v1014 = vld [vmem:[%s846 + $0x298] sm:$0xf]
                  %1015 = vst [vmem:[%s847 + $0x14c] sm:$0xf] %v1014
                  %v1016 = vld [vmem:[%s846 + $0x2a0] sm:$0xf]
                  %1017 = vst [vmem:[%s847 + $0x150] sm:$0xf] %v1016
                  %v1018 = vld [vmem:[%s846 + $0x2a8] sm:$0xf]
                  %1019 = vst [vmem:[%s847 + $0x154] sm:$0xf] %v1018
                  %v1020 = vld [vmem:[%s846 + $0x2b0] sm:$0xf]
                  %1021 = vst [vmem:[%s847 + $0x158] sm:$0xf] %v1020
                  %v1022 = vld [vmem:[%s846 + $0x2b8] sm:$0xf]
                  %1023 = vst [vmem:[%s847 + $0x15c] sm:$0xf] %v1022
                  %v1024 = vld [vmem:[%s846 + $0x2c0] sm:$0xf]
                  %1025 = vst [vmem:[%s847 + $0x160] sm:$0xf] %v1024
                  %v1026 = vld [vmem:[%s846 + $0x2c8] sm:$0xf]
                  %1027 = vst [vmem:[%s847 + $0x164] sm:$0xf] %v1026
                  %v1028 = vld [vmem:[%s846 + $0x2d0] sm:$0xf]
                  %1029 = vst [vmem:[%s847 + $0x168] sm:$0xf] %v1028
                  %v1030 = vld [vmem:[%s846 + $0x2d8] sm:$0xf]
                  %1031 = vst [vmem:[%s847 + $0x16c] sm:$0xf] %v1030
                  %v1032 = vld [vmem:[%s846 + $0x2e0] sm:$0xf]
                  %1033 = vst [vmem:[%s847 + $0x170] sm:$0xf] %v1032
                  %v1034 = vld [vmem:[%s846 + $0x2e8] sm:$0xf]
                  %1035 = vst [vmem:[%s847 + $0x174] sm:$0xf] %v1034
                  %v1036 = vld [vmem:[%s846 + $0x2f0] sm:$0xf]
                  %1037 = vst [vmem:[%s847 + $0x178] sm:$0xf] %v1036
                  %v1038 = vld [vmem:[%s846 + $0x2f8] sm:$0xf]
                  %1039 = vst [vmem:[%s847 + $0x17c] sm:$0xf] %v1038
                  %v1040 = vld [vmem:[%s846 + $0x300] sm:$0xf]
                  %1041 = vst [vmem:[%s847 + $0x180] sm:$0xf] %v1040
                  %v1042 = vld [vmem:[%s846 + $0x308] sm:$0xf]
                  %1043 = vst [vmem:[%s847 + $0x184] sm:$0xf] %v1042
                  %v1044 = vld [vmem:[%s846 + $0x310] sm:$0xf]
                  %1045 = vst [vmem:[%s847 + $0x188] sm:$0xf] %v1044
                  %v1046 = vld [vmem:[%s846 + $0x318] sm:$0xf]
                  %1047 = vst [vmem:[%s847 + $0x18c] sm:$0xf] %v1046
                  %v1048 = vld [vmem:[%s846 + $0x320] sm:$0xf]
                  %1049 = vst [vmem:[%s847 + $0x190] sm:$0xf] %v1048
                  %v1050 = vld [vmem:[%s846 + $0x328] sm:$0xf]
                  %1051 = vst [vmem:[%s847 + $0x194] sm:$0xf] %v1050
                  %v1052 = vld [vmem:[%s846 + $0x330] sm:$0xf]
                  %1053 = vst [vmem:[%s847 + $0x198] sm:$0xf] %v1052
                  %v1054 = vld [vmem:[%s846 + $0x338] sm:$0xf]
                  %1055 = vst [vmem:[%s847 + $0x19c] sm:$0xf] %v1054
                  %v1056 = vld [vmem:[%s846 + $0x340] sm:$0xf]
                  %1057 = vst [vmem:[%s847 + $0x1a0] sm:$0xf] %v1056
                  %v1058 = vld [vmem:[%s846 + $0x348] sm:$0xf]
                  %1059 = vst [vmem:[%s847 + $0x1a4] sm:$0xf] %v1058
                  %v1060 = vld [vmem:[%s846 + $0x350] sm:$0xf]
                  %1061 = vst [vmem:[%s847 + $0x1a8] sm:$0xf] %v1060
                  %v1062 = vld [vmem:[%s846 + $0x358] sm:$0xf]
                  %1063 = vst [vmem:[%s847 + $0x1ac] sm:$0xf] %v1062
                  %v1064 = vld [vmem:[%s846 + $0x360] sm:$0xf]
                  %1065 = vst [vmem:[%s847 + $0x1b0] sm:$0xf] %v1064
                  %v1066 = vld [vmem:[%s846 + $0x368] sm:$0xf]
                  %1067 = vst [vmem:[%s847 + $0x1b4] sm:$0xf] %v1066
                  %v1068 = vld [vmem:[%s846 + $0x370] sm:$0xf]
                  %1069 = vst [vmem:[%s847 + $0x1b8] sm:$0xf] %v1068
                  %v1070 = vld [vmem:[%s846 + $0x378] sm:$0xf]
                  %1071 = vst [vmem:[%s847 + $0x1bc] sm:$0xf] %v1070
                  %v1072 = vld [vmem:[%s846 + $0x380] sm:$0xf]
                  %1073 = vst [vmem:[%s847 + $0x1c0] sm:$0xf] %v1072
                  %v1074 = vld [vmem:[%s846 + $0x388] sm:$0xf]
                  %1075 = vst [vmem:[%s847 + $0x1c4] sm:$0xf] %v1074
                  %v1076 = vld [vmem:[%s846 + $0x390] sm:$0xf]
                  %1077 = vst [vmem:[%s847 + $0x1c8] sm:$0xf] %v1076
                  %v1078 = vld [vmem:[%s846 + $0x398] sm:$0xf]
                  %1079 = vst [vmem:[%s847 + $0x1cc] sm:$0xf] %v1078
                  %v1080 = vld [vmem:[%s846 + $0x3a0] sm:$0xf]
                  %1081 = vst [vmem:[%s847 + $0x1d0] sm:$0xf] %v1080
                  %v1082 = vld [vmem:[%s846 + $0x3a8] sm:$0xf]
                  %1083 = vst [vmem:[%s847 + $0x1d4] sm:$0xf] %v1082
                  %v1084 = vld [vmem:[%s846 + $0x3b0] sm:$0xf]
                  %1085 = vst [vmem:[%s847 + $0x1d8] sm:$0xf] %v1084
                  %v1086 = vld [vmem:[%s846 + $0x3b8] sm:$0xf]
                  %1087 = vst [vmem:[%s847 + $0x1dc] sm:$0xf] %v1086
                  %v1088 = vld [vmem:[%s846 + $0x3c0] sm:$0xf]
                  %1089 = vst [vmem:[%s847 + $0x1e0] sm:$0xf] %v1088
                  %v1090 = vld [vmem:[%s846 + $0x3c8] sm:$0xf]
                  %1091 = vst [vmem:[%s847 + $0x1e4] sm:$0xf] %v1090
                  %v1092 = vld [vmem:[%s846 + $0x3d0] sm:$0xf]
                  %1093 = vst [vmem:[%s847 + $0x1e8] sm:$0xf] %v1092
                  %v1094 = vld [vmem:[%s846 + $0x3d8] sm:$0xf]
                  %1095 = vst [vmem:[%s847 + $0x1ec] sm:$0xf] %v1094
                  %v1096 = vld [vmem:[%s846 + $0x3e0] sm:$0xf]
                  %1097 = vst [vmem:[%s847 + $0x1f0] sm:$0xf] %v1096
                  %v1098 = vld [vmem:[%s846 + $0x3e8] sm:$0xf]
                  %1099 = vst [vmem:[%s847 + $0x1f4] sm:$0xf] %v1098
                  %v1100 = vld [vmem:[%s846 + $0x3f0] sm:$0xf]
                  %1101 = vst [vmem:[%s847 + $0x1f8] sm:$0xf] %v1100
                  %v1102 = vld [vmem:[%s846 + $0x3f8] sm:$0xf]
                  %1103 = vst [vmem:[%s847 + $0x1fc] sm:$0xf] %v1102
                  %v1104 = vld [vmem:[%s846 + $0x400] sm:$0xf]
                  %1105 = vst [vmem:[%s847 + $0x200] sm:$0xf] %v1104
                  %v1106 = vld [vmem:[%s846 + $0x408] sm:$0xf]
                  %1107 = vst [vmem:[%s847 + $0x204] sm:$0xf] %v1106
                  %v1108 = vld [vmem:[%s846 + $0x410] sm:$0xf]
                  %1109 = vst [vmem:[%s847 + $0x208] sm:$0xf] %v1108
                  %v1110 = vld [vmem:[%s846 + $0x418] sm:$0xf]
                  %1111 = vst [vmem:[%s847 + $0x20c] sm:$0xf] %v1110
                  %v1112 = vld [vmem:[%s846 + $0x420] sm:$0xf]
                  %1113 = vst [vmem:[%s847 + $0x210] sm:$0xf] %v1112
                  %v1114 = vld [vmem:[%s846 + $0x428] sm:$0xf]
                  %1115 = vst [vmem:[%s847 + $0x214] sm:$0xf] %v1114
                  %v1116 = vld [vmem:[%s846 + $0x430] sm:$0xf]
                  %1117 = vst [vmem:[%s847 + $0x218] sm:$0xf] %v1116
                  %v1118 = vld [vmem:[%s846 + $0x438] sm:$0xf]
                  %1119 = vst [vmem:[%s847 + $0x21c] sm:$0xf] %v1118
                  %v1120 = vld [vmem:[%s846 + $0x440] sm:$0xf]
                  %1121 = vst [vmem:[%s847 + $0x220] sm:$0xf] %v1120
                  %v1122 = vld [vmem:[%s846 + $0x448] sm:$0xf]
                  %1123 = vst [vmem:[%s847 + $0x224] sm:$0xf] %v1122
                  %v1124 = vld [vmem:[%s846 + $0x450] sm:$0xf]
                  %1125 = vst [vmem:[%s847 + $0x228] sm:$0xf] %v1124
                  %v1126 = vld [vmem:[%s846 + $0x458] sm:$0xf]
                  %1127 = vst [vmem:[%s847 + $0x22c] sm:$0xf] %v1126
                  %v1128 = vld [vmem:[%s846 + $0x460] sm:$0xf]
                  %1129 = vst [vmem:[%s847 + $0x230] sm:$0xf] %v1128
                  %v1130 = vld [vmem:[%s846 + $0x468] sm:$0xf]
                  %1131 = vst [vmem:[%s847 + $0x234] sm:$0xf] %v1130
                  %v1132 = vld [vmem:[%s846 + $0x470] sm:$0xf]
                  %1133 = vst [vmem:[%s847 + $0x238] sm:$0xf] %v1132
                  %v1134 = vld [vmem:[%s846 + $0x478] sm:$0xf]
                  %1135 = vst [vmem:[%s847 + $0x23c] sm:$0xf] %v1134
                  %v1136 = vld [vmem:[%s846 + $0x480] sm:$0xf]
                  %1137 = vst [vmem:[%s847 + $0x240] sm:$0xf] %v1136
                  %v1138 = vld [vmem:[%s846 + $0x488] sm:$0xf]
                  %1139 = vst [vmem:[%s847 + $0x244] sm:$0xf] %v1138
                  %v1140 = vld [vmem:[%s846 + $0x490] sm:$0xf]
                  %1141 = vst [vmem:[%s847 + $0x248] sm:$0xf] %v1140
                  %v1142 = vld [vmem:[%s846 + $0x498] sm:$0xf]
                  %1143 = vst [vmem:[%s847 + $0x24c] sm:$0xf] %v1142
                  %v1144 = vld [vmem:[%s846 + $0x4a0] sm:$0xf]
                  %1145 = vst [vmem:[%s847 + $0x250] sm:$0xf] %v1144
                  %v1146 = vld [vmem:[%s846 + $0x4a8] sm:$0xf]
                  %1147 = vst [vmem:[%s847 + $0x254] sm:$0xf] %v1146
                  %v1148 = vld [vmem:[%s846 + $0x4b0] sm:$0xf]
                  %1149 = vst [vmem:[%s847 + $0x258] sm:$0xf] %v1148
                  %v1150 = vld [vmem:[%s846 + $0x4b8] sm:$0xf]
                  %1151 = vst [vmem:[%s847 + $0x25c] sm:$0xf] %v1150
                  %v1152 = vld [vmem:[%s846 + $0x4c0] sm:$0xf]
                  %1153 = vst [vmem:[%s847 + $0x260] sm:$0xf] %v1152
                  %v1154 = vld [vmem:[%s846 + $0x4c8] sm:$0xf]
                  %1155 = vst [vmem:[%s847 + $0x264] sm:$0xf] %v1154
                  %v1156 = vld [vmem:[%s846 + $0x4d0] sm:$0xf]
                  %1157 = vst [vmem:[%s847 + $0x268] sm:$0xf] %v1156
                  %v1158 = vld [vmem:[%s846 + $0x4d8] sm:$0xf]
                  %1159 = vst [vmem:[%s847 + $0x26c] sm:$0xf] %v1158
                  %v1160 = vld [vmem:[%s846 + $0x4e0] sm:$0xf]
                  %1161 = vst [vmem:[%s847 + $0x270] sm:$0xf] %v1160
                  %v1162 = vld [vmem:[%s846 + $0x4e8] sm:$0xf]
                  %1163 = vst [vmem:[%s847 + $0x274] sm:$0xf] %v1162
                  %v1164 = vld [vmem:[%s846 + $0x4f0] sm:$0xf]
                  %1165 = vst [vmem:[%s847 + $0x278] sm:$0xf] %v1164
                  %v1166 = vld [vmem:[%s846 + $0x4f8] sm:$0xf]
                  %1167 = vst [vmem:[%s847 + $0x27c] sm:$0xf] %v1166
                  %v1168 = vld [vmem:[%s846 + $0x500] sm:$0xf]
                  %1169 = vst [vmem:[%s847 + $0x280] sm:$0xf] %v1168
                  %v1170 = vld [vmem:[%s846 + $0x508] sm:$0xf]
                  %1171 = vst [vmem:[%s847 + $0x284] sm:$0xf] %v1170
                  %v1172 = vld [vmem:[%s846 + $0x510] sm:$0xf]
                  %1173 = vst [vmem:[%s847 + $0x288] sm:$0xf] %v1172
                  %v1174 = vld [vmem:[%s846 + $0x518] sm:$0xf]
                  %1175 = vst [vmem:[%s847 + $0x28c] sm:$0xf] %v1174
                  %v1176 = vld [vmem:[%s846 + $0x520] sm:$0xf]
                  %1177 = vst [vmem:[%s847 + $0x290] sm:$0xf] %v1176
                  %v1178 = vld [vmem:[%s846 + $0x528] sm:$0xf]
                  %1179 = vst [vmem:[%s847 + $0x294] sm:$0xf] %v1178
                  %v1180 = vld [vmem:[%s846 + $0x530] sm:$0xf]
                  %1181 = vst [vmem:[%s847 + $0x298] sm:$0xf] %v1180
                  %v1182 = vld [vmem:[%s846 + $0x538] sm:$0xf]
                  %1183 = vst [vmem:[%s847 + $0x29c] sm:$0xf] %v1182
                  %v1184 = vld [vmem:[%s846 + $0x540] sm:$0xf]
                  %1185 = vst [vmem:[%s847 + $0x2a0] sm:$0xf] %v1184
                  %v1186 = vld [vmem:[%s846 + $0x548] sm:$0xf]
                  %1187 = vst [vmem:[%s847 + $0x2a4] sm:$0xf] %v1186
                  %v1188 = vld [vmem:[%s846 + $0x550] sm:$0xf]
                  %1189 = vst [vmem:[%s847 + $0x2a8] sm:$0xf] %v1188
                  %v1190 = vld [vmem:[%s846 + $0x558] sm:$0xf]
                  %1191 = vst [vmem:[%s847 + $0x2ac] sm:$0xf] %v1190
                  %v1192 = vld [vmem:[%s846 + $0x560] sm:$0xf]
                  %1193 = vst [vmem:[%s847 + $0x2b0] sm:$0xf] %v1192
                  %v1194 = vld [vmem:[%s846 + $0x568] sm:$0xf]
                  %1195 = vst [vmem:[%s847 + $0x2b4] sm:$0xf] %v1194
                  %v1196 = vld [vmem:[%s846 + $0x570] sm:$0xf]
                  %1197 = vst [vmem:[%s847 + $0x2b8] sm:$0xf] %v1196
                  %v1198 = vld [vmem:[%s846 + $0x578] sm:$0xf]
                  %1199 = vst [vmem:[%s847 + $0x2bc] sm:$0xf] %v1198
                  %v1200 = vld [vmem:[%s846 + $0x580] sm:$0xf]
                  %1201 = vst [vmem:[%s847 + $0x2c0] sm:$0xf] %v1200
                  %v1202 = vld [vmem:[%s846 + $0x588] sm:$0xf]
                  %1203 = vst [vmem:[%s847 + $0x2c4] sm:$0xf] %v1202
                  %v1204 = vld [vmem:[%s846 + $0x590] sm:$0xf]
                  %1205 = vst [vmem:[%s847 + $0x2c8] sm:$0xf] %v1204
                  %v1206 = vld [vmem:[%s846 + $0x598] sm:$0xf]
                  %1207 = vst [vmem:[%s847 + $0x2cc] sm:$0xf] %v1206
                  %v1208 = vld [vmem:[%s846 + $0x5a0] sm:$0xf]
                  %1209 = vst [vmem:[%s847 + $0x2d0] sm:$0xf] %v1208
                  %v1210 = vld [vmem:[%s846 + $0x5a8] sm:$0xf]
                  %1211 = vst [vmem:[%s847 + $0x2d4] sm:$0xf] %v1210
                  %v1212 = vld [vmem:[%s846 + $0x5b0] sm:$0xf]
                  %1213 = vst [vmem:[%s847 + $0x2d8] sm:$0xf] %v1212
                  %v1214 = vld [vmem:[%s846 + $0x5b8] sm:$0xf]
                  %1215 = vst [vmem:[%s847 + $0x2dc] sm:$0xf] %v1214
                  %v1216 = vld [vmem:[%s846 + $0x5c0] sm:$0xf]
                  %1217 = vst [vmem:[%s847 + $0x2e0] sm:$0xf] %v1216
                  %v1218 = vld [vmem:[%s846 + $0x5c8] sm:$0xf]
                  %1219 = vst [vmem:[%s847 + $0x2e4] sm:$0xf] %v1218
                  %v1220 = vld [vmem:[%s846 + $0x5d0] sm:$0xf]
                  %1221 = vst [vmem:[%s847 + $0x2e8] sm:$0xf] %v1220
                  %v1222 = vld [vmem:[%s846 + $0x5d8] sm:$0xf]
                  %1223 = vst [vmem:[%s847 + $0x2ec] sm:$0xf] %v1222
                  %v1224 = vld [vmem:[%s846 + $0x5e0] sm:$0xf]
                  %1225 = vst [vmem:[%s847 + $0x2f0] sm:$0xf] %v1224
                  %v1226 = vld [vmem:[%s846 + $0x5e8] sm:$0xf]
                  %1227 = vst [vmem:[%s847 + $0x2f4] sm:$0xf] %v1226
                  %v1228 = vld [vmem:[%s846 + $0x5f0] sm:$0xf]
                  %1229 = vst [vmem:[%s847 + $0x2f8] sm:$0xf] %v1228
                  %v1230 = vld [vmem:[%s846 + $0x5f8] sm:$0xf]
                  %1231 = vst [vmem:[%s847 + $0x2fc] sm:$0xf] %v1230
                  %v1232 = vld [vmem:[%s846 + $0x600] sm:$0xf]
                  %1233 = vst [vmem:[%s847 + $0x300] sm:$0xf] %v1232
                  %v1234 = vld [vmem:[%s846 + $0x608] sm:$0xf]
                  %1235 = vst [vmem:[%s847 + $0x304] sm:$0xf] %v1234
                  %v1236 = vld [vmem:[%s846 + $0x610] sm:$0xf]
                  %1237 = vst [vmem:[%s847 + $0x308] sm:$0xf] %v1236
                  %v1238 = vld [vmem:[%s846 + $0x618] sm:$0xf]
                  %1239 = vst [vmem:[%s847 + $0x30c] sm:$0xf] %v1238
                  %v1240 = vld [vmem:[%s846 + $0x620] sm:$0xf]
                  %1241 = vst [vmem:[%s847 + $0x310] sm:$0xf] %v1240
                  %v1242 = vld [vmem:[%s846 + $0x628] sm:$0xf]
                  %1243 = vst [vmem:[%s847 + $0x314] sm:$0xf] %v1242
                  %v1244 = vld [vmem:[%s846 + $0x630] sm:$0xf]
                  %1245 = vst [vmem:[%s847 + $0x318] sm:$0xf] %v1244
                  %v1246 = vld [vmem:[%s846 + $0x638] sm:$0xf]
                  %1247 = vst [vmem:[%s847 + $0x31c] sm:$0xf] %v1246
                  %v1248 = vld [vmem:[%s846 + $0x640] sm:$0xf]
                  %1249 = vst [vmem:[%s847 + $0x320] sm:$0xf] %v1248
                  %v1250 = vld [vmem:[%s846 + $0x648] sm:$0xf]
                  %1251 = vst [vmem:[%s847 + $0x324] sm:$0xf] %v1250
                  %v1252 = vld [vmem:[%s846 + $0x650] sm:$0xf]
                  %1253 = vst [vmem:[%s847 + $0x328] sm:$0xf] %v1252
                  %v1254 = vld [vmem:[%s846 + $0x658] sm:$0xf]
                  %1255 = vst [vmem:[%s847 + $0x32c] sm:$0xf] %v1254
                  %v1256 = vld [vmem:[%s846 + $0x660] sm:$0xf]
                  %1257 = vst [vmem:[%s847 + $0x330] sm:$0xf] %v1256
                  %v1258 = vld [vmem:[%s846 + $0x668] sm:$0xf]
                  %1259 = vst [vmem:[%s847 + $0x334] sm:$0xf] %v1258
                  %v1260 = vld [vmem:[%s846 + $0x670] sm:$0xf]
                  %1261 = vst [vmem:[%s847 + $0x338] sm:$0xf] %v1260
                  %v1262 = vld [vmem:[%s846 + $0x678] sm:$0xf]
                  %1263 = vst [vmem:[%s847 + $0x33c] sm:$0xf] %v1262
                  %v1264 = vld [vmem:[%s846 + $0x680] sm:$0xf]
                  %1265 = vst [vmem:[%s847 + $0x340] sm:$0xf] %v1264
                  %v1266 = vld [vmem:[%s846 + $0x688] sm:$0xf]
                  %1267 = vst [vmem:[%s847 + $0x344] sm:$0xf] %v1266
                  %v1268 = vld [vmem:[%s846 + $0x690] sm:$0xf]
                  %1269 = vst [vmem:[%s847 + $0x348] sm:$0xf] %v1268
                  %v1270 = vld [vmem:[%s846 + $0x698] sm:$0xf]
                  %1271 = vst [vmem:[%s847 + $0x34c] sm:$0xf] %v1270
                  %v1272 = vld [vmem:[%s846 + $0x6a0] sm:$0xf]
                  %1273 = vst [vmem:[%s847 + $0x350] sm:$0xf] %v1272
                  %v1274 = vld [vmem:[%s846 + $0x6a8] sm:$0xf]
                  %1275 = vst [vmem:[%s847 + $0x354] sm:$0xf] %v1274
                  %v1276 = vld [vmem:[%s846 + $0x6b0] sm:$0xf]
                  %1277 = vst [vmem:[%s847 + $0x358] sm:$0xf] %v1276
                  %v1278 = vld [vmem:[%s846 + $0x6b8] sm:$0xf]
                  %1279 = vst [vmem:[%s847 + $0x35c] sm:$0xf] %v1278
                  %v1280 = vld [vmem:[%s846 + $0x6c0] sm:$0xf]
                  %1281 = vst [vmem:[%s847 + $0x360] sm:$0xf] %v1280
                  %v1282 = vld [vmem:[%s846 + $0x6c8] sm:$0xf]
                  %1283 = vst [vmem:[%s847 + $0x364] sm:$0xf] %v1282
                  %v1284 = vld [vmem:[%s846 + $0x6d0] sm:$0xf]
                  %1285 = vst [vmem:[%s847 + $0x368] sm:$0xf] %v1284
                  %v1286 = vld [vmem:[%s846 + $0x6d8] sm:$0xf]
                  %1287 = vst [vmem:[%s847 + $0x36c] sm:$0xf] %v1286
                  %v1288 = vld [vmem:[%s846 + $0x6e0] sm:$0xf]
                  %1289 = vst [vmem:[%s847 + $0x370] sm:$0xf] %v1288
                  %v1290 = vld [vmem:[%s846 + $0x6e8] sm:$0xf]
                  %1291 = vst [vmem:[%s847 + $0x374] sm:$0xf] %v1290
                  %v1292 = vld [vmem:[%s846 + $0x6f0] sm:$0xf]
                  %1293 = vst [vmem:[%s847 + $0x378] sm:$0xf] %v1292
                  %v1294 = vld [vmem:[%s846 + $0x6f8] sm:$0xf]
                  %1295 = vst [vmem:[%s847 + $0x37c] sm:$0xf] %v1294
                  %v1296 = vld [vmem:[%s846 + $0x700] sm:$0xf]
                  %1297 = vst [vmem:[%s847 + $0x380] sm:$0xf] %v1296
                  %v1298 = vld [vmem:[%s846 + $0x708] sm:$0xf]
                  %1299 = vst [vmem:[%s847 + $0x384] sm:$0xf] %v1298
                  %v1300 = vld [vmem:[%s846 + $0x710] sm:$0xf]
                  %1301 = vst [vmem:[%s847 + $0x388] sm:$0xf] %v1300
                  %v1302 = vld [vmem:[%s846 + $0x718] sm:$0xf]
                  %1303 = vst [vmem:[%s847 + $0x38c] sm:$0xf] %v1302
                  %v1304 = vld [vmem:[%s846 + $0x720] sm:$0xf]
                  %1305 = vst [vmem:[%s847 + $0x390] sm:$0xf] %v1304
                  %v1306 = vld [vmem:[%s846 + $0x728] sm:$0xf]
                  %1307 = vst [vmem:[%s847 + $0x394] sm:$0xf] %v1306
                  %v1308 = vld [vmem:[%s846 + $0x730] sm:$0xf]
                  %1309 = vst [vmem:[%s847 + $0x398] sm:$0xf] %v1308
                  %v1310 = vld [vmem:[%s846 + $0x738] sm:$0xf]
                  %1311 = vst [vmem:[%s847 + $0x39c] sm:$0xf] %v1310
                  %v1312 = vld [vmem:[%s846 + $0x740] sm:$0xf]
                  %1313 = vst [vmem:[%s847 + $0x3a0] sm:$0xf] %v1312
                  %v1314 = vld [vmem:[%s846 + $0x748] sm:$0xf]
                  %1315 = vst [vmem:[%s847 + $0x3a4] sm:$0xf] %v1314
                  %v1316 = vld [vmem:[%s846 + $0x750] sm:$0xf]
                  %1317 = vst [vmem:[%s847 + $0x3a8] sm:$0xf] %v1316
                  %v1318 = vld [vmem:[%s846 + $0x758] sm:$0xf]
                  %1319 = vst [vmem:[%s847 + $0x3ac] sm:$0xf] %v1318
                  %v1320 = vld [vmem:[%s846 + $0x760] sm:$0xf]
                  %1321 = vst [vmem:[%s847 + $0x3b0] sm:$0xf] %v1320
                  %v1322 = vld [vmem:[%s846 + $0x768] sm:$0xf]
                  %1323 = vst [vmem:[%s847 + $0x3b4] sm:$0xf] %v1322
                  %v1324 = vld [vmem:[%s846 + $0x770] sm:$0xf]
                  %1325 = vst [vmem:[%s847 + $0x3b8] sm:$0xf] %v1324
                  %v1326 = vld [vmem:[%s846 + $0x778] sm:$0xf]
                  %1327 = vst [vmem:[%s847 + $0x3bc] sm:$0xf] %v1326
                  %v1328 = vld [vmem:[%s846 + $0x780] sm:$0xf]
                  %1329 = vst [vmem:[%s847 + $0x3c0] sm:$0xf] %v1328
                  %v1330 = vld [vmem:[%s846 + $0x788] sm:$0xf]
                  %1331 = vst [vmem:[%s847 + $0x3c4] sm:$0xf] %v1330
                  %v1332 = vld [vmem:[%s846 + $0x790] sm:$0xf]
                  %1333 = vst [vmem:[%s847 + $0x3c8] sm:$0xf] %v1332
                  %v1334 = vld [vmem:[%s846 + $0x798] sm:$0xf]
                  %1335 = vst [vmem:[%s847 + $0x3cc] sm:$0xf] %v1334
                  %v1336 = vld [vmem:[%s846 + $0x7a0] sm:$0xf]
                  %1337 = vst [vmem:[%s847 + $0x3d0] sm:$0xf] %v1336
                  %v1338 = vld [vmem:[%s846 + $0x7a8] sm:$0xf]
                  %1339 = vst [vmem:[%s847 + $0x3d4] sm:$0xf] %v1338
                  %v1340 = vld [vmem:[%s846 + $0x7b0] sm:$0xf]
                  %1341 = vst [vmem:[%s847 + $0x3d8] sm:$0xf] %v1340
                  %v1342 = vld [vmem:[%s846 + $0x7b8] sm:$0xf]
                  %1343 = vst [vmem:[%s847 + $0x3dc] sm:$0xf] %v1342
                  %v1344 = vld [vmem:[%s846 + $0x7c0] sm:$0xf]
                  %1345 = vst [vmem:[%s847 + $0x3e0] sm:$0xf] %v1344
                  %v1346 = vld [vmem:[%s846 + $0x7c8] sm:$0xf]
                  %1347 = vst [vmem:[%s847 + $0x3e4] sm:$0xf] %v1346
                  %v1348 = vld [vmem:[%s846 + $0x7d0] sm:$0xf]
                  %1349 = vst [vmem:[%s847 + $0x3e8] sm:$0xf] %v1348
                  %v1350 = vld [vmem:[%s846 + $0x7d8] sm:$0xf]
                  %1351 = vst [vmem:[%s847 + $0x3ec] sm:$0xf] %v1350
                  %v1352 = vld [vmem:[%s846 + $0x7e0] sm:$0xf]
                  %1353 = vst [vmem:[%s847 + $0x3f0] sm:$0xf] %v1352
                  %v1354 = vld [vmem:[%s846 + $0x7e8] sm:$0xf]
                  %1355 = vst [vmem:[%s847 + $0x3f4] sm:$0xf] %v1354
                  %v1356 = vld [vmem:[%s846 + $0x7f0] sm:$0xf]
                  %1357 = vst [vmem:[%s847 + $0x3f8] sm:$0xf] %v1356
                  %v1358 = vld [vmem:[%s846 + $0x7f8] sm:$0xf]
                  %1359 = vst [vmem:[%s847 + $0x3fc] sm:$0xf] %v1358
                  %v1360 = vld [vmem:[%s846 + $0x800] sm:$0xf]
                  %1361 = vst [vmem:[%s847 + $0x400] sm:$0xf] %v1360
                  %v1362 = vld [vmem:[%s846 + $0x808] sm:$0xf]
                  %1363 = vst [vmem:[%s847 + $0x404] sm:$0xf] %v1362
                  %v1364 = vld [vmem:[%s846 + $0x810] sm:$0xf]
                  %1365 = vst [vmem:[%s847 + $0x408] sm:$0xf] %v1364
                  %v1366 = vld [vmem:[%s846 + $0x818] sm:$0xf]
                  %1367 = vst [vmem:[%s847 + $0x40c] sm:$0xf] %v1366
                  %v1368 = vld [vmem:[%s846 + $0x820] sm:$0xf]
                  %1369 = vst [vmem:[%s847 + $0x410] sm:$0xf] %v1368
                  %v1370 = vld [vmem:[%s846 + $0x828] sm:$0xf]
                  %1371 = vst [vmem:[%s847 + $0x414] sm:$0xf] %v1370
                  %v1372 = vld [vmem:[%s846 + $0x830] sm:$0xf]
                  %1373 = vst [vmem:[%s847 + $0x418] sm:$0xf] %v1372
                  %v1374 = vld [vmem:[%s846 + $0x838] sm:$0xf]
                  %1375 = vst [vmem:[%s847 + $0x41c] sm:$0xf] %v1374
                  %v1376 = vld [vmem:[%s846 + $0x840] sm:$0xf]
                  %1377 = vst [vmem:[%s847 + $0x420] sm:$0xf] %v1376
                  %v1378 = vld [vmem:[%s846 + $0x848] sm:$0xf]
                  %1379 = vst [vmem:[%s847 + $0x424] sm:$0xf] %v1378
                  %v1380 = vld [vmem:[%s846 + $0x850] sm:$0xf]
                  %1381 = vst [vmem:[%s847 + $0x428] sm:$0xf] %v1380
                  %v1382 = vld [vmem:[%s846 + $0x858] sm:$0xf]
                  %1383 = vst [vmem:[%s847 + $0x42c] sm:$0xf] %v1382
                  %v1384 = vld [vmem:[%s846 + $0x860] sm:$0xf]
                  %1385 = vst [vmem:[%s847 + $0x430] sm:$0xf] %v1384
                  %v1386 = vld [vmem:[%s846 + $0x868] sm:$0xf]
                  %1387 = vst [vmem:[%s847 + $0x434] sm:$0xf] %v1386
                  %v1388 = vld [vmem:[%s846 + $0x870] sm:$0xf]
                  %1389 = vst [vmem:[%s847 + $0x438] sm:$0xf] %v1388
                  %v1390 = vld [vmem:[%s846 + $0x878] sm:$0xf]
                  %1391 = vst [vmem:[%s847 + $0x43c] sm:$0xf] %v1390
                  %v1392 = vld [vmem:[%s846 + $0x880] sm:$0xf]
                  %1393 = vst [vmem:[%s847 + $0x440] sm:$0xf] %v1392
                  %v1394 = vld [vmem:[%s846 + $0x888] sm:$0xf]
                  %1395 = vst [vmem:[%s847 + $0x444] sm:$0xf] %v1394
                  %v1396 = vld [vmem:[%s846 + $0x890] sm:$0xf]
                  %1397 = vst [vmem:[%s847 + $0x448] sm:$0xf] %v1396
                  %v1398 = vld [vmem:[%s846 + $0x898] sm:$0xf]
                  %1399 = vst [vmem:[%s847 + $0x44c] sm:$0xf] %v1398
                  %v1400 = vld [vmem:[%s846 + $0x8a0] sm:$0xf]
                  %1401 = vst [vmem:[%s847 + $0x450] sm:$0xf] %v1400
                  %v1402 = vld [vmem:[%s846 + $0x8a8] sm:$0xf]
                  %1403 = vst [vmem:[%s847 + $0x454] sm:$0xf] %v1402
                  %v1404 = vld [vmem:[%s846 + $0x8b0] sm:$0xf]
                  %1405 = vst [vmem:[%s847 + $0x458] sm:$0xf] %v1404
                  %v1406 = vld [vmem:[%s846 + $0x8b8] sm:$0xf]
                  %1407 = vst [vmem:[%s847 + $0x45c] sm:$0xf] %v1406
                  %v1408 = vld [vmem:[%s846 + $0x8c0] sm:$0xf]
                  %1409 = vst [vmem:[%s847 + $0x460] sm:$0xf] %v1408
                  %v1410 = vld [vmem:[%s846 + $0x8c8] sm:$0xf]
                  %1411 = vst [vmem:[%s847 + $0x464] sm:$0xf] %v1410
                  %v1412 = vld [vmem:[%s846 + $0x8d0] sm:$0xf]
                  %1413 = vst [vmem:[%s847 + $0x468] sm:$0xf] %v1412
                  %v1414 = vld [vmem:[%s846 + $0x8d8] sm:$0xf]
                  %1415 = vst [vmem:[%s847 + $0x46c] sm:$0xf] %v1414
                  %v1416 = vld [vmem:[%s846 + $0x8e0] sm:$0xf]
                  %1417 = vst [vmem:[%s847 + $0x470] sm:$0xf] %v1416
                  %v1418 = vld [vmem:[%s846 + $0x8e8] sm:$0xf]
                  %1419 = vst [vmem:[%s847 + $0x474] sm:$0xf] %v1418
                  %v1420 = vld [vmem:[%s846 + $0x8f0] sm:$0xf]
                  %1421 = vst [vmem:[%s847 + $0x478] sm:$0xf] %v1420
                  %v1422 = vld [vmem:[%s846 + $0x8f8] sm:$0xf]
                  %1423 = vst [vmem:[%s847 + $0x47c] sm:$0xf] %v1422
                  %v1424 = vld [vmem:[%s846 + $0x900] sm:$0xf]
                  %1425 = vst [vmem:[%s847 + $0x480] sm:$0xf] %v1424
                  %v1426 = vld [vmem:[%s846 + $0x908] sm:$0xf]
                  %1427 = vst [vmem:[%s847 + $0x484] sm:$0xf] %v1426
                  %v1428 = vld [vmem:[%s846 + $0x910] sm:$0xf]
                  %1429 = vst [vmem:[%s847 + $0x488] sm:$0xf] %v1428
                  %v1430 = vld [vmem:[%s846 + $0x918] sm:$0xf]
                  %1431 = vst [vmem:[%s847 + $0x48c] sm:$0xf] %v1430
                  %v1432 = vld [vmem:[%s846 + $0x920] sm:$0xf]
                  %1433 = vst [vmem:[%s847 + $0x490] sm:$0xf] %v1432
                  %v1434 = vld [vmem:[%s846 + $0x928] sm:$0xf]
                  %1435 = vst [vmem:[%s847 + $0x494] sm:$0xf] %v1434
                  %v1436 = vld [vmem:[%s846 + $0x930] sm:$0xf]
                  %1437 = vst [vmem:[%s847 + $0x498] sm:$0xf] %v1436
                  %v1438 = vld [vmem:[%s846 + $0x938] sm:$0xf]
                  %1439 = vst [vmem:[%s847 + $0x49c] sm:$0xf] %v1438
                  %v1440 = vld [vmem:[%s846 + $0x940] sm:$0xf]
                  %1441 = vst [vmem:[%s847 + $0x4a0] sm:$0xf] %v1440
                  %v1442 = vld [vmem:[%s846 + $0x948] sm:$0xf]
                  %1443 = vst [vmem:[%s847 + $0x4a4] sm:$0xf] %v1442
                  %v1444 = vld [vmem:[%s846 + $0x950] sm:$0xf]
                  %1445 = vst [vmem:[%s847 + $0x4a8] sm:$0xf] %v1444
                  %v1446 = vld [vmem:[%s846 + $0x958] sm:$0xf]
                  %1447 = vst [vmem:[%s847 + $0x4ac] sm:$0xf] %v1446
                  %v1448 = vld [vmem:[%s846 + $0x960] sm:$0xf]
                  %1449 = vst [vmem:[%s847 + $0x4b0] sm:$0xf] %v1448
                  %v1450 = vld [vmem:[%s846 + $0x968] sm:$0xf]
                  %1451 = vst [vmem:[%s847 + $0x4b4] sm:$0xf] %v1450
                  %v1452 = vld [vmem:[%s846 + $0x970] sm:$0xf]
                  %1453 = vst [vmem:[%s847 + $0x4b8] sm:$0xf] %v1452
                  %v1454 = vld [vmem:[%s846 + $0x978] sm:$0xf]
                  %1455 = vst [vmem:[%s847 + $0x4bc] sm:$0xf] %v1454
                  %v1456 = vld [vmem:[%s846 + $0x980] sm:$0xf]
                  %1457 = vst [vmem:[%s847 + $0x4c0] sm:$0xf] %v1456
                  %v1458 = vld [vmem:[%s846 + $0x988] sm:$0xf]
                  %1459 = vst [vmem:[%s847 + $0x4c4] sm:$0xf] %v1458
                  %v1460 = vld [vmem:[%s846 + $0x990] sm:$0xf]
                  %1461 = vst [vmem:[%s847 + $0x4c8] sm:$0xf] %v1460
                  %v1462 = vld [vmem:[%s846 + $0x998] sm:$0xf]
                  %1463 = vst [vmem:[%s847 + $0x4cc] sm:$0xf] %v1462
                  %v1464 = vld [vmem:[%s846 + $0x9a0] sm:$0xf]
                  %1465 = vst [vmem:[%s847 + $0x4d0] sm:$0xf] %v1464
                  %v1466 = vld [vmem:[%s846 + $0x9a8] sm:$0xf]
                  %1467 = vst [vmem:[%s847 + $0x4d4] sm:$0xf] %v1466
                  %v1468 = vld [vmem:[%s846 + $0x9b0] sm:$0xf]
                  %1469 = vst [vmem:[%s847 + $0x4d8] sm:$0xf] %v1468
                  %v1470 = vld [vmem:[%s846 + $0x9b8] sm:$0xf]
                  %1471 = vst [vmem:[%s847 + $0x4dc] sm:$0xf] %v1470
                  %v1472 = vld [vmem:[%s846 + $0x9c0] sm:$0xf]
                  %1473 = vst [vmem:[%s847 + $0x4e0] sm:$0xf] %v1472
                  %v1474 = vld [vmem:[%s846 + $0x9c8] sm:$0xf]
                  %1475 = vst [vmem:[%s847 + $0x4e4] sm:$0xf] %v1474
                  %v1476 = vld [vmem:[%s846 + $0x9d0] sm:$0xf]
                  %1477 = vst [vmem:[%s847 + $0x4e8] sm:$0xf] %v1476
                  %v1478 = vld [vmem:[%s846 + $0x9d8] sm:$0xf]
                  %1479 = vst [vmem:[%s847 + $0x4ec] sm:$0xf] %v1478
                  %v1480 = vld [vmem:[%s846 + $0x9e0] sm:$0xf]
                  %1481 = vst [vmem:[%s847 + $0x4f0] sm:$0xf] %v1480
                  %v1482 = vld [vmem:[%s846 + $0x9e8] sm:$0xf]
                  %1483 = vst [vmem:[%s847 + $0x4f4] sm:$0xf] %v1482
                  %v1484 = vld [vmem:[%s846 + $0x9f0] sm:$0xf]
                  %1485 = vst [vmem:[%s847 + $0x4f8] sm:$0xf] %v1484
                  %v1486 = vld [vmem:[%s846 + $0x9f8] sm:$0xf]
                  %1487 = vst [vmem:[%s847 + $0x4fc] sm:$0xf] %v1486
                  %v1488 = vld [vmem:[%s846 + $0xa00] sm:$0xf]
                  %1489 = vst [vmem:[%s847 + $0x500] sm:$0xf] %v1488
                  %v1490 = vld [vmem:[%s846 + $0xa08] sm:$0xf]
                  %1491 = vst [vmem:[%s847 + $0x504] sm:$0xf] %v1490
                  %v1492 = vld [vmem:[%s846 + $0xa10] sm:$0xf]
                  %1493 = vst [vmem:[%s847 + $0x508] sm:$0xf] %v1492
                  %v1494 = vld [vmem:[%s846 + $0xa18] sm:$0xf]
                  %1495 = vst [vmem:[%s847 + $0x50c] sm:$0xf] %v1494
                $region59: #{dqn_forward.5} parent=46 // loop_footer
                  %s845 = sadd.s32 1, %s841
                $region60: #{dqn_forward.5} parent=46 // loop_footer_branch
                  %840 = sbr.rel target = $region56
                $region61: #{dqn_forward.5} parent=46 // loop_exit
                  _
              $region47: #{dqn_forward.5} parent=31 // pred_fallthru
                _
            $region32: #{dqn_forward.5} parent=27 // pred_fallthru
              _
            // Predicated region
            $region33: #{dqn_forward.5} parent=27 // pred_check
              _
            $region34: #{dqn_forward.5} parent=27 // pred_check_branch
              %171 = sbr.rel (0) target = $region36
            $region35: #{dqn_forward.5} parent=27 // pred_region
              loop: start=0, step=1, limit=1
              $region37: #{dqn_forward.5} parent=35 // loop_pre_header
                _
              $region38: #{dqn_forward.5} parent=35 // loop_header
                %s174 = sphi 0, %s178
                %p175 = scmp.ge.s32.totalorder %s174, 1
                %s179 = sphi %s165, %s165
                %s180 = sphi %s163, %s163
              $region39: #{dqn_forward.5} parent=35 // loop_header_branch
                %177 = sbr.rel (%p175) target = $region43
              $region40: #{dqn_forward.5} parent=35 // loop_body
                %v181 = vld [vmem:[%s179] sm:$0xf]
                %182 = vst [vmem:[%s180] sm:$0xf] %v181
                %v183 = vld [vmem:[%s179 + $0x8] sm:$0xf]
                %184 = vst [vmem:[%s180 + $0x4] sm:$0xf] %v183
                %v185 = vld [vmem:[%s179 + $0x10] sm:$0xf]
                %186 = vst [vmem:[%s180 + $0x8] sm:$0xf] %v185
                %v187 = vld [vmem:[%s179 + $0x18] sm:$0xf]
                %188 = vst [vmem:[%s180 + $0xc] sm:$0xf] %v187
                %v189 = vld [vmem:[%s179 + $0x20] sm:$0xf]
                %190 = vst [vmem:[%s180 + $0x10] sm:$0xf] %v189
                %v191 = vld [vmem:[%s179 + $0x28] sm:$0xf]
                %192 = vst [vmem:[%s180 + $0x14] sm:$0xf] %v191
                %v193 = vld [vmem:[%s179 + $0x30] sm:$0xf]
                %194 = vst [vmem:[%s180 + $0x18] sm:$0xf] %v193
                %v195 = vld [vmem:[%s179 + $0x38] sm:$0xf]
                %196 = vst [vmem:[%s180 + $0x1c] sm:$0xf] %v195
                %v197 = vld [vmem:[%s179 + $0x40] sm:$0xf]
                %198 = vst [vmem:[%s180 + $0x20] sm:$0xf] %v197
                %v199 = vld [vmem:[%s179 + $0x48] sm:$0xf]
                %200 = vst [vmem:[%s180 + $0x24] sm:$0xf] %v199
                %v201 = vld [vmem:[%s179 + $0x50] sm:$0xf]
                %202 = vst [vmem:[%s180 + $0x28] sm:$0xf] %v201
                %v203 = vld [vmem:[%s179 + $0x58] sm:$0xf]
                %204 = vst [vmem:[%s180 + $0x2c] sm:$0xf] %v203
                %v205 = vld [vmem:[%s179 + $0x60] sm:$0xf]
                %206 = vst [vmem:[%s180 + $0x30] sm:$0xf] %v205
                %v207 = vld [vmem:[%s179 + $0x68] sm:$0xf]
                %208 = vst [vmem:[%s180 + $0x34] sm:$0xf] %v207
                %v209 = vld [vmem:[%s179 + $0x70] sm:$0xf]
                %210 = vst [vmem:[%s180 + $0x38] sm:$0xf] %v209
                %v211 = vld [vmem:[%s179 + $0x78] sm:$0xf]
                %212 = vst [vmem:[%s180 + $0x3c] sm:$0xf] %v211
                %v213 = vld [vmem:[%s179 + $0x80] sm:$0xf]
                %214 = vst [vmem:[%s180 + $0x40] sm:$0xf] %v213
                %v215 = vld [vmem:[%s179 + $0x88] sm:$0xf]
                %216 = vst [vmem:[%s180 + $0x44] sm:$0xf] %v215
                %v217 = vld [vmem:[%s179 + $0x90] sm:$0xf]
                %218 = vst [vmem:[%s180 + $0x48] sm:$0xf] %v217
                %v219 = vld [vmem:[%s179 + $0x98] sm:$0xf]
                %220 = vst [vmem:[%s180 + $0x4c] sm:$0xf] %v219
                %v221 = vld [vmem:[%s179 + $0xa0] sm:$0xf]
                %222 = vst [vmem:[%s180 + $0x50] sm:$0xf] %v221
                %v223 = vld [vmem:[%s179 + $0xa8] sm:$0xf]
                %224 = vst [vmem:[%s180 + $0x54] sm:$0xf] %v223
                %v225 = vld [vmem:[%s179 + $0xb0] sm:$0xf]
                %226 = vst [vmem:[%s180 + $0x58] sm:$0xf] %v225
                %v227 = vld [vmem:[%s179 + $0xb8] sm:$0xf]
                %228 = vst [vmem:[%s180 + $0x5c] sm:$0xf] %v227
                %v229 = vld [vmem:[%s179 + $0xc0] sm:$0xf]
                %230 = vst [vmem:[%s180 + $0x60] sm:$0xf] %v229
                %v231 = vld [vmem:[%s179 + $0xc8] sm:$0xf]
                %232 = vst [vmem:[%s180 + $0x64] sm:$0xf] %v231
                %v233 = vld [vmem:[%s179 + $0xd0] sm:$0xf]
                %234 = vst [vmem:[%s180 + $0x68] sm:$0xf] %v233
                %v235 = vld [vmem:[%s179 + $0xd8] sm:$0xf]
                %236 = vst [vmem:[%s180 + $0x6c] sm:$0xf] %v235
                %v237 = vld [vmem:[%s179 + $0xe0] sm:$0xf]
                %238 = vst [vmem:[%s180 + $0x70] sm:$0xf] %v237
                %v239 = vld [vmem:[%s179 + $0xe8] sm:$0xf]
                %240 = vst [vmem:[%s180 + $0x74] sm:$0xf] %v239
                %v241 = vld [vmem:[%s179 + $0xf0] sm:$0xf]
                %242 = vst [vmem:[%s180 + $0x78] sm:$0xf] %v241
                %v243 = vld [vmem:[%s179 + $0xf8] sm:$0xf]
                %244 = vst [vmem:[%s180 + $0x7c] sm:$0xf] %v243
                %v245 = vld [vmem:[%s179 + $0x100] sm:$0xf]
                %246 = vst [vmem:[%s180 + $0x80] sm:$0xf] %v245
                %v247 = vld [vmem:[%s179 + $0x108] sm:$0xf]
                %248 = vst [vmem:[%s180 + $0x84] sm:$0xf] %v247
                %v249 = vld [vmem:[%s179 + $0x110] sm:$0xf]
                %250 = vst [vmem:[%s180 + $0x88] sm:$0xf] %v249
                %v251 = vld [vmem:[%s179 + $0x118] sm:$0xf]
                %252 = vst [vmem:[%s180 + $0x8c] sm:$0xf] %v251
                %v253 = vld [vmem:[%s179 + $0x120] sm:$0xf]
                %254 = vst [vmem:[%s180 + $0x90] sm:$0xf] %v253
                %v255 = vld [vmem:[%s179 + $0x128] sm:$0xf]
                %256 = vst [vmem:[%s180 + $0x94] sm:$0xf] %v255
                %v257 = vld [vmem:[%s179 + $0x130] sm:$0xf]
                %258 = vst [vmem:[%s180 + $0x98] sm:$0xf] %v257
                %v259 = vld [vmem:[%s179 + $0x138] sm:$0xf]
                %260 = vst [vmem:[%s180 + $0x9c] sm:$0xf] %v259
                %v261 = vld [vmem:[%s179 + $0x140] sm:$0xf]
                %262 = vst [vmem:[%s180 + $0xa0] sm:$0xf] %v261
                %v263 = vld [vmem:[%s179 + $0x148] sm:$0xf]
                %264 = vst [vmem:[%s180 + $0xa4] sm:$0xf] %v263
                %v265 = vld [vmem:[%s179 + $0x150] sm:$0xf]
                %266 = vst [vmem:[%s180 + $0xa8] sm:$0xf] %v265
                %v267 = vld [vmem:[%s179 + $0x158] sm:$0xf]
                %268 = vst [vmem:[%s180 + $0xac] sm:$0xf] %v267
                %v269 = vld [vmem:[%s179 + $0x160] sm:$0xf]
                %270 = vst [vmem:[%s180 + $0xb0] sm:$0xf] %v269
                %v271 = vld [vmem:[%s179 + $0x168] sm:$0xf]
                %272 = vst [vmem:[%s180 + $0xb4] sm:$0xf] %v271
                %v273 = vld [vmem:[%s179 + $0x170] sm:$0xf]
                %274 = vst [vmem:[%s180 + $0xb8] sm:$0xf] %v273
                %v275 = vld [vmem:[%s179 + $0x178] sm:$0xf]
                %276 = vst [vmem:[%s180 + $0xbc] sm:$0xf] %v275
                %v277 = vld [vmem:[%s179 + $0x180] sm:$0xf]
                %278 = vst [vmem:[%s180 + $0xc0] sm:$0xf] %v277
                %v279 = vld [vmem:[%s179 + $0x188] sm:$0xf]
                %280 = vst [vmem:[%s180 + $0xc4] sm:$0xf] %v279
                %v281 = vld [vmem:[%s179 + $0x190] sm:$0xf]
                %282 = vst [vmem:[%s180 + $0xc8] sm:$0xf] %v281
                %v283 = vld [vmem:[%s179 + $0x198] sm:$0xf]
                %284 = vst [vmem:[%s180 + $0xcc] sm:$0xf] %v283
                %v285 = vld [vmem:[%s179 + $0x1a0] sm:$0xf]
                %286 = vst [vmem:[%s180 + $0xd0] sm:$0xf] %v285
                %v287 = vld [vmem:[%s179 + $0x1a8] sm:$0xf]
                %288 = vst [vmem:[%s180 + $0xd4] sm:$0xf] %v287
                %v289 = vld [vmem:[%s179 + $0x1b0] sm:$0xf]
                %290 = vst [vmem:[%s180 + $0xd8] sm:$0xf] %v289
                %v291 = vld [vmem:[%s179 + $0x1b8] sm:$0xf]
                %292 = vst [vmem:[%s180 + $0xdc] sm:$0xf] %v291
                %v293 = vld [vmem:[%s179 + $0x1c0] sm:$0xf]
                %294 = vst [vmem:[%s180 + $0xe0] sm:$0xf] %v293
                %v295 = vld [vmem:[%s179 + $0x1c8] sm:$0xf]
                %296 = vst [vmem:[%s180 + $0xe4] sm:$0xf] %v295
                %v297 = vld [vmem:[%s179 + $0x1d0] sm:$0xf]
                %298 = vst [vmem:[%s180 + $0xe8] sm:$0xf] %v297
                %v299 = vld [vmem:[%s179 + $0x1d8] sm:$0xf]
                %300 = vst [vmem:[%s180 + $0xec] sm:$0xf] %v299
                %v301 = vld [vmem:[%s179 + $0x1e0] sm:$0xf]
                %302 = vst [vmem:[%s180 + $0xf0] sm:$0xf] %v301
                %v303 = vld [vmem:[%s179 + $0x1e8] sm:$0xf]
                %304 = vst [vmem:[%s180 + $0xf4] sm:$0xf] %v303
                %v305 = vld [vmem:[%s179 + $0x1f0] sm:$0xf]
                %306 = vst [vmem:[%s180 + $0xf8] sm:$0xf] %v305
                %v307 = vld [vmem:[%s179 + $0x1f8] sm:$0xf]
                %308 = vst [vmem:[%s180 + $0xfc] sm:$0xf] %v307
                %v309 = vld [vmem:[%s179 + $0x200] sm:$0xf]
                %310 = vst [vmem:[%s180 + $0x100] sm:$0xf] %v309
                %v311 = vld [vmem:[%s179 + $0x208] sm:$0xf]
                %312 = vst [vmem:[%s180 + $0x104] sm:$0xf] %v311
                %v313 = vld [vmem:[%s179 + $0x210] sm:$0xf]
                %314 = vst [vmem:[%s180 + $0x108] sm:$0xf] %v313
                %v315 = vld [vmem:[%s179 + $0x218] sm:$0xf]
                %316 = vst [vmem:[%s180 + $0x10c] sm:$0xf] %v315
                %v317 = vld [vmem:[%s179 + $0x220] sm:$0xf]
                %318 = vst [vmem:[%s180 + $0x110] sm:$0xf] %v317
                %v319 = vld [vmem:[%s179 + $0x228] sm:$0xf]
                %320 = vst [vmem:[%s180 + $0x114] sm:$0xf] %v319
                %v321 = vld [vmem:[%s179 + $0x230] sm:$0xf]
                %322 = vst [vmem:[%s180 + $0x118] sm:$0xf] %v321
                %v323 = vld [vmem:[%s179 + $0x238] sm:$0xf]
                %324 = vst [vmem:[%s180 + $0x11c] sm:$0xf] %v323
                %v325 = vld [vmem:[%s179 + $0x240] sm:$0xf]
                %326 = vst [vmem:[%s180 + $0x120] sm:$0xf] %v325
                %v327 = vld [vmem:[%s179 + $0x248] sm:$0xf]
                %328 = vst [vmem:[%s180 + $0x124] sm:$0xf] %v327
                %v329 = vld [vmem:[%s179 + $0x250] sm:$0xf]
                %330 = vst [vmem:[%s180 + $0x128] sm:$0xf] %v329
                %v331 = vld [vmem:[%s179 + $0x258] sm:$0xf]
                %332 = vst [vmem:[%s180 + $0x12c] sm:$0xf] %v331
                %v333 = vld [vmem:[%s179 + $0x260] sm:$0xf]
                %334 = vst [vmem:[%s180 + $0x130] sm:$0xf] %v333
                %v335 = vld [vmem:[%s179 + $0x268] sm:$0xf]
                %336 = vst [vmem:[%s180 + $0x134] sm:$0xf] %v335
                %v337 = vld [vmem:[%s179 + $0x270] sm:$0xf]
                %338 = vst [vmem:[%s180 + $0x138] sm:$0xf] %v337
                %v339 = vld [vmem:[%s179 + $0x278] sm:$0xf]
                %340 = vst [vmem:[%s180 + $0x13c] sm:$0xf] %v339
                %v341 = vld [vmem:[%s179 + $0x280] sm:$0xf]
                %342 = vst [vmem:[%s180 + $0x140] sm:$0xf] %v341
                %v343 = vld [vmem:[%s179 + $0x288] sm:$0xf]
                %344 = vst [vmem:[%s180 + $0x144] sm:$0xf] %v343
                %v345 = vld [vmem:[%s179 + $0x290] sm:$0xf]
                %346 = vst [vmem:[%s180 + $0x148] sm:$0xf] %v345
                %v347 = vld [vmem:[%s179 + $0x298] sm:$0xf]
                %348 = vst [vmem:[%s180 + $0x14c] sm:$0xf] %v347
                %v349 = vld [vmem:[%s179 + $0x2a0] sm:$0xf]
                %350 = vst [vmem:[%s180 + $0x150] sm:$0xf] %v349
                %v351 = vld [vmem:[%s179 + $0x2a8] sm:$0xf]
                %352 = vst [vmem:[%s180 + $0x154] sm:$0xf] %v351
                %v353 = vld [vmem:[%s179 + $0x2b0] sm:$0xf]
                %354 = vst [vmem:[%s180 + $0x158] sm:$0xf] %v353
                %v355 = vld [vmem:[%s179 + $0x2b8] sm:$0xf]
                %356 = vst [vmem:[%s180 + $0x15c] sm:$0xf] %v355
                %v357 = vld [vmem:[%s179 + $0x2c0] sm:$0xf]
                %358 = vst [vmem:[%s180 + $0x160] sm:$0xf] %v357
                %v359 = vld [vmem:[%s179 + $0x2c8] sm:$0xf]
                %360 = vst [vmem:[%s180 + $0x164] sm:$0xf] %v359
                %v361 = vld [vmem:[%s179 + $0x2d0] sm:$0xf]
                %362 = vst [vmem:[%s180 + $0x168] sm:$0xf] %v361
                %v363 = vld [vmem:[%s179 + $0x2d8] sm:$0xf]
                %364 = vst [vmem:[%s180 + $0x16c] sm:$0xf] %v363
                %v365 = vld [vmem:[%s179 + $0x2e0] sm:$0xf]
                %366 = vst [vmem:[%s180 + $0x170] sm:$0xf] %v365
                %v367 = vld [vmem:[%s179 + $0x2e8] sm:$0xf]
                %368 = vst [vmem:[%s180 + $0x174] sm:$0xf] %v367
                %v369 = vld [vmem:[%s179 + $0x2f0] sm:$0xf]
                %370 = vst [vmem:[%s180 + $0x178] sm:$0xf] %v369
                %v371 = vld [vmem:[%s179 + $0x2f8] sm:$0xf]
                %372 = vst [vmem:[%s180 + $0x17c] sm:$0xf] %v371
                %v373 = vld [vmem:[%s179 + $0x300] sm:$0xf]
                %374 = vst [vmem:[%s180 + $0x180] sm:$0xf] %v373
                %v375 = vld [vmem:[%s179 + $0x308] sm:$0xf]
                %376 = vst [vmem:[%s180 + $0x184] sm:$0xf] %v375
                %v377 = vld [vmem:[%s179 + $0x310] sm:$0xf]
                %378 = vst [vmem:[%s180 + $0x188] sm:$0xf] %v377
                %v379 = vld [vmem:[%s179 + $0x318] sm:$0xf]
                %380 = vst [vmem:[%s180 + $0x18c] sm:$0xf] %v379
                %v381 = vld [vmem:[%s179 + $0x320] sm:$0xf]
                %382 = vst [vmem:[%s180 + $0x190] sm:$0xf] %v381
                %v383 = vld [vmem:[%s179 + $0x328] sm:$0xf]
                %384 = vst [vmem:[%s180 + $0x194] sm:$0xf] %v383
                %v385 = vld [vmem:[%s179 + $0x330] sm:$0xf]
                %386 = vst [vmem:[%s180 + $0x198] sm:$0xf] %v385
                %v387 = vld [vmem:[%s179 + $0x338] sm:$0xf]
                %388 = vst [vmem:[%s180 + $0x19c] sm:$0xf] %v387
                %v389 = vld [vmem:[%s179 + $0x340] sm:$0xf]
                %390 = vst [vmem:[%s180 + $0x1a0] sm:$0xf] %v389
                %v391 = vld [vmem:[%s179 + $0x348] sm:$0xf]
                %392 = vst [vmem:[%s180 + $0x1a4] sm:$0xf] %v391
                %v393 = vld [vmem:[%s179 + $0x350] sm:$0xf]
                %394 = vst [vmem:[%s180 + $0x1a8] sm:$0xf] %v393
                %v395 = vld [vmem:[%s179 + $0x358] sm:$0xf]
                %396 = vst [vmem:[%s180 + $0x1ac] sm:$0xf] %v395
                %v397 = vld [vmem:[%s179 + $0x360] sm:$0xf]
                %398 = vst [vmem:[%s180 + $0x1b0] sm:$0xf] %v397
                %v399 = vld [vmem:[%s179 + $0x368] sm:$0xf]
                %400 = vst [vmem:[%s180 + $0x1b4] sm:$0xf] %v399
                %v401 = vld [vmem:[%s179 + $0x370] sm:$0xf]
                %402 = vst [vmem:[%s180 + $0x1b8] sm:$0xf] %v401
                %v403 = vld [vmem:[%s179 + $0x378] sm:$0xf]
                %404 = vst [vmem:[%s180 + $0x1bc] sm:$0xf] %v403
                %v405 = vld [vmem:[%s179 + $0x380] sm:$0xf]
                %406 = vst [vmem:[%s180 + $0x1c0] sm:$0xf] %v405
                %v407 = vld [vmem:[%s179 + $0x388] sm:$0xf]
                %408 = vst [vmem:[%s180 + $0x1c4] sm:$0xf] %v407
                %v409 = vld [vmem:[%s179 + $0x390] sm:$0xf]
                %410 = vst [vmem:[%s180 + $0x1c8] sm:$0xf] %v409
                %v411 = vld [vmem:[%s179 + $0x398] sm:$0xf]
                %412 = vst [vmem:[%s180 + $0x1cc] sm:$0xf] %v411
                %v413 = vld [vmem:[%s179 + $0x3a0] sm:$0xf]
                %414 = vst [vmem:[%s180 + $0x1d0] sm:$0xf] %v413
                %v415 = vld [vmem:[%s179 + $0x3a8] sm:$0xf]
                %416 = vst [vmem:[%s180 + $0x1d4] sm:$0xf] %v415
                %v417 = vld [vmem:[%s179 + $0x3b0] sm:$0xf]
                %418 = vst [vmem:[%s180 + $0x1d8] sm:$0xf] %v417
                %v419 = vld [vmem:[%s179 + $0x3b8] sm:$0xf]
                %420 = vst [vmem:[%s180 + $0x1dc] sm:$0xf] %v419
                %v421 = vld [vmem:[%s179 + $0x3c0] sm:$0xf]
                %422 = vst [vmem:[%s180 + $0x1e0] sm:$0xf] %v421
                %v423 = vld [vmem:[%s179 + $0x3c8] sm:$0xf]
                %424 = vst [vmem:[%s180 + $0x1e4] sm:$0xf] %v423
                %v425 = vld [vmem:[%s179 + $0x3d0] sm:$0xf]
                %426 = vst [vmem:[%s180 + $0x1e8] sm:$0xf] %v425
                %v427 = vld [vmem:[%s179 + $0x3d8] sm:$0xf]
                %428 = vst [vmem:[%s180 + $0x1ec] sm:$0xf] %v427
                %v429 = vld [vmem:[%s179 + $0x3e0] sm:$0xf]
                %430 = vst [vmem:[%s180 + $0x1f0] sm:$0xf] %v429
                %v431 = vld [vmem:[%s179 + $0x3e8] sm:$0xf]
                %432 = vst [vmem:[%s180 + $0x1f4] sm:$0xf] %v431
                %v433 = vld [vmem:[%s179 + $0x3f0] sm:$0xf]
                %434 = vst [vmem:[%s180 + $0x1f8] sm:$0xf] %v433
                %v435 = vld [vmem:[%s179 + $0x3f8] sm:$0xf]
                %436 = vst [vmem:[%s180 + $0x1fc] sm:$0xf] %v435
                %v437 = vld [vmem:[%s179 + $0x400] sm:$0xf]
                %438 = vst [vmem:[%s180 + $0x200] sm:$0xf] %v437
                %v439 = vld [vmem:[%s179 + $0x408] sm:$0xf]
                %440 = vst [vmem:[%s180 + $0x204] sm:$0xf] %v439
                %v441 = vld [vmem:[%s179 + $0x410] sm:$0xf]
                %442 = vst [vmem:[%s180 + $0x208] sm:$0xf] %v441
                %v443 = vld [vmem:[%s179 + $0x418] sm:$0xf]
                %444 = vst [vmem:[%s180 + $0x20c] sm:$0xf] %v443
                %v445 = vld [vmem:[%s179 + $0x420] sm:$0xf]
                %446 = vst [vmem:[%s180 + $0x210] sm:$0xf] %v445
                %v447 = vld [vmem:[%s179 + $0x428] sm:$0xf]
                %448 = vst [vmem:[%s180 + $0x214] sm:$0xf] %v447
                %v449 = vld [vmem:[%s179 + $0x430] sm:$0xf]
                %450 = vst [vmem:[%s180 + $0x218] sm:$0xf] %v449
                %v451 = vld [vmem:[%s179 + $0x438] sm:$0xf]
                %452 = vst [vmem:[%s180 + $0x21c] sm:$0xf] %v451
                %v453 = vld [vmem:[%s179 + $0x440] sm:$0xf]
                %454 = vst [vmem:[%s180 + $0x220] sm:$0xf] %v453
                %v455 = vld [vmem:[%s179 + $0x448] sm:$0xf]
                %456 = vst [vmem:[%s180 + $0x224] sm:$0xf] %v455
                %v457 = vld [vmem:[%s179 + $0x450] sm:$0xf]
                %458 = vst [vmem:[%s180 + $0x228] sm:$0xf] %v457
                %v459 = vld [vmem:[%s179 + $0x458] sm:$0xf]
                %460 = vst [vmem:[%s180 + $0x22c] sm:$0xf] %v459
                %v461 = vld [vmem:[%s179 + $0x460] sm:$0xf]
                %462 = vst [vmem:[%s180 + $0x230] sm:$0xf] %v461
                %v463 = vld [vmem:[%s179 + $0x468] sm:$0xf]
                %464 = vst [vmem:[%s180 + $0x234] sm:$0xf] %v463
                %v465 = vld [vmem:[%s179 + $0x470] sm:$0xf]
                %466 = vst [vmem:[%s180 + $0x238] sm:$0xf] %v465
                %v467 = vld [vmem:[%s179 + $0x478] sm:$0xf]
                %468 = vst [vmem:[%s180 + $0x23c] sm:$0xf] %v467
                %v469 = vld [vmem:[%s179 + $0x480] sm:$0xf]
                %470 = vst [vmem:[%s180 + $0x240] sm:$0xf] %v469
                %v471 = vld [vmem:[%s179 + $0x488] sm:$0xf]
                %472 = vst [vmem:[%s180 + $0x244] sm:$0xf] %v471
                %v473 = vld [vmem:[%s179 + $0x490] sm:$0xf]
                %474 = vst [vmem:[%s180 + $0x248] sm:$0xf] %v473
                %v475 = vld [vmem:[%s179 + $0x498] sm:$0xf]
                %476 = vst [vmem:[%s180 + $0x24c] sm:$0xf] %v475
                %v477 = vld [vmem:[%s179 + $0x4a0] sm:$0xf]
                %478 = vst [vmem:[%s180 + $0x250] sm:$0xf] %v477
                %v479 = vld [vmem:[%s179 + $0x4a8] sm:$0xf]
                %480 = vst [vmem:[%s180 + $0x254] sm:$0xf] %v479
                %v481 = vld [vmem:[%s179 + $0x4b0] sm:$0xf]
                %482 = vst [vmem:[%s180 + $0x258] sm:$0xf] %v481
                %v483 = vld [vmem:[%s179 + $0x4b8] sm:$0xf]
                %484 = vst [vmem:[%s180 + $0x25c] sm:$0xf] %v483
                %v485 = vld [vmem:[%s179 + $0x4c0] sm:$0xf]
                %486 = vst [vmem:[%s180 + $0x260] sm:$0xf] %v485
                %v487 = vld [vmem:[%s179 + $0x4c8] sm:$0xf]
                %488 = vst [vmem:[%s180 + $0x264] sm:$0xf] %v487
                %v489 = vld [vmem:[%s179 + $0x4d0] sm:$0xf]
                %490 = vst [vmem:[%s180 + $0x268] sm:$0xf] %v489
                %v491 = vld [vmem:[%s179 + $0x4d8] sm:$0xf]
                %492 = vst [vmem:[%s180 + $0x26c] sm:$0xf] %v491
                %v493 = vld [vmem:[%s179 + $0x4e0] sm:$0xf]
                %494 = vst [vmem:[%s180 + $0x270] sm:$0xf] %v493
                %v495 = vld [vmem:[%s179 + $0x4e8] sm:$0xf]
                %496 = vst [vmem:[%s180 + $0x274] sm:$0xf] %v495
                %v497 = vld [vmem:[%s179 + $0x4f0] sm:$0xf]
                %498 = vst [vmem:[%s180 + $0x278] sm:$0xf] %v497
                %v499 = vld [vmem:[%s179 + $0x4f8] sm:$0xf]
                %500 = vst [vmem:[%s180 + $0x27c] sm:$0xf] %v499
                %v501 = vld [vmem:[%s179 + $0x500] sm:$0xf]
                %502 = vst [vmem:[%s180 + $0x280] sm:$0xf] %v501
                %v503 = vld [vmem:[%s179 + $0x508] sm:$0xf]
                %504 = vst [vmem:[%s180 + $0x284] sm:$0xf] %v503
                %v505 = vld [vmem:[%s179 + $0x510] sm:$0xf]
                %506 = vst [vmem:[%s180 + $0x288] sm:$0xf] %v505
                %v507 = vld [vmem:[%s179 + $0x518] sm:$0xf]
                %508 = vst [vmem:[%s180 + $0x28c] sm:$0xf] %v507
                %v509 = vld [vmem:[%s179 + $0x520] sm:$0xf]
                %510 = vst [vmem:[%s180 + $0x290] sm:$0xf] %v509
                %v511 = vld [vmem:[%s179 + $0x528] sm:$0xf]
                %512 = vst [vmem:[%s180 + $0x294] sm:$0xf] %v511
                %v513 = vld [vmem:[%s179 + $0x530] sm:$0xf]
                %514 = vst [vmem:[%s180 + $0x298] sm:$0xf] %v513
                %v515 = vld [vmem:[%s179 + $0x538] sm:$0xf]
                %516 = vst [vmem:[%s180 + $0x29c] sm:$0xf] %v515
                %v517 = vld [vmem:[%s179 + $0x540] sm:$0xf]
                %518 = vst [vmem:[%s180 + $0x2a0] sm:$0xf] %v517
                %v519 = vld [vmem:[%s179 + $0x548] sm:$0xf]
                %520 = vst [vmem:[%s180 + $0x2a4] sm:$0xf] %v519
                %v521 = vld [vmem:[%s179 + $0x550] sm:$0xf]
                %522 = vst [vmem:[%s180 + $0x2a8] sm:$0xf] %v521
                %v523 = vld [vmem:[%s179 + $0x558] sm:$0xf]
                %524 = vst [vmem:[%s180 + $0x2ac] sm:$0xf] %v523
                %v525 = vld [vmem:[%s179 + $0x560] sm:$0xf]
                %526 = vst [vmem:[%s180 + $0x2b0] sm:$0xf] %v525
                %v527 = vld [vmem:[%s179 + $0x568] sm:$0xf]
                %528 = vst [vmem:[%s180 + $0x2b4] sm:$0xf] %v527
                %v529 = vld [vmem:[%s179 + $0x570] sm:$0xf]
                %530 = vst [vmem:[%s180 + $0x2b8] sm:$0xf] %v529
                %v531 = vld [vmem:[%s179 + $0x578] sm:$0xf]
                %532 = vst [vmem:[%s180 + $0x2bc] sm:$0xf] %v531
                %v533 = vld [vmem:[%s179 + $0x580] sm:$0xf]
                %534 = vst [vmem:[%s180 + $0x2c0] sm:$0xf] %v533
                %v535 = vld [vmem:[%s179 + $0x588] sm:$0xf]
                %536 = vst [vmem:[%s180 + $0x2c4] sm:$0xf] %v535
                %v537 = vld [vmem:[%s179 + $0x590] sm:$0xf]
                %538 = vst [vmem:[%s180 + $0x2c8] sm:$0xf] %v537
                %v539 = vld [vmem:[%s179 + $0x598] sm:$0xf]
                %540 = vst [vmem:[%s180 + $0x2cc] sm:$0xf] %v539
                %v541 = vld [vmem:[%s179 + $0x5a0] sm:$0xf]
                %542 = vst [vmem:[%s180 + $0x2d0] sm:$0xf] %v541
                %v543 = vld [vmem:[%s179 + $0x5a8] sm:$0xf]
                %544 = vst [vmem:[%s180 + $0x2d4] sm:$0xf] %v543
                %v545 = vld [vmem:[%s179 + $0x5b0] sm:$0xf]
                %546 = vst [vmem:[%s180 + $0x2d8] sm:$0xf] %v545
                %v547 = vld [vmem:[%s179 + $0x5b8] sm:$0xf]
                %548 = vst [vmem:[%s180 + $0x2dc] sm:$0xf] %v547
                %v549 = vld [vmem:[%s179 + $0x5c0] sm:$0xf]
                %550 = vst [vmem:[%s180 + $0x2e0] sm:$0xf] %v549
                %v551 = vld [vmem:[%s179 + $0x5c8] sm:$0xf]
                %552 = vst [vmem:[%s180 + $0x2e4] sm:$0xf] %v551
                %v553 = vld [vmem:[%s179 + $0x5d0] sm:$0xf]
                %554 = vst [vmem:[%s180 + $0x2e8] sm:$0xf] %v553
                %v555 = vld [vmem:[%s179 + $0x5d8] sm:$0xf]
                %556 = vst [vmem:[%s180 + $0x2ec] sm:$0xf] %v555
                %v557 = vld [vmem:[%s179 + $0x5e0] sm:$0xf]
                %558 = vst [vmem:[%s180 + $0x2f0] sm:$0xf] %v557
                %v559 = vld [vmem:[%s179 + $0x5e8] sm:$0xf]
                %560 = vst [vmem:[%s180 + $0x2f4] sm:$0xf] %v559
                %v561 = vld [vmem:[%s179 + $0x5f0] sm:$0xf]
                %562 = vst [vmem:[%s180 + $0x2f8] sm:$0xf] %v561
                %v563 = vld [vmem:[%s179 + $0x5f8] sm:$0xf]
                %564 = vst [vmem:[%s180 + $0x2fc] sm:$0xf] %v563
                %v565 = vld [vmem:[%s179 + $0x600] sm:$0xf]
                %566 = vst [vmem:[%s180 + $0x300] sm:$0xf] %v565
                %v567 = vld [vmem:[%s179 + $0x608] sm:$0xf]
                %568 = vst [vmem:[%s180 + $0x304] sm:$0xf] %v567
                %v569 = vld [vmem:[%s179 + $0x610] sm:$0xf]
                %570 = vst [vmem:[%s180 + $0x308] sm:$0xf] %v569
                %v571 = vld [vmem:[%s179 + $0x618] sm:$0xf]
                %572 = vst [vmem:[%s180 + $0x30c] sm:$0xf] %v571
                %v573 = vld [vmem:[%s179 + $0x620] sm:$0xf]
                %574 = vst [vmem:[%s180 + $0x310] sm:$0xf] %v573
                %v575 = vld [vmem:[%s179 + $0x628] sm:$0xf]
                %576 = vst [vmem:[%s180 + $0x314] sm:$0xf] %v575
                %v577 = vld [vmem:[%s179 + $0x630] sm:$0xf]
                %578 = vst [vmem:[%s180 + $0x318] sm:$0xf] %v577
                %v579 = vld [vmem:[%s179 + $0x638] sm:$0xf]
                %580 = vst [vmem:[%s180 + $0x31c] sm:$0xf] %v579
                %v581 = vld [vmem:[%s179 + $0x640] sm:$0xf]
                %582 = vst [vmem:[%s180 + $0x320] sm:$0xf] %v581
                %v583 = vld [vmem:[%s179 + $0x648] sm:$0xf]
                %584 = vst [vmem:[%s180 + $0x324] sm:$0xf] %v583
                %v585 = vld [vmem:[%s179 + $0x650] sm:$0xf]
                %586 = vst [vmem:[%s180 + $0x328] sm:$0xf] %v585
                %v587 = vld [vmem:[%s179 + $0x658] sm:$0xf]
                %588 = vst [vmem:[%s180 + $0x32c] sm:$0xf] %v587
                %v589 = vld [vmem:[%s179 + $0x660] sm:$0xf]
                %590 = vst [vmem:[%s180 + $0x330] sm:$0xf] %v589
                %v591 = vld [vmem:[%s179 + $0x668] sm:$0xf]
                %592 = vst [vmem:[%s180 + $0x334] sm:$0xf] %v591
                %v593 = vld [vmem:[%s179 + $0x670] sm:$0xf]
                %594 = vst [vmem:[%s180 + $0x338] sm:$0xf] %v593
                %v595 = vld [vmem:[%s179 + $0x678] sm:$0xf]
                %596 = vst [vmem:[%s180 + $0x33c] sm:$0xf] %v595
                %v597 = vld [vmem:[%s179 + $0x680] sm:$0xf]
                %598 = vst [vmem:[%s180 + $0x340] sm:$0xf] %v597
                %v599 = vld [vmem:[%s179 + $0x688] sm:$0xf]
                %600 = vst [vmem:[%s180 + $0x344] sm:$0xf] %v599
                %v601 = vld [vmem:[%s179 + $0x690] sm:$0xf]
                %602 = vst [vmem:[%s180 + $0x348] sm:$0xf] %v601
                %v603 = vld [vmem:[%s179 + $0x698] sm:$0xf]
                %604 = vst [vmem:[%s180 + $0x34c] sm:$0xf] %v603
                %v605 = vld [vmem:[%s179 + $0x6a0] sm:$0xf]
                %606 = vst [vmem:[%s180 + $0x350] sm:$0xf] %v605
                %v607 = vld [vmem:[%s179 + $0x6a8] sm:$0xf]
                %608 = vst [vmem:[%s180 + $0x354] sm:$0xf] %v607
                %v609 = vld [vmem:[%s179 + $0x6b0] sm:$0xf]
                %610 = vst [vmem:[%s180 + $0x358] sm:$0xf] %v609
                %v611 = vld [vmem:[%s179 + $0x6b8] sm:$0xf]
                %612 = vst [vmem:[%s180 + $0x35c] sm:$0xf] %v611
                %v613 = vld [vmem:[%s179 + $0x6c0] sm:$0xf]
                %614 = vst [vmem:[%s180 + $0x360] sm:$0xf] %v613
                %v615 = vld [vmem:[%s179 + $0x6c8] sm:$0xf]
                %616 = vst [vmem:[%s180 + $0x364] sm:$0xf] %v615
                %v617 = vld [vmem:[%s179 + $0x6d0] sm:$0xf]
                %618 = vst [vmem:[%s180 + $0x368] sm:$0xf] %v617
                %v619 = vld [vmem:[%s179 + $0x6d8] sm:$0xf]
                %620 = vst [vmem:[%s180 + $0x36c] sm:$0xf] %v619
                %v621 = vld [vmem:[%s179 + $0x6e0] sm:$0xf]
                %622 = vst [vmem:[%s180 + $0x370] sm:$0xf] %v621
                %v623 = vld [vmem:[%s179 + $0x6e8] sm:$0xf]
                %624 = vst [vmem:[%s180 + $0x374] sm:$0xf] %v623
                %v625 = vld [vmem:[%s179 + $0x6f0] sm:$0xf]
                %626 = vst [vmem:[%s180 + $0x378] sm:$0xf] %v625
                %v627 = vld [vmem:[%s179 + $0x6f8] sm:$0xf]
                %628 = vst [vmem:[%s180 + $0x37c] sm:$0xf] %v627
                %v629 = vld [vmem:[%s179 + $0x700] sm:$0xf]
                %630 = vst [vmem:[%s180 + $0x380] sm:$0xf] %v629
                %v631 = vld [vmem:[%s179 + $0x708] sm:$0xf]
                %632 = vst [vmem:[%s180 + $0x384] sm:$0xf] %v631
                %v633 = vld [vmem:[%s179 + $0x710] sm:$0xf]
                %634 = vst [vmem:[%s180 + $0x388] sm:$0xf] %v633
                %v635 = vld [vmem:[%s179 + $0x718] sm:$0xf]
                %636 = vst [vmem:[%s180 + $0x38c] sm:$0xf] %v635
                %v637 = vld [vmem:[%s179 + $0x720] sm:$0xf]
                %638 = vst [vmem:[%s180 + $0x390] sm:$0xf] %v637
                %v639 = vld [vmem:[%s179 + $0x728] sm:$0xf]
                %640 = vst [vmem:[%s180 + $0x394] sm:$0xf] %v639
                %v641 = vld [vmem:[%s179 + $0x730] sm:$0xf]
                %642 = vst [vmem:[%s180 + $0x398] sm:$0xf] %v641
                %v643 = vld [vmem:[%s179 + $0x738] sm:$0xf]
                %644 = vst [vmem:[%s180 + $0x39c] sm:$0xf] %v643
                %v645 = vld [vmem:[%s179 + $0x740] sm:$0xf]
                %646 = vst [vmem:[%s180 + $0x3a0] sm:$0xf] %v645
                %v647 = vld [vmem:[%s179 + $0x748] sm:$0xf]
                %648 = vst [vmem:[%s180 + $0x3a4] sm:$0xf] %v647
                %v649 = vld [vmem:[%s179 + $0x750] sm:$0xf]
                %650 = vst [vmem:[%s180 + $0x3a8] sm:$0xf] %v649
                %v651 = vld [vmem:[%s179 + $0x758] sm:$0xf]
                %652 = vst [vmem:[%s180 + $0x3ac] sm:$0xf] %v651
                %v653 = vld [vmem:[%s179 + $0x760] sm:$0xf]
                %654 = vst [vmem:[%s180 + $0x3b0] sm:$0xf] %v653
                %v655 = vld [vmem:[%s179 + $0x768] sm:$0xf]
                %656 = vst [vmem:[%s180 + $0x3b4] sm:$0xf] %v655
                %v657 = vld [vmem:[%s179 + $0x770] sm:$0xf]
                %658 = vst [vmem:[%s180 + $0x3b8] sm:$0xf] %v657
                %v659 = vld [vmem:[%s179 + $0x778] sm:$0xf]
                %660 = vst [vmem:[%s180 + $0x3bc] sm:$0xf] %v659
                %v661 = vld [vmem:[%s179 + $0x780] sm:$0xf]
                %662 = vst [vmem:[%s180 + $0x3c0] sm:$0xf] %v661
                %v663 = vld [vmem:[%s179 + $0x788] sm:$0xf]
                %664 = vst [vmem:[%s180 + $0x3c4] sm:$0xf] %v663
                %v665 = vld [vmem:[%s179 + $0x790] sm:$0xf]
                %666 = vst [vmem:[%s180 + $0x3c8] sm:$0xf] %v665
                %v667 = vld [vmem:[%s179 + $0x798] sm:$0xf]
                %668 = vst [vmem:[%s180 + $0x3cc] sm:$0xf] %v667
                %v669 = vld [vmem:[%s179 + $0x7a0] sm:$0xf]
                %670 = vst [vmem:[%s180 + $0x3d0] sm:$0xf] %v669
                %v671 = vld [vmem:[%s179 + $0x7a8] sm:$0xf]
                %672 = vst [vmem:[%s180 + $0x3d4] sm:$0xf] %v671
                %v673 = vld [vmem:[%s179 + $0x7b0] sm:$0xf]
                %674 = vst [vmem:[%s180 + $0x3d8] sm:$0xf] %v673
                %v675 = vld [vmem:[%s179 + $0x7b8] sm:$0xf]
                %676 = vst [vmem:[%s180 + $0x3dc] sm:$0xf] %v675
                %v677 = vld [vmem:[%s179 + $0x7c0] sm:$0xf]
                %678 = vst [vmem:[%s180 + $0x3e0] sm:$0xf] %v677
                %v679 = vld [vmem:[%s179 + $0x7c8] sm:$0xf]
                %680 = vst [vmem:[%s180 + $0x3e4] sm:$0xf] %v679
                %v681 = vld [vmem:[%s179 + $0x7d0] sm:$0xf]
                %682 = vst [vmem:[%s180 + $0x3e8] sm:$0xf] %v681
                %v683 = vld [vmem:[%s179 + $0x7d8] sm:$0xf]
                %684 = vst [vmem:[%s180 + $0x3ec] sm:$0xf] %v683
                %v685 = vld [vmem:[%s179 + $0x7e0] sm:$0xf]
                %686 = vst [vmem:[%s180 + $0x3f0] sm:$0xf] %v685
                %v687 = vld [vmem:[%s179 + $0x7e8] sm:$0xf]
                %688 = vst [vmem:[%s180 + $0x3f4] sm:$0xf] %v687
                %v689 = vld [vmem:[%s179 + $0x7f0] sm:$0xf]
                %690 = vst [vmem:[%s180 + $0x3f8] sm:$0xf] %v689
                %v691 = vld [vmem:[%s179 + $0x7f8] sm:$0xf]
                %692 = vst [vmem:[%s180 + $0x3fc] sm:$0xf] %v691
                %v693 = vld [vmem:[%s179 + $0x800] sm:$0xf]
                %694 = vst [vmem:[%s180 + $0x400] sm:$0xf] %v693
                %v695 = vld [vmem:[%s179 + $0x808] sm:$0xf]
                %696 = vst [vmem:[%s180 + $0x404] sm:$0xf] %v695
                %v697 = vld [vmem:[%s179 + $0x810] sm:$0xf]
                %698 = vst [vmem:[%s180 + $0x408] sm:$0xf] %v697
                %v699 = vld [vmem:[%s179 + $0x818] sm:$0xf]
                %700 = vst [vmem:[%s180 + $0x40c] sm:$0xf] %v699
                %v701 = vld [vmem:[%s179 + $0x820] sm:$0xf]
                %702 = vst [vmem:[%s180 + $0x410] sm:$0xf] %v701
                %v703 = vld [vmem:[%s179 + $0x828] sm:$0xf]
                %704 = vst [vmem:[%s180 + $0x414] sm:$0xf] %v703
                %v705 = vld [vmem:[%s179 + $0x830] sm:$0xf]
                %706 = vst [vmem:[%s180 + $0x418] sm:$0xf] %v705
                %v707 = vld [vmem:[%s179 + $0x838] sm:$0xf]
                %708 = vst [vmem:[%s180 + $0x41c] sm:$0xf] %v707
                %v709 = vld [vmem:[%s179 + $0x840] sm:$0xf]
                %710 = vst [vmem:[%s180 + $0x420] sm:$0xf] %v709
                %v711 = vld [vmem:[%s179 + $0x848] sm:$0xf]
                %712 = vst [vmem:[%s180 + $0x424] sm:$0xf] %v711
                %v713 = vld [vmem:[%s179 + $0x850] sm:$0xf]
                %714 = vst [vmem:[%s180 + $0x428] sm:$0xf] %v713
                %v715 = vld [vmem:[%s179 + $0x858] sm:$0xf]
                %716 = vst [vmem:[%s180 + $0x42c] sm:$0xf] %v715
                %v717 = vld [vmem:[%s179 + $0x860] sm:$0xf]
                %718 = vst [vmem:[%s180 + $0x430] sm:$0xf] %v717
                %v719 = vld [vmem:[%s179 + $0x868] sm:$0xf]
                %720 = vst [vmem:[%s180 + $0x434] sm:$0xf] %v719
                %v721 = vld [vmem:[%s179 + $0x870] sm:$0xf]
                %722 = vst [vmem:[%s180 + $0x438] sm:$0xf] %v721
                %v723 = vld [vmem:[%s179 + $0x878] sm:$0xf]
                %724 = vst [vmem:[%s180 + $0x43c] sm:$0xf] %v723
                %v725 = vld [vmem:[%s179 + $0x880] sm:$0xf]
                %726 = vst [vmem:[%s180 + $0x440] sm:$0xf] %v725
                %v727 = vld [vmem:[%s179 + $0x888] sm:$0xf]
                %728 = vst [vmem:[%s180 + $0x444] sm:$0xf] %v727
                %v729 = vld [vmem:[%s179 + $0x890] sm:$0xf]
                %730 = vst [vmem:[%s180 + $0x448] sm:$0xf] %v729
                %v731 = vld [vmem:[%s179 + $0x898] sm:$0xf]
                %732 = vst [vmem:[%s180 + $0x44c] sm:$0xf] %v731
                %v733 = vld [vmem:[%s179 + $0x8a0] sm:$0xf]
                %734 = vst [vmem:[%s180 + $0x450] sm:$0xf] %v733
                %v735 = vld [vmem:[%s179 + $0x8a8] sm:$0xf]
                %736 = vst [vmem:[%s180 + $0x454] sm:$0xf] %v735
                %v737 = vld [vmem:[%s179 + $0x8b0] sm:$0xf]
                %738 = vst [vmem:[%s180 + $0x458] sm:$0xf] %v737
                %v739 = vld [vmem:[%s179 + $0x8b8] sm:$0xf]
                %740 = vst [vmem:[%s180 + $0x45c] sm:$0xf] %v739
                %v741 = vld [vmem:[%s179 + $0x8c0] sm:$0xf]
                %742 = vst [vmem:[%s180 + $0x460] sm:$0xf] %v741
                %v743 = vld [vmem:[%s179 + $0x8c8] sm:$0xf]
                %744 = vst [vmem:[%s180 + $0x464] sm:$0xf] %v743
                %v745 = vld [vmem:[%s179 + $0x8d0] sm:$0xf]
                %746 = vst [vmem:[%s180 + $0x468] sm:$0xf] %v745
                %v747 = vld [vmem:[%s179 + $0x8d8] sm:$0xf]
                %748 = vst [vmem:[%s180 + $0x46c] sm:$0xf] %v747
                %v749 = vld [vmem:[%s179 + $0x8e0] sm:$0xf]
                %750 = vst [vmem:[%s180 + $0x470] sm:$0xf] %v749
                %v751 = vld [vmem:[%s179 + $0x8e8] sm:$0xf]
                %752 = vst [vmem:[%s180 + $0x474] sm:$0xf] %v751
                %v753 = vld [vmem:[%s179 + $0x8f0] sm:$0xf]
                %754 = vst [vmem:[%s180 + $0x478] sm:$0xf] %v753
                %v755 = vld [vmem:[%s179 + $0x8f8] sm:$0xf]
                %756 = vst [vmem:[%s180 + $0x47c] sm:$0xf] %v755
                %v757 = vld [vmem:[%s179 + $0x900] sm:$0xf]
                %758 = vst [vmem:[%s180 + $0x480] sm:$0xf] %v757
                %v759 = vld [vmem:[%s179 + $0x908] sm:$0xf]
                %760 = vst [vmem:[%s180 + $0x484] sm:$0xf] %v759
                %v761 = vld [vmem:[%s179 + $0x910] sm:$0xf]
                %762 = vst [vmem:[%s180 + $0x488] sm:$0xf] %v761
                %v763 = vld [vmem:[%s179 + $0x918] sm:$0xf]
                %764 = vst [vmem:[%s180 + $0x48c] sm:$0xf] %v763
                %v765 = vld [vmem:[%s179 + $0x920] sm:$0xf]
                %766 = vst [vmem:[%s180 + $0x490] sm:$0xf] %v765
                %v767 = vld [vmem:[%s179 + $0x928] sm:$0xf]
                %768 = vst [vmem:[%s180 + $0x494] sm:$0xf] %v767
                %v769 = vld [vmem:[%s179 + $0x930] sm:$0xf]
                %770 = vst [vmem:[%s180 + $0x498] sm:$0xf] %v769
                %v771 = vld [vmem:[%s179 + $0x938] sm:$0xf]
                %772 = vst [vmem:[%s180 + $0x49c] sm:$0xf] %v771
                %v773 = vld [vmem:[%s179 + $0x940] sm:$0xf]
                %774 = vst [vmem:[%s180 + $0x4a0] sm:$0xf] %v773
                %v775 = vld [vmem:[%s179 + $0x948] sm:$0xf]
                %776 = vst [vmem:[%s180 + $0x4a4] sm:$0xf] %v775
                %v777 = vld [vmem:[%s179 + $0x950] sm:$0xf]
                %778 = vst [vmem:[%s180 + $0x4a8] sm:$0xf] %v777
                %v779 = vld [vmem:[%s179 + $0x958] sm:$0xf]
                %780 = vst [vmem:[%s180 + $0x4ac] sm:$0xf] %v779
                %v781 = vld [vmem:[%s179 + $0x960] sm:$0xf]
                %782 = vst [vmem:[%s180 + $0x4b0] sm:$0xf] %v781
                %v783 = vld [vmem:[%s179 + $0x968] sm:$0xf]
                %784 = vst [vmem:[%s180 + $0x4b4] sm:$0xf] %v783
                %v785 = vld [vmem:[%s179 + $0x970] sm:$0xf]
                %786 = vst [vmem:[%s180 + $0x4b8] sm:$0xf] %v785
                %v787 = vld [vmem:[%s179 + $0x978] sm:$0xf]
                %788 = vst [vmem:[%s180 + $0x4bc] sm:$0xf] %v787
                %v789 = vld [vmem:[%s179 + $0x980] sm:$0xf]
                %790 = vst [vmem:[%s180 + $0x4c0] sm:$0xf] %v789
                %v791 = vld [vmem:[%s179 + $0x988] sm:$0xf]
                %792 = vst [vmem:[%s180 + $0x4c4] sm:$0xf] %v791
                %v793 = vld [vmem:[%s179 + $0x990] sm:$0xf]
                %794 = vst [vmem:[%s180 + $0x4c8] sm:$0xf] %v793
                %v795 = vld [vmem:[%s179 + $0x998] sm:$0xf]
                %796 = vst [vmem:[%s180 + $0x4cc] sm:$0xf] %v795
                %v797 = vld [vmem:[%s179 + $0x9a0] sm:$0xf]
                %798 = vst [vmem:[%s180 + $0x4d0] sm:$0xf] %v797
                %v799 = vld [vmem:[%s179 + $0x9a8] sm:$0xf]
                %800 = vst [vmem:[%s180 + $0x4d4] sm:$0xf] %v799
                %v801 = vld [vmem:[%s179 + $0x9b0] sm:$0xf]
                %802 = vst [vmem:[%s180 + $0x4d8] sm:$0xf] %v801
                %v803 = vld [vmem:[%s179 + $0x9b8] sm:$0xf]
                %804 = vst [vmem:[%s180 + $0x4dc] sm:$0xf] %v803
                %v805 = vld [vmem:[%s179 + $0x9c0] sm:$0xf]
                %806 = vst [vmem:[%s180 + $0x4e0] sm:$0xf] %v805
                %v807 = vld [vmem:[%s179 + $0x9c8] sm:$0xf]
                %808 = vst [vmem:[%s180 + $0x4e4] sm:$0xf] %v807
                %v809 = vld [vmem:[%s179 + $0x9d0] sm:$0xf]
                %810 = vst [vmem:[%s180 + $0x4e8] sm:$0xf] %v809
                %v811 = vld [vmem:[%s179 + $0x9d8] sm:$0xf]
                %812 = vst [vmem:[%s180 + $0x4ec] sm:$0xf] %v811
                %v813 = vld [vmem:[%s179 + $0x9e0] sm:$0xf]
                %814 = vst [vmem:[%s180 + $0x4f0] sm:$0xf] %v813
                %v815 = vld [vmem:[%s179 + $0x9e8] sm:$0xf]
                %816 = vst [vmem:[%s180 + $0x4f4] sm:$0xf] %v815
                %v817 = vld [vmem:[%s179 + $0x9f0] sm:$0xf]
                %818 = vst [vmem:[%s180 + $0x4f8] sm:$0xf] %v817
                %v819 = vld [vmem:[%s179 + $0x9f8] sm:$0xf]
                %820 = vst [vmem:[%s180 + $0x4fc] sm:$0xf] %v819
                %v821 = vld [vmem:[%s179 + $0xa00] sm:$0xf]
                %822 = vst [vmem:[%s180 + $0x500] sm:$0xf] %v821
                %v823 = vld [vmem:[%s179 + $0xa08] sm:$0xf]
                %824 = vst [vmem:[%s180 + $0x504] sm:$0xf] %v823
                %v825 = vld [vmem:[%s179 + $0xa10] sm:$0xf]
                %826 = vst [vmem:[%s180 + $0x508] sm:$0xf] %v825
                %v827 = vld [vmem:[%s179 + $0xa18] sm:$0xf]
                %828 = vst [vmem:[%s180 + $0x50c] sm:$0xf] %v827
              $region41: #{dqn_forward.5} parent=35 // loop_footer
                %s178 = sadd.s32 1, %s174
              $region42: #{dqn_forward.5} parent=35 // loop_footer_branch
                %173 = sbr.rel target = $region38
              $region43: #{dqn_forward.5} parent=35 // loop_exit
                _
            $region36: #{dqn_forward.5} parent=27 // pred_fallthru
              _
          $region28: #{dqn_forward.5} parent=23 // pred_fallthru
            _
          %1496 = vnop
        $region24: #{dqn_forward.5} parent=19 // pred_fallthru
          _
        // Predicated region
        $region62: #{dqn_forward.5} parent=19 // pred_check
          %p1497 = pneg %p77
        $region63: #{dqn_forward.5} parent=19 // pred_check_branch
          %1499 = sbr.rel (%p1497) target = $region65
        $region64: #{dqn_forward.5} parent=19 // pred_region
          %p1500 = scmp.lt.s32.totalorder %s10, 1
          %s1501 = scalar_select %p1500, %s10, 1
          %s1502 = scalar_lea.vmem %s2, %s1501
        $region65: #{dqn_forward.5} parent=19 // pred_fallthru
          _
        // Predicated region
        $region66: #{dqn_forward.5} parent=19 // pred_check
          %p1503 = pneg %p103
        $region67: #{dqn_forward.5} parent=19 // pred_check_branch
          %1505 = sbr.rel (%p1503) target = $region69
        $region68: #{dqn_forward.5} parent=19 // pred_region
          %s1506 = smul.u32 16, %s10
          %p1507 = scmp.lt.s32.totalorder %s1506, 31
          %s1508 = scalar_select %p1507, %s1506, 31
          %s1509 = smul.addr %s1508, 4
          %s1510 = scalar_lea.vmem %s3, %s1509
          %s1511 = smul.u32 16, %s10
        $region69: #{dqn_forward.5} parent=19 // pred_fallthru
          _
      $region20: #{dqn_forward.5} parent=5 // pred_fallthru
        _
      %p1512 = scmp.le.s32.totalorder 1, %s10
      %p1513 = scmp.lt.s32.totalorder %s10, 3
      %p1514 = pnand %p1512, %p1513
      %p1515 = pneg %p1514
      // Predicated region
      $region70: #{dqn_forward.5} parent=5 // pred_check
        _
      $region71: #{dqn_forward.5} parent=5 // pred_check_branch
        %1517 = sbr.rel (%p1514) target = $region73
      $region72: #{dqn_forward.5} parent=5 // pred_region
        %s1518 = ssub.s32 %s10, 1
        %s1519 = sand.u32 %s44, 1
        %s1520 = sand.u32 %s44, 1
        %s1521 = smul.addr %s1520, 1296
        %s1522 = scalar_lea.vmem [#allocation2], %s1521
        // Predicated region
        $region74: #{dqn_forward.5} parent=72 // pred_check
          %p1523 = pneg %p57
        $region75: #{dqn_forward.5} parent=72 // pred_check_branch
          %1525 = sbr.rel (%p1523) target = $region77
        $region76: #{dqn_forward.5} parent=72 // pred_region
          _
        $region77: #{dqn_forward.5} parent=72 // pred_fallthru
          _
        %p1526 = pneg %p31
        %p1527 = pneg %p28
        %s1528 = sand.u32 %s44, 1
        %s1529 = sand.u32 %s44, 1
        %s1530 = smul.addr %s1529, 1296
        %s1531 = scalar_lea.vmem [#allocation2], %s1530
        %p1532 = pneg %p57
        %p1533 = pneg %p54
        %p1534 = scmp.lt.s32.totalorder %s15, 1
        %s1535 = scalar_select %p1534, %s15, 1
        %s1536 = scalar_lea.vmem %s2, %s1535
        %p1537 = pneg %p83
        %p1538 = pneg %p80
        %s1539 = smul.u32 16, %s15
        %p1540 = scmp.lt.s32.totalorder %s1539, 31
        %s1541 = scalar_select %p1540, %s1539, 31
        %s1542 = smul.addr %s1541, 4
        %s1543 = scalar_lea.vmem %s3, %s1542
        %p1544 = pneg %p109
        %p1545 = pneg %p106
        %p1546 = pneg %p135
        %p1547 = pneg %p132
        %p1548 = scmp.lt.s32.totalorder %s15, 1
        %s1549 = scalar_select %p1548, %s15, 1
        %s1550 = smul.addr %s1549, 2
        %s1551 = scalar_lea.vmem %s4, %s1550
        %p1552 = scmp.lt.s32.totalorder %s15, 1
        %s1553 = scalar_select %p1552, %s15, 1
        %s1554 = scalar_lea.vmem %s2, %s1553
        %s1555 = smul.u32 16, %s15
        %p1556 = scmp.lt.s32.totalorder %s1555, 31
        %s1557 = scalar_select %p1556, %s1555, 31
        %s1558 = smul.addr %s1557, 4
        %s1559 = scalar_lea.vmem %s3, %s1558
        %s1560 = smul.u32 16, %s15
        %p1561 = scmp.lt.s32.totalorder %s15, 1
        %s1562 = scalar_select %p1561, %s15, 1
        %s1563 = smul.addr %s1562, 2
        %s1564 = scalar_lea.vmem %s4, %s1563
        %v1566 = vld [vmem:[%s0] sm:$0xff]
        %v1567 = vld [vmem:[%s0 + $0x8] sm:$0xff]
        %v1568 = vld [vmem:[%s0 + $0x10] sm:$0x1f]
        %v1569 = vld [vmem:[%s1522] sm:$0xf]
        %v1570 = vld [vmem:[%s1522 + $0x4] sm:$0xf]
        %v1571 = vld [vmem:[%s1522 + $0x8] sm:$0xf]
        %v1572 = vld [vmem:[%s1522 + $0xc] sm:$0xf]
        %v1573 = vld [vmem:[%s1522 + $0x10] sm:$0xf]
        %v1574 = vld [vmem:[%s1522 + $0x14] sm:$0xf]
        %v1575 = vld [vmem:[%s1522 + $0x18] sm:$0xf]
        %v1576 = vld [vmem:[%s1522 + $0x1c] sm:$0xf]
        %v1577 = vld [vmem:[%s1522 + $0x20] sm:$0xf]
        %v1578 = vld [vmem:[%s1522 + $0x24] sm:$0xf]
        %v1579 = vld [vmem:[%s1522 + $0x28] sm:$0xf]
        %v1580 = vld [vmem:[%s1522 + $0x2c] sm:$0xf]
        %v1581 = vld [vmem:[%s1522 + $0x30] sm:$0xf]
        %v1582 = vld [vmem:[%s1522 + $0x34] sm:$0xf]
        %v1583 = vld [vmem:[%s1522 + $0x38] sm:$0xf]
        %v1584 = vld [vmem:[%s1522 + $0x3c] sm:$0xf]
        %v1585 = vld [vmem:[%s1522 + $0x40] sm:$0xf]
        %v1586 = vld [vmem:[%s1522 + $0x44] sm:$0xf]
        %v1587 = vld [vmem:[%s1522 + $0x48] sm:$0xf]
        %v1588 = vld [vmem:[%s1522 + $0x4c] sm:$0xf]
        %v1589 = vld [vmem:[%s1522 + $0x50] sm:$0xf]
        %v1590 = vld [vmem:[%s1522 + $0x54] sm:$0xf]
        %v1591 = vld [vmem:[%s1522 + $0x58] sm:$0xf]
        %v1592 = vld [vmem:[%s1522 + $0x5c] sm:$0xf]
        %v1593 = vld [vmem:[%s1522 + $0x60] sm:$0xf]
        %v1594 = vld [vmem:[%s1522 + $0x64] sm:$0xf]
        %v1595 = vld [vmem:[%s1522 + $0x68] sm:$0xf]
        %v1596 = vld [vmem:[%s1522 + $0x6c] sm:$0xf]
        %v1597 = vld [vmem:[%s1522 + $0x70] sm:$0xf]
        %v1598 = vld [vmem:[%s1522 + $0x74] sm:$0xf]
        %v1599 = vld [vmem:[%s1522 + $0x78] sm:$0xf]
        %v1600 = vld [vmem:[%s1522 + $0x7c] sm:$0xf]
        %v1601 = vld [vmem:[%s1522 + $0x80] sm:$0xf]
        %v1602 = vld [vmem:[%s1522 + $0x84] sm:$0xf]
        %v1603 = vld [vmem:[%s1522 + $0x88] sm:$0xf]
        %v1604 = vld [vmem:[%s1522 + $0x8c] sm:$0xf]
        %v1605 = vld [vmem:[%s1522 + $0x90] sm:$0xf]
        %v1606 = vld [vmem:[%s1522 + $0x94] sm:$0xf]
        %v1607 = vld [vmem:[%s1522 + $0x98] sm:$0xf]
        %v1608 = vld [vmem:[%s1522 + $0x9c] sm:$0xf]
        %v1609 = vld [vmem:[%s1522 + $0xa0] sm:$0xf]
        %v1610 = vld [vmem:[%s1522 + $0xa4] sm:$0xf]
        %v1611 = vld [vmem:[%s1522 + $0xa8] sm:$0xf]
        %v1612 = vld [vmem:[%s1522 + $0xac] sm:$0xf]
        %v1613 = vld [vmem:[%s1522 + $0xb0] sm:$0xf]
        %v1614 = vld [vmem:[%s1522 + $0xb4] sm:$0xf]
        %v1615 = vld [vmem:[%s1522 + $0xb8] sm:$0xf]
        %v1616 = vld [vmem:[%s1522 + $0xbc] sm:$0xf]
        %v1617 = vld [vmem:[%s1522 + $0xc0] sm:$0xf]
        %v1618 = vld [vmem:[%s1522 + $0xc4] sm:$0xf]
        %v1619 = vld [vmem:[%s1522 + $0xc8] sm:$0xf]
        %v1620 = vld [vmem:[%s1522 + $0xcc] sm:$0xf]
        %v1621 = vld [vmem:[%s1522 + $0xd0] sm:$0xf]
        %v1622 = vld [vmem:[%s1522 + $0xd4] sm:$0xf]
        %v1623 = vld [vmem:[%s1522 + $0xd8] sm:$0xf]
        %v1624 = vld [vmem:[%s1522 + $0xdc] sm:$0xf]
        %v1625 = vld [vmem:[%s1522 + $0xe0] sm:$0xf]
        %v1626 = vld [vmem:[%s1522 + $0xe4] sm:$0xf]
        %v1627 = vld [vmem:[%s1522 + $0xe8] sm:$0xf]
        %v1628 = vld [vmem:[%s1522 + $0xec] sm:$0xf]
        %v1629 = vld [vmem:[%s1522 + $0xf0] sm:$0xf]
        %v1630 = vld [vmem:[%s1522 + $0xf4] sm:$0xf]
        %v1631 = vld [vmem:[%s1522 + $0xf8] sm:$0xf]
        %v1632 = vld [vmem:[%s1522 + $0xfc] sm:$0xf]
        %v1633 = vld [vmem:[%s1522 + $0x100] sm:$0xf]
        %v1634 = vld [vmem:[%s1522 + $0x104] sm:$0xf]
        %v1635 = vld [vmem:[%s1522 + $0x108] sm:$0xf]
        %v1636 = vld [vmem:[%s1522 + $0x10c] sm:$0xf]
        %v1637 = vld [vmem:[%s1522 + $0x110] sm:$0xf]
        %v1638 = vld [vmem:[%s1522 + $0x114] sm:$0xf]
        %v1639 = vld [vmem:[%s1522 + $0x118] sm:$0xf]
        %v1640 = vld [vmem:[%s1522 + $0x11c] sm:$0xf]
        %v1641 = vld [vmem:[%s1522 + $0x120] sm:$0xf]
        %v1642 = vld [vmem:[%s1522 + $0x124] sm:$0xf]
        %v1643 = vld [vmem:[%s1522 + $0x128] sm:$0xf]
        %v1644 = vld [vmem:[%s1522 + $0x12c] sm:$0xf]
        %v1645 = vld [vmem:[%s1522 + $0x130] sm:$0xf]
        %v1646 = vld [vmem:[%s1522 + $0x134] sm:$0xf]
        %v1647 = vld [vmem:[%s1522 + $0x138] sm:$0xf]
        %v1648 = vld [vmem:[%s1522 + $0x13c] sm:$0xf]
        %v1649 = vld [vmem:[%s1522 + $0x140] sm:$0xf]
        %v1650 = vld [vmem:[%s1522 + $0x144] sm:$0xf]
        %v1651 = vld [vmem:[%s1522 + $0x148] sm:$0xf]
        %v1652 = vld [vmem:[%s1522 + $0x14c] sm:$0xf]
        %v1653 = vld [vmem:[%s1522 + $0x150] sm:$0xf]
        %v1654 = vld [vmem:[%s1522 + $0x154] sm:$0xf]
        %v1655 = vld [vmem:[%s1522 + $0x158] sm:$0xf]
        %v1656 = vld [vmem:[%s1522 + $0x15c] sm:$0xf]
        %v1657 = vld [vmem:[%s1522 + $0x160] sm:$0xf]
        %v1658 = vld [vmem:[%s1522 + $0x164] sm:$0xf]
        %v1659 = vld [vmem:[%s1522 + $0x168] sm:$0xf]
        %v1660 = vld [vmem:[%s1522 + $0x16c] sm:$0xf]
        %v1661 = vld [vmem:[%s1522 + $0x170] sm:$0xf]
        %v1662 = vld [vmem:[%s1522 + $0x174] sm:$0xf]
        %v1663 = vld [vmem:[%s1522 + $0x178] sm:$0xf]
        %v1664 = vld [vmem:[%s1522 + $0x17c] sm:$0xf]
        %v1665 = vld [vmem:[%s1522 + $0x180] sm:$0xf]
        %v1666 = vld [vmem:[%s1522 + $0x184] sm:$0xf]
        %v1667 = vld [vmem:[%s1522 + $0x188] sm:$0xf]
        %v1668 = vld [vmem:[%s1522 + $0x18c] sm:$0xf]
        %v1669 = vld [vmem:[%s1522 + $0x190] sm:$0xf]
        %v1670 = vld [vmem:[%s1522 + $0x194] sm:$0xf]
        %v1671 = vld [vmem:[%s1522 + $0x198] sm:$0xf]
        %v1672 = vld [vmem:[%s1522 + $0x19c] sm:$0xf]
        %v1673 = vld [vmem:[%s1522 + $0x1a0] sm:$0xf]
        %v1674 = vld [vmem:[%s1522 + $0x1a4] sm:$0xf]
        %v1675 = vld [vmem:[%s1522 + $0x1a8] sm:$0xf]
        %v1676 = vld [vmem:[%s1522 + $0x1ac] sm:$0xf]
        %v1677 = vld [vmem:[%s1522 + $0x1b0] sm:$0xf]
        %v1678 = vld [vmem:[%s1522 + $0x1b4] sm:$0xf]
        %v1679 = vld [vmem:[%s1522 + $0x1b8] sm:$0xf]
        %v1680 = vld [vmem:[%s1522 + $0x1bc] sm:$0xf]
        %v1681 = vld [vmem:[%s1522 + $0x1c0] sm:$0xf]
        %v1682 = vld [vmem:[%s1522 + $0x1c4] sm:$0xf]
        %v1683 = vld [vmem:[%s1522 + $0x1c8] sm:$0xf]
        %v1684 = vld [vmem:[%s1522 + $0x1cc] sm:$0xf]
        %v1685 = vld [vmem:[%s1522 + $0x1d0] sm:$0xf]
        %v1686 = vld [vmem:[%s1522 + $0x1d4] sm:$0xf]
        %v1687 = vld [vmem:[%s1522 + $0x1d8] sm:$0xf]
        %v1688 = vld [vmem:[%s1522 + $0x1dc] sm:$0xf]
        %v1689 = vld [vmem:[%s1522 + $0x1e0] sm:$0xf]
        %v1690 = vld [vmem:[%s1522 + $0x1e4] sm:$0xf]
        %v1691 = vld [vmem:[%s1522 + $0x1e8] sm:$0xf]
        %v1692 = vld [vmem:[%s1522 + $0x1ec] sm:$0xf]
        %v1693 = vld [vmem:[%s1522 + $0x1f0] sm:$0xf]
        %v1694 = vld [vmem:[%s1522 + $0x1f4] sm:$0xf]
        %v1695 = vld [vmem:[%s1522 + $0x1f8] sm:$0xf]
        %v1696 = vld [vmem:[%s1522 + $0x1fc] sm:$0xf]
        %v1697 = vld [vmem:[%s1522 + $0x200] sm:$0xf]
        %v1698 = vld [vmem:[%s1522 + $0x204] sm:$0xf]
        %v1699 = vld [vmem:[%s1522 + $0x208] sm:$0xf]
        %v1700 = vld [vmem:[%s1522 + $0x20c] sm:$0xf]
        %v1701 = vld [vmem:[%s1522 + $0x210] sm:$0xf]
        %v1702 = vld [vmem:[%s1522 + $0x214] sm:$0xf]
        %v1703 = vld [vmem:[%s1522 + $0x218] sm:$0xf]
        %v1704 = vld [vmem:[%s1522 + $0x21c] sm:$0xf]
        %v1705 = vld [vmem:[%s1522 + $0x220] sm:$0xf]
        %v1706 = vld [vmem:[%s1522 + $0x224] sm:$0xf]
        %v1707 = vld [vmem:[%s1522 + $0x228] sm:$0xf]
        %v1708 = vld [vmem:[%s1522 + $0x22c] sm:$0xf]
        %v1709 = vld [vmem:[%s1522 + $0x230] sm:$0xf]
        %v1710 = vld [vmem:[%s1522 + $0x234] sm:$0xf]
        %v1711 = vld [vmem:[%s1522 + $0x238] sm:$0xf]
        %v1712 = vld [vmem:[%s1522 + $0x23c] sm:$0xf]
        %v1713 = vld [vmem:[%s1522 + $0x240] sm:$0xf]
        %v1714 = vld [vmem:[%s1522 + $0x244] sm:$0xf]
        %v1715 = vld [vmem:[%s1522 + $0x248] sm:$0xf]
        %v1716 = vld [vmem:[%s1522 + $0x24c] sm:$0xf]
        %v1717 = vld [vmem:[%s1522 + $0x250] sm:$0xf]
        %v1718 = vld [vmem:[%s1522 + $0x254] sm:$0xf]
        %v1719 = vld [vmem:[%s1522 + $0x258] sm:$0xf]
        %v1720 = vld [vmem:[%s1522 + $0x25c] sm:$0xf]
        %v1721 = vld [vmem:[%s1522 + $0x260] sm:$0xf]
        %v1722 = vld [vmem:[%s1522 + $0x264] sm:$0xf]
        %v1723 = vld [vmem:[%s1522 + $0x268] sm:$0xf]
        %v1724 = vld [vmem:[%s1522 + $0x26c] sm:$0xf]
        %v1725 = vld [vmem:[%s1522 + $0x270] sm:$0xf]
        %v1726 = vld [vmem:[%s1522 + $0x274] sm:$0xf]
        %v1727 = vld [vmem:[%s1522 + $0x278] sm:$0xf]
        %v1728 = vld [vmem:[%s1522 + $0x27c] sm:$0xf]
        %v1729 = vld [vmem:[%s1522 + $0x280] sm:$0xf]
        %v1730 = vld [vmem:[%s1522 + $0x284] sm:$0xf]
        %v1731 = vld [vmem:[%s1522 + $0x288] sm:$0xf]
        %v1732 = vld [vmem:[%s1522 + $0x28c] sm:$0xf]
        %v1733 = vld [vmem:[%s1522 + $0x290] sm:$0xf]
        %v1734 = vld [vmem:[%s1522 + $0x294] sm:$0xf]
        %v1735 = vld [vmem:[%s1522 + $0x298] sm:$0xf]
        %v1736 = vld [vmem:[%s1522 + $0x29c] sm:$0xf]
        %v1737 = vld [vmem:[%s1522 + $0x2a0] sm:$0xf]
        %v1738 = vld [vmem:[%s1522 + $0x2a4] sm:$0xf]
        %v1739 = vld [vmem:[%s1522 + $0x2a8] sm:$0xf]
        %v1740 = vld [vmem:[%s1522 + $0x2ac] sm:$0xf]
        %v1741 = vld [vmem:[%s1522 + $0x2b0] sm:$0xf]
        %v1742 = vld [vmem:[%s1522 + $0x2b4] sm:$0xf]
        %v1743 = vld [vmem:[%s1522 + $0x2b8] sm:$0xf]
        %v1744 = vld [vmem:[%s1522 + $0x2bc] sm:$0xf]
        %v1745 = vld [vmem:[%s1522 + $0x2c0] sm:$0xf]
        %v1746 = vld [vmem:[%s1522 + $0x2c4] sm:$0xf]
        %v1747 = vld [vmem:[%s1522 + $0x2c8] sm:$0xf]
        %v1748 = vld [vmem:[%s1522 + $0x2cc] sm:$0xf]
        %v1749 = vld [vmem:[%s1522 + $0x2d0] sm:$0xf]
        %v1750 = vld [vmem:[%s1522 + $0x2d4] sm:$0xf]
        %v1751 = vld [vmem:[%s1522 + $0x2d8] sm:$0xf]
        %v1752 = vld [vmem:[%s1522 + $0x2dc] sm:$0xf]
        %v1753 = vld [vmem:[%s1522 + $0x2e0] sm:$0xf]
        %v1754 = vld [vmem:[%s1522 + $0x2e4] sm:$0xf]
        %v1755 = vld [vmem:[%s1522 + $0x2e8] sm:$0xf]
        %v1756 = vld [vmem:[%s1522 + $0x2ec] sm:$0xf]
        %v1757 = vld [vmem:[%s1522 + $0x2f0] sm:$0xf]
        %v1758 = vld [vmem:[%s1522 + $0x2f4] sm:$0xf]
        %v1759 = vld [vmem:[%s1522 + $0x2f8] sm:$0xf]
        %v1760 = vld [vmem:[%s1522 + $0x2fc] sm:$0xf]
        %v1761 = vld [vmem:[%s1522 + $0x300] sm:$0xf]
        %v1762 = vld [vmem:[%s1522 + $0x304] sm:$0xf]
        %v1763 = vld [vmem:[%s1522 + $0x308] sm:$0xf]
        %v1764 = vld [vmem:[%s1522 + $0x30c] sm:$0xf]
        %v1765 = vld [vmem:[%s1522 + $0x310] sm:$0xf]
        %v1766 = vld [vmem:[%s1522 + $0x314] sm:$0xf]
        %v1767 = vld [vmem:[%s1522 + $0x318] sm:$0xf]
        %v1768 = vld [vmem:[%s1522 + $0x31c] sm:$0xf]
        %v1769 = vld [vmem:[%s1522 + $0x320] sm:$0xf]
        %v1770 = vld [vmem:[%s1522 + $0x324] sm:$0xf]
        %v1771 = vld [vmem:[%s1522 + $0x328] sm:$0xf]
        %v1772 = vld [vmem:[%s1522 + $0x32c] sm:$0xf]
        %v1773 = vld [vmem:[%s1522 + $0x330] sm:$0xf]
        %v1774 = vld [vmem:[%s1522 + $0x334] sm:$0xf]
        %v1775 = vld [vmem:[%s1522 + $0x338] sm:$0xf]
        %v1776 = vld [vmem:[%s1522 + $0x33c] sm:$0xf]
        %v1777 = vld [vmem:[%s1522 + $0x340] sm:$0xf]
        %v1778 = vld [vmem:[%s1522 + $0x344] sm:$0xf]
        %v1779 = vld [vmem:[%s1522 + $0x348] sm:$0xf]
        %v1780 = vld [vmem:[%s1522 + $0x34c] sm:$0xf]
        %v1781 = vld [vmem:[%s1522 + $0x350] sm:$0xf]
        %v1782 = vld [vmem:[%s1522 + $0x354] sm:$0xf]
        %v1783 = vld [vmem:[%s1522 + $0x358] sm:$0xf]
        %v1784 = vld [vmem:[%s1522 + $0x35c] sm:$0xf]
        %v1785 = vld [vmem:[%s1522 + $0x360] sm:$0xf]
        %v1786 = vld [vmem:[%s1522 + $0x364] sm:$0xf]
        %v1787 = vld [vmem:[%s1522 + $0x368] sm:$0xf]
        %v1788 = vld [vmem:[%s1522 + $0x36c] sm:$0xf]
        %v1789 = vld [vmem:[%s1522 + $0x370] sm:$0xf]
        %v1790 = vld [vmem:[%s1522 + $0x374] sm:$0xf]
        %v1791 = vld [vmem:[%s1522 + $0x378] sm:$0xf]
        %v1792 = vld [vmem:[%s1522 + $0x37c] sm:$0xf]
        %v1793 = vld [vmem:[%s1522 + $0x380] sm:$0xf]
        %v1794 = vld [vmem:[%s1522 + $0x384] sm:$0xf]
        %v1795 = vld [vmem:[%s1522 + $0x388] sm:$0xf]
        %v1796 = vld [vmem:[%s1522 + $0x38c] sm:$0xf]
        %v1797 = vld [vmem:[%s1522 + $0x390] sm:$0xf]
        %v1798 = vld [vmem:[%s1522 + $0x394] sm:$0xf]
        %v1799 = vld [vmem:[%s1522 + $0x398] sm:$0xf]
        %v1800 = vld [vmem:[%s1522 + $0x39c] sm:$0xf]
        %v1801 = vld [vmem:[%s1522 + $0x3a0] sm:$0xf]
        %v1802 = vld [vmem:[%s1522 + $0x3a4] sm:$0xf]
        %v1803 = vld [vmem:[%s1522 + $0x3a8] sm:$0xf]
        %v1804 = vld [vmem:[%s1522 + $0x3ac] sm:$0xf]
        %v1805 = vld [vmem:[%s1522 + $0x3b0] sm:$0xf]
        %v1806 = vld [vmem:[%s1522 + $0x3b4] sm:$0xf]
        %v1807 = vld [vmem:[%s1522 + $0x3b8] sm:$0xf]
        %v1808 = vld [vmem:[%s1522 + $0x3bc] sm:$0xf]
        %v1809 = vld [vmem:[%s1522 + $0x3c0] sm:$0xf]
        %v1810 = vld [vmem:[%s1522 + $0x3c4] sm:$0xf]
        %v1811 = vld [vmem:[%s1522 + $0x3c8] sm:$0xf]
        %v1812 = vld [vmem:[%s1522 + $0x3cc] sm:$0xf]
        %v1813 = vld [vmem:[%s1522 + $0x3d0] sm:$0xf]
        %v1814 = vld [vmem:[%s1522 + $0x3d4] sm:$0xf]
        %v1815 = vld [vmem:[%s1522 + $0x3d8] sm:$0xf]
        %v1816 = vld [vmem:[%s1522 + $0x3dc] sm:$0xf]
        %v1817 = vld [vmem:[%s1522 + $0x3e0] sm:$0xf]
        %v1818 = vld [vmem:[%s1522 + $0x3e4] sm:$0xf]
        %v1819 = vld [vmem:[%s1522 + $0x3e8] sm:$0xf]
        %v1820 = vld [vmem:[%s1522 + $0x3ec] sm:$0xf]
        %v1821 = vld [vmem:[%s1522 + $0x3f0] sm:$0xf]
        %v1822 = vld [vmem:[%s1522 + $0x3f4] sm:$0xf]
        %v1823 = vld [vmem:[%s1522 + $0x3f8] sm:$0xf]
        %v1824 = vld [vmem:[%s1522 + $0x3fc] sm:$0xf]
        %v1825 = vld [vmem:[%s1522 + $0x400] sm:$0xf]
        %v1826 = vld [vmem:[%s1522 + $0x404] sm:$0xf]
        %v1827 = vld [vmem:[%s1522 + $0x408] sm:$0xf]
        %v1828 = vld [vmem:[%s1522 + $0x40c] sm:$0xf]
        %v1829 = vld [vmem:[%s1522 + $0x410] sm:$0xf]
        %v1830 = vld [vmem:[%s1522 + $0x414] sm:$0xf]
        %v1831 = vld [vmem:[%s1522 + $0x418] sm:$0xf]
        %v1832 = vld [vmem:[%s1522 + $0x41c] sm:$0xf]
        %v1833 = vld [vmem:[%s1522 + $0x420] sm:$0xf]
        %v1834 = vld [vmem:[%s1522 + $0x424] sm:$0xf]
        %v1835 = vld [vmem:[%s1522 + $0x428] sm:$0xf]
        %v1836 = vld [vmem:[%s1522 + $0x42c] sm:$0xf]
        %v1837 = vld [vmem:[%s1522 + $0x430] sm:$0xf]
        %v1838 = vld [vmem:[%s1522 + $0x434] sm:$0xf]
        %v1839 = vld [vmem:[%s1522 + $0x438] sm:$0xf]
        %v1840 = vld [vmem:[%s1522 + $0x43c] sm:$0xf]
        %v1841 = vld [vmem:[%s1522 + $0x440] sm:$0xf]
        %v1842 = vld [vmem:[%s1522 + $0x444] sm:$0xf]
        %v1843 = vld [vmem:[%s1522 + $0x448] sm:$0xf]
        %v1844 = vld [vmem:[%s1522 + $0x44c] sm:$0xf]
        %v1845 = vld [vmem:[%s1522 + $0x450] sm:$0xf]
        %v1846 = vld [vmem:[%s1522 + $0x454] sm:$0xf]
        %v1847 = vld [vmem:[%s1522 + $0x458] sm:$0xf]
        %v1848 = vld [vmem:[%s1522 + $0x45c] sm:$0xf]
        %v1849 = vld [vmem:[%s1522 + $0x460] sm:$0xf]
        %v1850 = vld [vmem:[%s1522 + $0x464] sm:$0xf]
        %v1851 = vld [vmem:[%s1522 + $0x468] sm:$0xf]
        %v1852 = vld [vmem:[%s1522 + $0x46c] sm:$0xf]
        %v1853 = vld [vmem:[%s1522 + $0x470] sm:$0xf]
        %v1854 = vld [vmem:[%s1522 + $0x474] sm:$0xf]
        %v1855 = vld [vmem:[%s1522 + $0x478] sm:$0xf]
        %v1856 = vld [vmem:[%s1522 + $0x47c] sm:$0xf]
        %v1857 = vld [vmem:[%s1522 + $0x480] sm:$0xf]
        %v1858 = vld [vmem:[%s1522 + $0x484] sm:$0xf]
        %v1859 = vld [vmem:[%s1522 + $0x488] sm:$0xf]
        %v1860 = vld [vmem:[%s1522 + $0x48c] sm:$0xf]
        %v1861 = vld [vmem:[%s1522 + $0x490] sm:$0xf]
        %v1862 = vld [vmem:[%s1522 + $0x494] sm:$0xf]
        %v1863 = vld [vmem:[%s1522 + $0x498] sm:$0xf]
        %v1864 = vld [vmem:[%s1522 + $0x49c] sm:$0xf]
        %v1865 = vld [vmem:[%s1522 + $0x4a0] sm:$0xf]
        %v1866 = vld [vmem:[%s1522 + $0x4a4] sm:$0xf]
        %v1867 = vld [vmem:[%s1522 + $0x4a8] sm:$0xf]
        %v1868 = vld [vmem:[%s1522 + $0x4ac] sm:$0xf]
        %v1869 = vld [vmem:[%s1522 + $0x4b0] sm:$0xf]
        %v1870 = vld [vmem:[%s1522 + $0x4b4] sm:$0xf]
        %v1871 = vld [vmem:[%s1522 + $0x4b8] sm:$0xf]
        %v1872 = vld [vmem:[%s1522 + $0x4bc] sm:$0xf]
        %v1873 = vld [vmem:[%s1522 + $0x4c0] sm:$0xf]
        %v1874 = vld [vmem:[%s1522 + $0x4c4] sm:$0xf]
        %v1875 = vld [vmem:[%s1522 + $0x4c8] sm:$0xf]
        %v1876 = vld [vmem:[%s1522 + $0x4cc] sm:$0xf]
        %v1877 = vld [vmem:[%s1522 + $0x4d0] sm:$0xf]
        %v1878 = vld [vmem:[%s1522 + $0x4d4] sm:$0xf]
        %v1879 = vld [vmem:[%s1522 + $0x4d8] sm:$0xf]
        %v1880 = vld [vmem:[%s1522 + $0x4dc] sm:$0xf]
        %v1881 = vld [vmem:[%s1522 + $0x4e0] sm:$0xf]
        %v1882 = vld [vmem:[%s1522 + $0x4e4] sm:$0xf]
        %v1883 = vld [vmem:[%s1522 + $0x4e8] sm:$0xf]
        %v1884 = vld [vmem:[%s1522 + $0x4ec] sm:$0xf]
        %v1885 = vld [vmem:[%s1522 + $0x4f0] sm:$0xf]
        %v1886 = vld [vmem:[%s1522 + $0x4f4] sm:$0xf]
        %v1887 = vld [vmem:[%s1522 + $0x4f8] sm:$0xf]
        %v1888 = vld [vmem:[%s1522 + $0x4fc] sm:$0xf]
        %v1889 = vld [vmem:[%s1522 + $0x500] sm:$0xf]
        %v1890 = vld [vmem:[%s1522 + $0x504] sm:$0xf]
        %v1891 = vld [vmem:[%s1522 + $0x508] sm:$0xf]
        %v1892 = vld [vmem:[%s1522 + $0x50c] sm:$0xf]
        %v1893 = vld [vmem:[%s1554] sm:$0x1]
        %v1895 = vlaneseq
        %v1896 = vshrl.u32 %v1895, 7
        %v1897 = vsub.s32 0, %v1896
        %v1898 = vrot.slane %v1893, %v1897
        %v1903 = vcombine.high %v1566, %v1566
        %v1905 = vunpack.c.l.s4 1966171168
        %v1906 = vunpack.c.0.s8 %v1905
        %v1907 = vlaneseq
        %v1908 = vshrl.u32 %v1907, 7
        %v1909 = vsub.s32 %v1906, %v1908
        %v1910 = vrot.slane %v1566, %v1909
        %v1912 = vunpack.c.l.s4 1966171168
        %v1913 = vunpack.c.0.s8 %v1912
        %v1914 = vlaneseq
        %v1915 = vshrl.u32 %v1914, 7
        %v1916 = vsub.s32 %v1913, %v1915
        %v1917 = vrot.slane %v1903, %v1916
        %v1918 = vcombine.high %v1910, %v1910
        %v1919 = vcombine.high %v1917, %v1917
        %v1921 = vunpack.c.l.s4 1966171168
        %v1922 = vunpack.c.0.s8 %v1921
        %v1923 = vlaneseq
        %v1924 = vshrl.u32 %v1923, 7
        %v1925 = vsub.s32 %v1922, %v1924
        %v1926 = vrot.slane %v1910, %v1925
        %v1928 = vunpack.c.l.s4 1966171168
        %v1929 = vunpack.c.0.s8 %v1928
        %v1930 = vlaneseq
        %v1931 = vshrl.u32 %v1930, 7
        %v1932 = vsub.s32 %v1929, %v1931
        %v1933 = vrot.slane %v1917, %v1932
        %v1935 = vunpack.c.l.s4 1966171168
        %v1936 = vunpack.c.0.s8 %v1935
        %v1937 = vlaneseq
        %v1938 = vshrl.u32 %v1937, 7
        %v1939 = vsub.s32 %v1936, %v1938
        %v1940 = vrot.slane %v1918, %v1939
        %v1942 = vunpack.c.l.s4 1966171168
        %v1943 = vunpack.c.0.s8 %v1942
        %v1944 = vlaneseq
        %v1945 = vshrl.u32 %v1944, 7
        %v1946 = vsub.s32 %v1943, %v1945
        %v1947 = vrot.slane %v1919, %v1946
        %v1948 = vcombine.high %v1926, %v1926
        %v1949 = vcombine.high %v1933, %v1933
        %v1950 = vcombine.high %v1940, %v1940
        %v1951 = vcombine.high %v1947, %v1947
        %v1952 = vcombine.high %v1567, %v1567
        %v1954 = vunpack.c.l.s4 1966171168
        %v1955 = vunpack.c.0.s8 %v1954
        %v1956 = vlaneseq
        %v1957 = vshrl.u32 %v1956, 7
        %v1958 = vsub.s32 %v1955, %v1957
        %v1959 = vrot.slane %v1567, %v1958
        %v1961 = vunpack.c.l.s4 1966171168
        %v1962 = vunpack.c.0.s8 %v1961
        %v1963 = vlaneseq
        %v1964 = vshrl.u32 %v1963, 7
        %v1965 = vsub.s32 %v1962, %v1964
        %v1966 = vrot.slane %v1952, %v1965
        %v1967 = vcombine.high %v1959, %v1959
        %v1968 = vcombine.high %v1966, %v1966
        %v1970 = vunpack.c.l.s4 1966171168
        %v1971 = vunpack.c.0.s8 %v1970
        %v1972 = vlaneseq
        %v1973 = vshrl.u32 %v1972, 7
        %v1974 = vsub.s32 %v1971, %v1973
        %v1975 = vrot.slane %v1959, %v1974
        %v1977 = vunpack.c.l.s4 1966171168
        %v1978 = vunpack.c.0.s8 %v1977
        %v1979 = vlaneseq
        %v1980 = vshrl.u32 %v1979, 7
        %v1981 = vsub.s32 %v1978, %v1980
        %v1982 = vrot.slane %v1966, %v1981
        %v1984 = vunpack.c.l.s4 1966171168
        %v1985 = vunpack.c.0.s8 %v1984
        %v1986 = vlaneseq
        %v1987 = vshrl.u32 %v1986, 7
        %v1988 = vsub.s32 %v1985, %v1987
        %v1989 = vrot.slane %v1967, %v1988
        %v1991 = vunpack.c.l.s4 1966171168
        %v1992 = vunpack.c.0.s8 %v1991
        %v1993 = vlaneseq
        %v1994 = vshrl.u32 %v1993, 7
        %v1995 = vsub.s32 %v1992, %v1994
        %v1996 = vrot.slane %v1968, %v1995
        %v1997 = vcombine.high %v1975, %v1975
        %v1998 = vcombine.high %v1982, %v1982
        %v1999 = vcombine.high %v1989, %v1989
        %v2000 = vcombine.high %v1996, %v1996
        %v2001 = vcombine.high %v1568, %v1568
        %v2003 = vunpack.c.l.s4 1966171168
        %v2004 = vunpack.c.0.s8 %v2003
        %v2005 = vlaneseq
        %v2006 = vshrl.u32 %v2005, 7
        %v2007 = vsub.s32 %v2004, %v2006
        %v2008 = vrot.slane %v1568, %v2007
        %v2010 = vunpack.c.l.s4 1966171168
        %v2011 = vunpack.c.0.s8 %v2010
        %v2012 = vlaneseq
        %v2013 = vshrl.u32 %v2012, 7
        %v2014 = vsub.s32 %v2011, %v2013
        %v2015 = vrot.slane %v2001, %v2014
        %v2016 = vcombine.high %v2008, %v2008
        %v2018 = vunpack.c.l.s4 1966171168
        %v2019 = vunpack.c.0.s8 %v2018
        %v2020 = vlaneseq
        %v2021 = vshrl.u32 %v2020, 7
        %v2022 = vsub.s32 %v2019, %v2021
        %v2023 = vrot.slane %v2008, %v2022
        %v2025 = vunpack.c.l.s4 1966171168
        %v2026 = vunpack.c.0.s8 %v2025
        %v2027 = vlaneseq
        %v2028 = vshrl.u32 %v2027, 7
        %v2029 = vsub.s32 %v2026, %v2028
        %v2030 = vrot.slane %v2015, %v2029
        %v2032 = vunpack.c.l.s4 1966171168
        %v2033 = vunpack.c.0.s8 %v2032
        %v2034 = vlaneseq
        %v2035 = vshrl.u32 %v2034, 7
        %v2036 = vsub.s32 %v2033, %v2035
        %v2037 = vrot.slane %v2016, %v2036
        %v2038 = vcombine.high %v2023, %v2023
        %v2039 = vcombine.high %v2037, %v2037
        %v2384 = vunpack.c.l.b16 %v1569
        %v2385 = vunpack.c.l.b16 %v1570
        %v2386 = vunpack.c.l.b16 %v1571
        %v2387 = vunpack.c.l.b16 %v1572
        %v2388 = vunpack.c.l.b16 %v1573
        %v2389 = vunpack.c.l.b16 %v1574
        %v2390 = vunpack.c.l.b16 %v1575
        %v2391 = vunpack.c.l.b16 %v1576
        %v2392 = vunpack.c.l.b16 %v1577
        %v2393 = vunpack.c.l.b16 %v1578
        %v2394 = vunpack.c.l.b16 %v1579
        %v2395 = vunpack.c.l.b16 %v1580
        %v2396 = vunpack.c.l.b16 %v1581
        %v2397 = vunpack.c.l.b16 %v1582
        %v2398 = vunpack.c.l.b16 %v1583
        %v2399 = vunpack.c.l.b16 %v1584
        %v2400 = vunpack.c.l.b16 %v1585
        %v2401 = vunpack.c.l.b16 %v1586
        %v2402 = vunpack.c.l.b16 %v1587
        %v2403 = vunpack.c.l.b16 %v1588
        %v2404 = vunpack.c.l.b16 %v1589
        %v2405 = vunpack.c.l.b16 %v1590
        %v2406 = vunpack.c.l.b16 %v1591
        %v2407 = vunpack.c.l.b16 %v1592
        %v2408 = vunpack.c.l.b16 %v1593
        %v2409 = vunpack.c.l.b16 %v1594
        %v2410 = vunpack.c.l.b16 %v1595
        %v2411 = vunpack.c.l.b16 %v1596
        %v2412 = vunpack.c.l.b16 %v1597
        %v2413 = vunpack.c.l.b16 %v1598
        %v2414 = vunpack.c.l.b16 %v1599
        %v2415 = vunpack.c.l.b16 %v1600
        %v2416 = vunpack.c.l.b16 %v1601
        %v2417 = vunpack.c.l.b16 %v1602
        %v2418 = vunpack.c.l.b16 %v1603
        %v2419 = vunpack.c.l.b16 %v1604
        %v2420 = vunpack.c.l.b16 %v1605
        %v2421 = vunpack.c.l.b16 %v1606
        %v2422 = vunpack.c.l.b16 %v1607
        %v2423 = vunpack.c.l.b16 %v1608
        %v2424 = vunpack.c.l.b16 %v1609
        %v2425 = vunpack.c.l.b16 %v1610
        %v2426 = vunpack.c.l.b16 %v1611
        %v2427 = vunpack.c.l.b16 %v1612
        %v2428 = vunpack.c.l.b16 %v1613
        %v2429 = vunpack.c.l.b16 %v1614
        %v2430 = vunpack.c.l.b16 %v1615
        %v2431 = vunpack.c.l.b16 %v1616
        %v2432 = vunpack.c.l.b16 %v1617
        %v2433 = vunpack.c.l.b16 %v1618
        %v2434 = vunpack.c.l.b16 %v1619
        %v2435 = vunpack.c.l.b16 %v1620
        %v2436 = vunpack.c.l.b16 %v1621
        %v2437 = vunpack.c.l.b16 %v1622
        %v2438 = vunpack.c.l.b16 %v1623
        %v2439 = vunpack.c.l.b16 %v1624
        %v2440 = vunpack.c.l.b16 %v1625
        %v2441 = vunpack.c.l.b16 %v1626
        %v2442 = vunpack.c.l.b16 %v1627
        %v2443 = vunpack.c.l.b16 %v1628
        %v2444 = vunpack.c.l.b16 %v1629
        %v2445 = vunpack.c.l.b16 %v1630
        %v2446 = vunpack.c.l.b16 %v1631
        %v2447 = vunpack.c.l.b16 %v1632
        %v2448 = vunpack.c.l.b16 %v1633
        %v2449 = vunpack.c.l.b16 %v1634
        %v2450 = vunpack.c.l.b16 %v1635
        %v2451 = vunpack.c.l.b16 %v1636
        %v2452 = vunpack.c.l.b16 %v1637
        %v2453 = vunpack.c.l.b16 %v1638
        %v2454 = vunpack.c.l.b16 %v1639
        %v2455 = vunpack.c.l.b16 %v1640
        %v2456 = vunpack.c.l.b16 %v1641
        %v2457 = vunpack.c.l.b16 %v1642
        %v2458 = vunpack.c.l.b16 %v1643
        %v2459 = vunpack.c.l.b16 %v1644
        %v2460 = vunpack.c.l.b16 %v1645
        %v2461 = vunpack.c.l.b16 %v1646
        %v2462 = vunpack.c.l.b16 %v1647
        %v2463 = vunpack.c.l.b16 %v1648
        %v2464 = vunpack.c.l.b16 %v1649
        %v2465 = vunpack.c.l.b16 %v1650
        %v2466 = vunpack.c.l.b16 %v1651
        %v2467 = vunpack.c.l.b16 %v1652
        %v2468 = vunpack.c.l.b16 %v1653
        %v2469 = vunpack.c.l.b16 %v1654
        %v2470 = vunpack.c.l.b16 %v1655
        %v2471 = vunpack.c.l.b16 %v1656
        %v2472 = vunpack.c.l.b16 %v1657
        %v2473 = vunpack.c.l.b16 %v1658
        %v2474 = vunpack.c.l.b16 %v1659
        %v2475 = vunpack.c.l.b16 %v1660
        %v2476 = vunpack.c.l.b16 %v1661
        %v2477 = vunpack.c.l.b16 %v1662
        %v2478 = vunpack.c.l.b16 %v1663
        %v2479 = vunpack.c.l.b16 %v1664
        %v2480 = vunpack.c.l.b16 %v1665
        %v2481 = vunpack.c.l.b16 %v1666
        %v2482 = vunpack.c.l.b16 %v1667
        %v2483 = vunpack.c.l.b16 %v1668
        %v2484 = vunpack.c.l.b16 %v1669
        %v2485 = vunpack.c.l.b16 %v1670
        %v2486 = vunpack.c.l.b16 %v1671
        %v2487 = vunpack.c.l.b16 %v1672
        %v2488 = vunpack.c.l.b16 %v1673
        %v2489 = vunpack.c.l.b16 %v1674
        %v2490 = vunpack.c.l.b16 %v1675
        %v2491 = vunpack.c.l.b16 %v1676
        %v2492 = vunpack.c.l.b16 %v1677
        %v2493 = vunpack.c.l.b16 %v1678
        %v2494 = vunpack.c.l.b16 %v1679
        %v2495 = vunpack.c.l.b16 %v1680
        %v2496 = vunpack.c.l.b16 %v1681
        %v2497 = vunpack.c.l.b16 %v1682
        %v2498 = vunpack.c.l.b16 %v1683
        %v2499 = vunpack.c.l.b16 %v1684
        %v2500 = vunpack.c.l.b16 %v1685
        %v2501 = vunpack.c.l.b16 %v1686
        %v2502 = vunpack.c.l.b16 %v1687
        %v2503 = vunpack.c.l.b16 %v1688
        %v2504 = vunpack.c.l.b16 %v1689
        %v2505 = vunpack.c.l.b16 %v1690
        %v2506 = vunpack.c.l.b16 %v1691
        %v2507 = vunpack.c.l.b16 %v1692
        %v2508 = vunpack.c.l.b16 %v1693
        %v2509 = vunpack.c.l.b16 %v1694
        %v2510 = vunpack.c.l.b16 %v1695
        %v2511 = vunpack.c.l.b16 %v1696
        %v2512 = vunpack.c.l.b16 %v1697
        %v2513 = vunpack.c.l.b16 %v1698
        %v2514 = vunpack.c.l.b16 %v1699
        %v2515 = vunpack.c.l.b16 %v1700
        %v2516 = vunpack.c.l.b16 %v1701
        %v2517 = vunpack.c.l.b16 %v1702
        %v2518 = vunpack.c.l.b16 %v1703
        %v2519 = vunpack.c.l.b16 %v1704
        %v2520 = vunpack.c.l.b16 %v1705
        %v2521 = vunpack.c.l.b16 %v1706
        %v2522 = vunpack.c.l.b16 %v1707
        %v2523 = vunpack.c.l.b16 %v1708
        %v2524 = vunpack.c.l.b16 %v1709
        %v2525 = vunpack.c.l.b16 %v1710
        %v2526 = vunpack.c.l.b16 %v1711
        %v2527 = vunpack.c.l.b16 %v1712
        %v2528 = vunpack.c.l.b16 %v1713
        %v2529 = vunpack.c.l.b16 %v1714
        %v2530 = vunpack.c.l.b16 %v1715
        %v2531 = vunpack.c.l.b16 %v1716
        %v2532 = vunpack.c.l.b16 %v1717
        %v2533 = vunpack.c.l.b16 %v1718
        %v2534 = vunpack.c.l.b16 %v1719
        %v2535 = vunpack.c.l.b16 %v1720
        %v2536 = vunpack.c.l.b16 %v1721
        %v2537 = vunpack.c.l.b16 %v1722
        %v2538 = vunpack.c.l.b16 %v1723
        %v2539 = vunpack.c.l.b16 %v1724
        %v2540 = vunpack.c.l.b16 %v1725
        %v2541 = vunpack.c.l.b16 %v1726
        %v2542 = vunpack.c.l.b16 %v1727
        %v2543 = vunpack.c.l.b16 %v1728
        %v2544 = vunpack.c.l.b16 %v1729
        %v2545 = vunpack.c.l.b16 %v1730
        %v2546 = vunpack.c.l.b16 %v1731
        %v2547 = vunpack.c.l.b16 %v1732
        %v2548 = vunpack.c.l.b16 %v1733
        %v2549 = vunpack.c.l.b16 %v1734
        %v2550 = vunpack.c.l.b16 %v1735
        %v2551 = vunpack.c.l.b16 %v1736
        %v2552 = vunpack.c.l.b16 %v1737
        %v2553 = vunpack.c.l.b16 %v1738
        %v2554 = vunpack.c.l.b16 %v1739
        %v2555 = vunpack.c.l.b16 %v1740
        %v2556 = vunpack.c.l.b16 %v1741
        %v2557 = vunpack.c.l.b16 %v1742
        %v2558 = vunpack.c.l.b16 %v1743
        %v2559 = vunpack.c.l.b16 %v1744
        %v2560 = vunpack.c.l.b16 %v1745
        %v2561 = vunpack.c.l.b16 %v1746
        %v2562 = vunpack.c.l.b16 %v1747
        %v2563 = vunpack.c.l.b16 %v1748
        %v2564 = vunpack.c.l.b16 %v1749
        %v2565 = vunpack.c.l.b16 %v1750
        %v2566 = vunpack.c.l.b16 %v1751
        %v2567 = vunpack.c.l.b16 %v1752
        %v2568 = vunpack.c.l.b16 %v1753
        %v2569 = vunpack.c.l.b16 %v1754
        %v2570 = vunpack.c.l.b16 %v1755
        %v2571 = vunpack.c.l.b16 %v1756
        %v2572 = vunpack.c.l.b16 %v1757
        %v2573 = vunpack.c.l.b16 %v1758
        %v2574 = vunpack.c.l.b16 %v1759
        %v2575 = vunpack.c.l.b16 %v1760
        %v2576 = vunpack.c.l.b16 %v1761
        %v2577 = vunpack.c.l.b16 %v1762
        %v2578 = vunpack.c.l.b16 %v1763
        %v2579 = vunpack.c.l.b16 %v1764
        %v2580 = vunpack.c.l.b16 %v1765
        %v2581 = vunpack.c.l.b16 %v1766
        %v2582 = vunpack.c.l.b16 %v1767
        %v2583 = vunpack.c.l.b16 %v1768
        %v2584 = vunpack.c.l.b16 %v1769
        %v2585 = vunpack.c.l.b16 %v1770
        %v2586 = vunpack.c.l.b16 %v1771
        %v2587 = vunpack.c.l.b16 %v1772
        %v2588 = vunpack.c.l.b16 %v1773
        %v2589 = vunpack.c.l.b16 %v1774
        %v2590 = vunpack.c.l.b16 %v1775
        %v2591 = vunpack.c.l.b16 %v1776
        %v2592 = vunpack.c.l.b16 %v1777
        %v2593 = vunpack.c.l.b16 %v1778
        %v2594 = vunpack.c.l.b16 %v1779
        %v2595 = vunpack.c.l.b16 %v1780
        %v2596 = vunpack.c.l.b16 %v1781
        %v2597 = vunpack.c.l.b16 %v1782
        %v2598 = vunpack.c.l.b16 %v1783
        %v2599 = vunpack.c.l.b16 %v1784
        %v2600 = vunpack.c.l.b16 %v1785
        %v2601 = vunpack.c.l.b16 %v1786
        %v2602 = vunpack.c.l.b16 %v1787
        %v2603 = vunpack.c.l.b16 %v1788
        %v2604 = vunpack.c.l.b16 %v1789
        %v2605 = vunpack.c.l.b16 %v1790
        %v2606 = vunpack.c.l.b16 %v1791
        %v2607 = vunpack.c.l.b16 %v1792
        %v2608 = vunpack.c.l.b16 %v1793
        %v2609 = vunpack.c.l.b16 %v1794
        %v2610 = vunpack.c.l.b16 %v1795
        %v2611 = vunpack.c.l.b16 %v1796
        %v2612 = vunpack.c.l.b16 %v1797
        %v2613 = vunpack.c.l.b16 %v1798
        %v2614 = vunpack.c.l.b16 %v1799
        %v2615 = vunpack.c.l.b16 %v1800
        %v2616 = vunpack.c.l.b16 %v1801
        %v2617 = vunpack.c.l.b16 %v1802
        %v2618 = vunpack.c.l.b16 %v1803
        %v2619 = vunpack.c.l.b16 %v1804
        %v2620 = vunpack.c.l.b16 %v1805
        %v2621 = vunpack.c.l.b16 %v1806
        %v2622 = vunpack.c.l.b16 %v1807
        %v2623 = vunpack.c.l.b16 %v1808
        %v2624 = vunpack.c.l.b16 %v1809
        %v2625 = vunpack.c.l.b16 %v1810
        %v2626 = vunpack.c.l.b16 %v1811
        %v2627 = vunpack.c.l.b16 %v1812
        %v2628 = vunpack.c.l.b16 %v1813
        %v2629 = vunpack.c.l.b16 %v1814
        %v2630 = vunpack.c.l.b16 %v1815
        %v2631 = vunpack.c.l.b16 %v1816
        %v2632 = vunpack.c.l.b16 %v1817
        %v2633 = vunpack.c.l.b16 %v1818
        %v2634 = vunpack.c.l.b16 %v1819
        %v2635 = vunpack.c.l.b16 %v1820
        %v2636 = vunpack.c.l.b16 %v1821
        %v2637 = vunpack.c.l.b16 %v1822
        %v2638 = vunpack.c.l.b16 %v1823
        %v2639 = vunpack.c.l.b16 %v1824
        %v2640 = vunpack.c.l.b16 %v1825
        %v2641 = vunpack.c.l.b16 %v1826
        %v2642 = vunpack.c.l.b16 %v1827
        %v2643 = vunpack.c.l.b16 %v1828
        %v2644 = vunpack.c.l.b16 %v1829
        %v2645 = vunpack.c.l.b16 %v1830
        %v2646 = vunpack.c.l.b16 %v1831
        %v2647 = vunpack.c.l.b16 %v1832
        %v2648 = vunpack.c.l.b16 %v1833
        %v2649 = vunpack.c.l.b16 %v1834
        %v2650 = vunpack.c.l.b16 %v1835
        %v2651 = vunpack.c.l.b16 %v1836
        %v2652 = vunpack.c.l.b16 %v1837
        %v2653 = vunpack.c.l.b16 %v1838
        %v2654 = vunpack.c.l.b16 %v1839
        %v2655 = vunpack.c.l.b16 %v1840
        %v2656 = vunpack.c.l.b16 %v1841
        %v2657 = vunpack.c.l.b16 %v1842
        %v2658 = vunpack.c.l.b16 %v1843
        %v2659 = vunpack.c.l.b16 %v1844
        %v2660 = vunpack.c.l.b16 %v1845
        %v2661 = vunpack.c.l.b16 %v1846
        %v2662 = vunpack.c.l.b16 %v1847
        %v2663 = vunpack.c.l.b16 %v1848
        %v2664 = vunpack.c.l.b16 %v1849
        %v2665 = vunpack.c.l.b16 %v1850
        %v2666 = vunpack.c.l.b16 %v1851
        %v2667 = vunpack.c.l.b16 %v1852
        %v2668 = vunpack.c.l.b16 %v1853
        %v2669 = vunpack.c.l.b16 %v1854
        %v2670 = vunpack.c.l.b16 %v1855
        %v2671 = vunpack.c.l.b16 %v1856
        %v2672 = vunpack.c.l.b16 %v1857
        %v2673 = vunpack.c.l.b16 %v1858
        %v2674 = vunpack.c.l.b16 %v1859
        %v2675 = vunpack.c.l.b16 %v1860
        %v2676 = vunpack.c.l.b16 %v1861
        %v2677 = vunpack.c.l.b16 %v1862
        %v2678 = vunpack.c.l.b16 %v1863
        %v2679 = vunpack.c.l.b16 %v1864
        %v2680 = vunpack.c.l.b16 %v1865
        %v2681 = vunpack.c.l.b16 %v1866
        %v2682 = vunpack.c.l.b16 %v1867
        %v2683 = vunpack.c.l.b16 %v1868
        %v2684 = vunpack.c.l.b16 %v1869
        %v2685 = vunpack.c.l.b16 %v1870
        %v2686 = vunpack.c.l.b16 %v1871
        %v2687 = vunpack.c.l.b16 %v1872
        %v2688 = vunpack.c.l.b16 %v1873
        %v2689 = vunpack.c.l.b16 %v1874
        %v2690 = vunpack.c.l.b16 %v1875
        %v2691 = vunpack.c.l.b16 %v1876
        %v2692 = vunpack.c.l.b16 %v1877
        %v2693 = vunpack.c.l.b16 %v1878
        %v2694 = vunpack.c.l.b16 %v1879
        %v2695 = vunpack.c.l.b16 %v1880
        %v2696 = vunpack.c.l.b16 %v1881
        %v2697 = vunpack.c.l.b16 %v1882
        %v2698 = vunpack.c.l.b16 %v1883
        %v2699 = vunpack.c.l.b16 %v1884
        %v2700 = vunpack.c.l.b16 %v1885
        %v2701 = vunpack.c.l.b16 %v1886
        %v2702 = vunpack.c.l.b16 %v1887
        %v2703 = vunpack.c.l.b16 %v1888
        %v2704 = vunpack.c.l.b16 %v1889
        %v2705 = vunpack.c.l.b16 %v1890
        %v2706 = vunpack.c.l.b16 %v1891
        %v2707 = vunpack.c.l.b16 %v1892
        %v2708 = vpack.c.b16 %v2385, %v2384
        %v2709 = vpack.c.b16 %v2387, %v2386
        %v2710 = vpack.c.b16 %v2389, %v2388
        %v2711 = vpack.c.b16 %v2391, %v2390
        %v2712 = vpack.c.b16 %v2393, %v2392
        %v2713 = vpack.c.b16 %v2395, %v2394
        %v2714 = vpack.c.b16 %v2397, %v2396
        %v2715 = vpack.c.b16 %v2399, %v2398
        %v2716 = vpack.c.b16 %v2401, %v2400
        %v2717 = vpack.c.b16 %v2403, %v2402
        %v2718 = vpack.c.b16 %v2405, %v2404
        %v2719 = vpack.c.b16 %v2407, %v2406
        %v2720 = vpack.c.b16 %v2409, %v2408
        %v2721 = vpack.c.b16 %v2411, %v2410
        %v2722 = vpack.c.b16 %v2413, %v2412
        %v2723 = vpack.c.b16 %v2415, %v2414
        %v2724 = vpack.c.b16 %v2417, %v2416
        %v2725 = vpack.c.b16 %v2419, %v2418
        %v2726 = vpack.c.b16 %v2421, %v2420
        %v2727 = vpack.c.b16 %v2423, %v2422
        %v2728 = vpack.c.b16 %v2425, %v2424
        %v2729 = vpack.c.b16 %v2427, %v2426
        %v2730 = vpack.c.b16 %v2429, %v2428
        %v2731 = vpack.c.b16 %v2431, %v2430
        %v2732 = vpack.c.b16 %v2433, %v2432
        %v2733 = vpack.c.b16 %v2435, %v2434
        %v2734 = vpack.c.b16 %v2437, %v2436
        %v2735 = vpack.c.b16 %v2439, %v2438
        %v2736 = vpack.c.b16 %v2441, %v2440
        %v2737 = vpack.c.b16 %v2443, %v2442
        %v2738 = vpack.c.b16 %v2445, %v2444
        %v2739 = vpack.c.b16 %v2447, %v2446
        %v2740 = vpack.c.b16 %v2449, %v2448
        %v2741 = vpack.c.b16 %v2451, %v2450
        %v2742 = vpack.c.b16 %v2453, %v2452
        %v2743 = vpack.c.b16 %v2455, %v2454
        %v2744 = vpack.c.b16 %v2457, %v2456
        %v2745 = vpack.c.b16 %v2459, %v2458
        %v2746 = vpack.c.b16 %v2461, %v2460
        %v2747 = vpack.c.b16 %v2463, %v2462
        %v2748 = vpack.c.b16 %v2465, %v2464
        %v2749 = vpack.c.b16 %v2467, %v2466
        %v2750 = vpack.c.b16 %v2469, %v2468
        %v2751 = vpack.c.b16 %v2471, %v2470
        %v2752 = vpack.c.b16 %v2473, %v2472
        %v2753 = vpack.c.b16 %v2475, %v2474
        %v2754 = vpack.c.b16 %v2477, %v2476
        %v2755 = vpack.c.b16 %v2479, %v2478
        %v2756 = vpack.c.b16 %v2481, %v2480
        %v2757 = vpack.c.b16 %v2483, %v2482
        %v2758 = vpack.c.b16 %v2485, %v2484
        %v2759 = vpack.c.b16 %v2487, %v2486
        %v2760 = vpack.c.b16 %v2489, %v2488
        %v2761 = vpack.c.b16 %v2491, %v2490
        %v2762 = vpack.c.b16 %v2493, %v2492
        %v2763 = vpack.c.b16 %v2495, %v2494
        %v2764 = vpack.c.b16 %v2497, %v2496
        %v2765 = vpack.c.b16 %v2499, %v2498
        %v2766 = vpack.c.b16 %v2501, %v2500
        %v2767 = vpack.c.b16 %v2503, %v2502
        %v2768 = vpack.c.b16 %v2505, %v2504
        %v2769 = vpack.c.b16 %v2507, %v2506
        %v2770 = vpack.c.b16 %v2509, %v2508
        %v2771 = vpack.c.b16 %v2511, %v2510
        %v2772 = vpack.c.b16 %v2513, %v2512
        %v2773 = vpack.c.b16 %v2515, %v2514
        %v2774 = vpack.c.b16 %v2517, %v2516
        %v2775 = vpack.c.b16 %v2519, %v2518
        %v2776 = vpack.c.b16 %v2521, %v2520
        %v2777 = vpack.c.b16 %v2523, %v2522
        %v2778 = vpack.c.b16 %v2525, %v2524
        %v2779 = vpack.c.b16 %v2527, %v2526
        %v2780 = vpack.c.b16 %v2529, %v2528
        %v2781 = vpack.c.b16 %v2531, %v2530
        %v2782 = vpack.c.b16 %v2533, %v2532
        %v2783 = vpack.c.b16 %v2535, %v2534
        %v2784 = vpack.c.b16 %v2537, %v2536
        %v2785 = vpack.c.b16 %v2539, %v2538
        %v2786 = vpack.c.b16 %v2541, %v2540
        %v2787 = vpack.c.b16 %v2543, %v2542
        %v2788 = vpack.c.b16 %v2545, %v2544
        %v2789 = vpack.c.b16 %v2547, %v2546
        %v2790 = vpack.c.b16 %v2549, %v2548
        %v2791 = vpack.c.b16 %v2551, %v2550
        %v2792 = vpack.c.b16 %v2553, %v2552
        %v2793 = vpack.c.b16 %v2555, %v2554
        %v2794 = vpack.c.b16 %v2557, %v2556
        %v2795 = vpack.c.b16 %v2559, %v2558
        %v2796 = vpack.c.b16 %v2561, %v2560
        %v2797 = vpack.c.b16 %v2563, %v2562
        %v2798 = vpack.c.b16 %v2565, %v2564
        %v2799 = vpack.c.b16 %v2567, %v2566
        %v2800 = vpack.c.b16 %v2569, %v2568
        %v2801 = vpack.c.b16 %v2571, %v2570
        %v2802 = vpack.c.b16 %v2573, %v2572
        %v2803 = vpack.c.b16 %v2575, %v2574
        %v2804 = vpack.c.b16 %v2577, %v2576
        %v2805 = vpack.c.b16 %v2579, %v2578
        %v2806 = vpack.c.b16 %v2581, %v2580
        %v2807 = vpack.c.b16 %v2583, %v2582
        %v2808 = vpack.c.b16 %v2585, %v2584
        %v2809 = vpack.c.b16 %v2587, %v2586
        %v2810 = vpack.c.b16 %v2589, %v2588
        %v2811 = vpack.c.b16 %v2591, %v2590
        %v2812 = vpack.c.b16 %v2593, %v2592
        %v2813 = vpack.c.b16 %v2595, %v2594
        %v2814 = vpack.c.b16 %v2597, %v2596
        %v2815 = vpack.c.b16 %v2599, %v2598
        %v2816 = vpack.c.b16 %v2601, %v2600
        %v2817 = vpack.c.b16 %v2603, %v2602
        %v2818 = vpack.c.b16 %v2605, %v2604
        %v2819 = vpack.c.b16 %v2607, %v2606
        %v2820 = vpack.c.b16 %v2609, %v2608
        %v2821 = vpack.c.b16 %v2611, %v2610
        %v2822 = vpack.c.b16 %v2613, %v2612
        %v2823 = vpack.c.b16 %v2615, %v2614
        %v2824 = vpack.c.b16 %v2617, %v2616
        %v2825 = vpack.c.b16 %v2619, %v2618
        %v2826 = vpack.c.b16 %v2621, %v2620
        %v2827 = vpack.c.b16 %v2623, %v2622
        %v2828 = vpack.c.b16 %v2625, %v2624
        %v2829 = vpack.c.b16 %v2627, %v2626
        %v2830 = vpack.c.b16 %v2629, %v2628
        %v2831 = vpack.c.b16 %v2631, %v2630
        %v2832 = vpack.c.b16 %v2633, %v2632
        %v2833 = vpack.c.b16 %v2635, %v2634
        %v2834 = vpack.c.b16 %v2637, %v2636
        %v2835 = vpack.c.b16 %v2639, %v2638
        %v2836 = vpack.c.b16 %v2641, %v2640
        %v2837 = vpack.c.b16 %v2643, %v2642
        %v2838 = vpack.c.b16 %v2645, %v2644
        %v2839 = vpack.c.b16 %v2647, %v2646
        %v2840 = vpack.c.b16 %v2649, %v2648
        %v2841 = vpack.c.b16 %v2651, %v2650
        %v2842 = vpack.c.b16 %v2653, %v2652
        %v2843 = vpack.c.b16 %v2655, %v2654
        %v2844 = vpack.c.b16 %v2657, %v2656
        %v2845 = vpack.c.b16 %v2659, %v2658
        %v2846 = vpack.c.b16 %v2661, %v2660
        %v2847 = vpack.c.b16 %v2663, %v2662
        %v2848 = vpack.c.b16 %v2665, %v2664
        %v2849 = vpack.c.b16 %v2667, %v2666
        %v2850 = vpack.c.b16 %v2669, %v2668
        %v2851 = vpack.c.b16 %v2671, %v2670
        %v2852 = vpack.c.b16 %v2673, %v2672
        %v2853 = vpack.c.b16 %v2675, %v2674
        %v2854 = vpack.c.b16 %v2677, %v2676
        %v2855 = vpack.c.b16 %v2679, %v2678
        %v2856 = vpack.c.b16 %v2681, %v2680
        %v2857 = vpack.c.b16 %v2683, %v2682
        %v2858 = vpack.c.b16 %v2685, %v2684
        %v2859 = vpack.c.b16 %v2687, %v2686
        %v2860 = vpack.c.b16 %v2689, %v2688
        %v2861 = vpack.c.b16 %v2691, %v2690
        %v2862 = vpack.c.b16 %v2693, %v2692
        %v2863 = vpack.c.b16 %v2695, %v2694
        %v2864 = vpack.c.b16 %v2697, %v2696
        %v2865 = vpack.c.b16 %v2699, %v2698
        %v2866 = vpack.c.b16 %v2701, %v2700
        %v2867 = vpack.c.b16 %v2703, %v2702
        %v2868 = vpack.c.b16 %v2705, %v2704
        %v2869 = vpack.c.b16 %v2707, %v2706
        %vm3032 = vcmask 261120
        %v3034 = vsel %vm3032, %v2030, 0
        %3036 = vmatprep.subr.bf16.mxu0 0
        %3037 = vmatpush1.bf16.msra.mxu0 %v2708
        %3038 = vmatprep.subr.bf16.mxu0 0
        %3039 = vmatpush1.bf16.msra.mxu0 %v2709
        %3040 = vmatprep.subr.bf16.mxu0 0
        %3041 = vmatpush1.bf16.msra.mxu0 %v2710
        %3042 = vmatprep.subr.bf16.mxu0 0
        %3043 = vmatpush1.bf16.msra.mxu0 %v2711
        %3044 = vmatprep.subr.bf16.mxu0 0
        %3045 = vmatpush1.bf16.msra.mxu0 %v2712
        %3046 = vmatprep.subr.bf16.mxu0 0
        %3047 = vmatpush1.bf16.msra.mxu0 %v2713
        %3048 = vmatprep.subr.bf16.mxu0 0
        %3049 = vmatpush1.bf16.msra.mxu0 %v2714
        %3050 = vmatprep.subr.bf16.mxu0 0
        %3051 = vmatpush1.bf16.msra.mxu0 %v2715
        %3052 = vmatprep.subr.bf16.mxu0 0
        %3053 = vmatpush1.bf16.msra.mxu0 %v2716
        %3054 = vmatprep.subr.bf16.mxu0 0
        %3055 = vmatpush1.bf16.msra.mxu0 %v2717
        %3056 = vmatprep.subr.bf16.mxu0 0
        %3057 = vmatpush1.bf16.msra.mxu0 %v2718
        %3058 = vmatprep.subr.bf16.mxu0 0
        %3059 = vmatpush1.bf16.msra.mxu0 %v2719
        %3060 = vmatprep.subr.bf16.mxu0 0
        %3061 = vmatpush1.bf16.msra.mxu0 %v2720
        %3062 = vmatprep.subr.bf16.mxu0 0
        %3063 = vmatpush1.bf16.msra.mxu0 %v2721
        %3064 = vmatprep.subr.bf16.mxu0 0
        %3065 = vmatpush1.bf16.msra.mxu0 %v2722
        %3066 = vmatprep.subr.bf16.mxu0 0
        %3067 = vmatpush1.bf16.msra.mxu0 %v2723
        %3068 = vmatprep.mubr.bf16.mxu0 %v1940
        %3069 = vmatmul.mubr.bf16.gmra.mrb[0].mxu0 %v1926
        %v3070 = vpop.f32.mrb[0].mxu0
        %v3071 = vadd.f32 %v1898, %v3070
        %v3072 = vpop.f32.mrb[0].mxu0
        %v3073 = vpop.f32.mrb[0].mxu0
        %v3074 = vpop.f32.mrb[0].mxu0
        %3075 = vdwg.mxu0
        %3076 = vmatprep.subr.bf16.mxu0 0
        %3077 = vmatpush1.bf16.msra.mxu0 %v2724
        %3078 = vmatprep.subr.bf16.mxu0 0
        %3079 = vmatpush1.bf16.msra.mxu0 %v2725
        %3080 = vmatprep.subr.bf16.mxu0 0
        %3081 = vmatpush1.bf16.msra.mxu0 %v2726
        %3082 = vmatprep.subr.bf16.mxu0 0
        %3083 = vmatpush1.bf16.msra.mxu0 %v2727
        %3084 = vmatprep.subr.bf16.mxu0 0
        %3085 = vmatpush1.bf16.msra.mxu0 %v2728
        %3086 = vmatprep.subr.bf16.mxu0 0
        %3087 = vmatpush1.bf16.msra.mxu0 %v2729
        %3088 = vmatprep.subr.bf16.mxu0 0
        %3089 = vmatpush1.bf16.msra.mxu0 %v2730
        %3090 = vmatprep.subr.bf16.mxu0 0
        %3091 = vmatpush1.bf16.msra.mxu0 %v2731
        %3092 = vmatprep.subr.bf16.mxu0 0
        %3093 = vmatpush1.bf16.msra.mxu0 %v2732
        %3094 = vmatprep.subr.bf16.mxu0 0
        %3095 = vmatpush1.bf16.msra.mxu0 %v2733
        %3096 = vmatprep.subr.bf16.mxu0 0
        %3097 = vmatpush1.bf16.msra.mxu0 %v2734
        %3098 = vmatprep.subr.bf16.mxu0 0
        %3099 = vmatpush1.bf16.msra.mxu0 %v2735
        %3100 = vmatprep.subr.bf16.mxu0 0
        %3101 = vmatpush1.bf16.msra.mxu0 %v2736
        %3102 = vmatprep.subr.bf16.mxu0 0
        %3103 = vmatpush1.bf16.msra.mxu0 %v2737
        %3104 = vmatprep.subr.bf16.mxu0 0
        %3105 = vmatpush1.bf16.msra.mxu0 %v2738
        %3106 = vmatprep.subr.bf16.mxu0 0
        %3107 = vmatpush1.bf16.msra.mxu0 %v2739
        %3108 = vmatprep.mubr.bf16.mxu0 %v1950
        %3109 = vmatmul.mubr.bf16.gmra.mrb[0].mxu0 %v1948
        %v3110 = vpop.f32.mrb[0].mxu0
        %v3111 = vadd.f32 %v3071, %v3110
        %v3112 = vpop.f32.mrb[0].mxu0
        %v3113 = vpop.f32.mrb[0].mxu0
        %v3114 = vpop.f32.mrb[0].mxu0
        %3115 = vdwg.mxu0
        %3116 = vmatprep.subr.bf16.mxu0 0
        %3117 = vmatpush1.bf16.msra.mxu0 %v2740
        %3118 = vmatprep.subr.bf16.mxu0 0
        %3119 = vmatpush1.bf16.msra.mxu0 %v2741
        %3120 = vmatprep.subr.bf16.mxu0 0
        %3121 = vmatpush1.bf16.msra.mxu0 %v2742
        %3122 = vmatprep.subr.bf16.mxu0 0
        %3123 = vmatpush1.bf16.msra.mxu0 %v2743
        %3124 = vmatprep.subr.bf16.mxu0 0
        %3125 = vmatpush1.bf16.msra.mxu0 %v2744
        %3126 = vmatprep.subr.bf16.mxu0 0
        %3127 = vmatpush1.bf16.msra.mxu0 %v2745
        %3128 = vmatprep.subr.bf16.mxu0 0
        %3129 = vmatpush1.bf16.msra.mxu0 %v2746
        %3130 = vmatprep.subr.bf16.mxu0 0
        %3131 = vmatpush1.bf16.msra.mxu0 %v2747
        %3132 = vmatprep.subr.bf16.mxu0 0
        %3133 = vmatpush1.bf16.msra.mxu0 %v2748
        %3134 = vmatprep.subr.bf16.mxu0 0
        %3135 = vmatpush1.bf16.msra.mxu0 %v2749
        %3136 = vmatprep.subr.bf16.mxu0 0
        %3137 = vmatpush1.bf16.msra.mxu0 %v2750
        %3138 = vmatprep.subr.bf16.mxu0 0
        %3139 = vmatpush1.bf16.msra.mxu0 %v2751
        %3140 = vmatprep.subr.bf16.mxu0 0
        %3141 = vmatpush1.bf16.msra.mxu0 %v2752
        %3142 = vmatprep.subr.bf16.mxu0 0
        %3143 = vmatpush1.bf16.msra.mxu0 %v2753
        %3144 = vmatprep.subr.bf16.mxu0 0
        %3145 = vmatpush1.bf16.msra.mxu0 %v2754
        %3146 = vmatprep.subr.bf16.mxu0 0
        %3147 = vmatpush1.bf16.msra.mxu0 %v2755
        %3148 = vmatprep.mubr.bf16.mxu0 %v1947
        %3149 = vmatmul.mubr.bf16.gmra.mrb[0].mxu0 %v1933
        %v3150 = vpop.f32.mrb[0].mxu0
        %v3151 = vadd.f32 %v3111, %v3150
        %v3152 = vpop.f32.mrb[0].mxu0
        %v3153 = vpop.f32.mrb[0].mxu0
        %v3154 = vpop.f32.mrb[0].mxu0
        %3155 = vdwg.mxu0
        %3156 = vmatprep.subr.bf16.mxu0 0
        %3157 = vmatpush1.bf16.msra.mxu0 %v2756
        %3158 = vmatprep.subr.bf16.mxu0 0
        %3159 = vmatpush1.bf16.msra.mxu0 %v2757
        %3160 = vmatprep.subr.bf16.mxu0 0
        %3161 = vmatpush1.bf16.msra.mxu0 %v2758
        %3162 = vmatprep.subr.bf16.mxu0 0
        %3163 = vmatpush1.bf16.msra.mxu0 %v2759
        %3164 = vmatprep.subr.bf16.mxu0 0
        %3165 = vmatpush1.bf16.msra.mxu0 %v2760
        %3166 = vmatprep.subr.bf16.mxu0 0
        %3167 = vmatpush1.bf16.msra.mxu0 %v2761
        %3168 = vmatprep.subr.bf16.mxu0 0
        %3169 = vmatpush1.bf16.msra.mxu0 %v2762
        %3170 = vmatprep.subr.bf16.mxu0 0
        %3171 = vmatpush1.bf16.msra.mxu0 %v2763
        %3172 = vmatprep.subr.bf16.mxu0 0
        %3173 = vmatpush1.bf16.msra.mxu0 %v2764
        %3174 = vmatprep.subr.bf16.mxu0 0
        %3175 = vmatpush1.bf16.msra.mxu0 %v2765
        %3176 = vmatprep.subr.bf16.mxu0 0
        %3177 = vmatpush1.bf16.msra.mxu0 %v2766
        %3178 = vmatprep.subr.bf16.mxu0 0
        %3179 = vmatpush1.bf16.msra.mxu0 %v2767
        %3180 = vmatprep.subr.bf16.mxu0 0
        %3181 = vmatpush1.bf16.msra.mxu0 %v2768
        %3182 = vmatprep.subr.bf16.mxu0 0
        %3183 = vmatpush1.bf16.msra.mxu0 %v2769
        %3184 = vmatprep.subr.bf16.mxu0 0
        %3185 = vmatpush1.bf16.msra.mxu0 %v2770
        %3186 = vmatprep.subr.bf16.mxu0 0
        %3187 = vmatpush1.bf16.msra.mxu0 %v2771
        %3188 = vmatprep.mubr.bf16.mxu0 %v1951
        %3189 = vmatmul.mubr.bf16.gmra.mrb[0].mxu0 %v1949
        %v3190 = vpop.f32.mrb[0].mxu0
        %v3191 = vadd.f32 %v3151, %v3190
        %v3192 = vpop.f32.mrb[0].mxu0
        %v3193 = vpop.f32.mrb[0].mxu0
        %v3194 = vpop.f32.mrb[0].mxu0
        %3195 = vdwg.mxu0
        %3196 = vmatprep.subr.bf16.mxu0 0
        %3197 = vmatpush1.bf16.msra.mxu0 %v2772
        %3198 = vmatprep.subr.bf16.mxu0 0
        %3199 = vmatpush1.bf16.msra.mxu0 %v2773
        %3200 = vmatprep.subr.bf16.mxu0 0
        %3201 = vmatpush1.bf16.msra.mxu0 %v2774
        %3202 = vmatprep.subr.bf16.mxu0 0
        %3203 = vmatpush1.bf16.msra.mxu0 %v2775
        %3204 = vmatprep.subr.bf16.mxu0 0
        %3205 = vmatpush1.bf16.msra.mxu0 %v2776
        %3206 = vmatprep.subr.bf16.mxu0 0
        %3207 = vmatpush1.bf16.msra.mxu0 %v2777
        %3208 = vmatprep.subr.bf16.mxu0 0
        %3209 = vmatpush1.bf16.msra.mxu0 %v2778
        %3210 = vmatprep.subr.bf16.mxu0 0
        %3211 = vmatpush1.bf16.msra.mxu0 %v2779
        %3212 = vmatprep.subr.bf16.mxu0 0
        %3213 = vmatpush1.bf16.msra.mxu0 %v2780
        %3214 = vmatprep.subr.bf16.mxu0 0
        %3215 = vmatpush1.bf16.msra.mxu0 %v2781
        %3216 = vmatprep.subr.bf16.mxu0 0
        %3217 = vmatpush1.bf16.msra.mxu0 %v2782
        %3218 = vmatprep.subr.bf16.mxu0 0
        %3219 = vmatpush1.bf16.msra.mxu0 %v2783
        %3220 = vmatprep.subr.bf16.mxu0 0
        %3221 = vmatpush1.bf16.msra.mxu0 %v2784
        %3222 = vmatprep.subr.bf16.mxu0 0
        %3223 = vmatpush1.bf16.msra.mxu0 %v2785
        %3224 = vmatprep.subr.bf16.mxu0 0
        %3225 = vmatpush1.bf16.msra.mxu0 %v2786
        %3226 = vmatprep.subr.bf16.mxu0 0
        %3227 = vmatpush1.bf16.msra.mxu0 %v2787
        %3228 = vmatprep.mubr.bf16.mxu0 %v1989
        %3229 = vmatmul.mubr.bf16.gmra.mrb[0].mxu0 %v1975
        %v3230 = vpop.f32.mrb[0].mxu0
        %v3231 = vadd.f32 %v3191, %v3230
        %v3232 = vpop.f32.mrb[0].mxu0
        %v3233 = vpop.f32.mrb[0].mxu0
        %v3234 = vpop.f32.mrb[0].mxu0
        %3235 = vdwg.mxu0
        %3236 = vmatprep.subr.bf16.mxu0 0
        %3237 = vmatpush1.bf16.msra.mxu0 %v2788
        %3238 = vmatprep.subr.bf16.mxu0 0
        %3239 = vmatpush1.bf16.msra.mxu0 %v2789
        %3240 = vmatprep.subr.bf16.mxu0 0
        %3241 = vmatpush1.bf16.msra.mxu0 %v2790
        %3242 = vmatprep.subr.bf16.mxu0 0
        %3243 = vmatpush1.bf16.msra.mxu0 %v2791
        %3244 = vmatprep.subr.bf16.mxu0 0
        %3245 = vmatpush1.bf16.msra.mxu0 %v2792
        %3246 = vmatprep.subr.bf16.mxu0 0
        %3247 = vmatpush1.bf16.msra.mxu0 %v2793
        %3248 = vmatprep.subr.bf16.mxu0 0
        %3249 = vmatpush1.bf16.msra.mxu0 %v2794
        %3250 = vmatprep.subr.bf16.mxu0 0
        %3251 = vmatpush1.bf16.msra.mxu0 %v2795
        %3252 = vmatprep.subr.bf16.mxu0 0
        %3253 = vmatpush1.bf16.msra.mxu0 %v2796
        %3254 = vmatprep.subr.bf16.mxu0 0
        %3255 = vmatpush1.bf16.msra.mxu0 %v2797
        %3256 = vmatprep.subr.bf16.mxu0 0
        %3257 = vmatpush1.bf16.msra.mxu0 %v2798
        %3258 = vmatprep.subr.bf16.mxu0 0
        %3259 = vmatpush1.bf16.msra.mxu0 %v2799
        %3260 = vmatprep.subr.bf16.mxu0 0
        %3261 = vmatpush1.bf16.msra.mxu0 %v2800
        %3262 = vmatprep.subr.bf16.mxu0 0
        %3263 = vmatpush1.bf16.msra.mxu0 %v2801
        %3264 = vmatprep.subr.bf16.mxu0 0
        %3265 = vmatpush1.bf16.msra.mxu0 %v2802
        %3266 = vmatprep.subr.bf16.mxu0 0
        %3267 = vmatpush1.bf16.msra.mxu0 %v2803
        %3268 = vmatprep.mubr.bf16.mxu0 %v1999
        %3269 = vmatmul.mubr.bf16.gmra.mrb[0].mxu0 %v1997
        %v3270 = vpop.f32.mrb[0].mxu0
        %v3271 = vadd.f32 %v3231, %v3270
        %v3272 = vpop.f32.mrb[0].mxu0
        %v3273 = vpop.f32.mrb[0].mxu0
        %v3274 = vpop.f32.mrb[0].mxu0
        %3275 = vdwg.mxu0
        %3276 = vmatprep.subr.bf16.mxu0 0
        %3277 = vmatpush1.bf16.msra.mxu0 %v2804
        %3278 = vmatprep.subr.bf16.mxu0 0
        %3279 = vmatpush1.bf16.msra.mxu0 %v2805
        %3280 = vmatprep.subr.bf16.mxu0 0
        %3281 = vmatpush1.bf16.msra.mxu0 %v2806
        %3282 = vmatprep.subr.bf16.mxu0 0
        %3283 = vmatpush1.bf16.msra.mxu0 %v2807
        %3284 = vmatprep.subr.bf16.mxu0 0
        %3285 = vmatpush1.bf16.msra.mxu0 %v2808
        %3286 = vmatprep.subr.bf16.mxu0 0
        %3287 = vmatpush1.bf16.msra.mxu0 %v2809
        %3288 = vmatprep.subr.bf16.mxu0 0
        %3289 = vmatpush1.bf16.msra.mxu0 %v2810
        %3290 = vmatprep.subr.bf16.mxu0 0
        %3291 = vmatpush1.bf16.msra.mxu0 %v2811
        %3292 = vmatprep.subr.bf16.mxu0 0
        %3293 = vmatpush1.bf16.msra.mxu0 %v2812
        %3294 = vmatprep.subr.bf16.mxu0 0
        %3295 = vmatpush1.bf16.msra.mxu0 %v2813
        %3296 = vmatprep.subr.bf16.mxu0 0
        %3297 = vmatpush1.bf16.msra.mxu0 %v2814
        %3298 = vmatprep.subr.bf16.mxu0 0
        %3299 = vmatpush1.bf16.msra.mxu0 %v2815
        %3300 = vmatprep.subr.bf16.mxu0 0
        %3301 = vmatpush1.bf16.msra.mxu0 %v2816
        %3302 = vmatprep.subr.bf16.mxu0 0
        %3303 = vmatpush1.bf16.msra.mxu0 %v2817
        %3304 = vmatprep.subr.bf16.mxu0 0
        %3305 = vmatpush1.bf16.msra.mxu0 %v2818
        %3306 = vmatprep.subr.bf16.mxu0 0
        %3307 = vmatpush1.bf16.msra.mxu0 %v2819
        %3308 = vmatprep.mubr.bf16.mxu0 %v1996
        %3309 = vmatmul.mubr.bf16.gmra.mrb[0].mxu0 %v1982
        %v3310 = vpop.f32.mrb[0].mxu0
        %v3311 = vadd.f32 %v3271, %v3310
        %v3312 = vpop.f32.mrb[0].mxu0
        %v3313 = vpop.f32.mrb[0].mxu0
        %v3314 = vpop.f32.mrb[0].mxu0
        %3315 = vdwg.mxu0
        %3316 = vmatprep.subr.bf16.mxu0 0
        %3317 = vmatpush1.bf16.msra.mxu0 %v2820
        %3318 = vmatprep.subr.bf16.mxu0 0
        %3319 = vmatpush1.bf16.msra.mxu0 %v2821
        %3320 = vmatprep.subr.bf16.mxu0 0
        %3321 = vmatpush1.bf16.msra.mxu0 %v2822
        %3322 = vmatprep.subr.bf16.mxu0 0
        %3323 = vmatpush1.bf16.msra.mxu0 %v2823
        %3324 = vmatprep.subr.bf16.mxu0 0
        %3325 = vmatpush1.bf16.msra.mxu0 %v2824
        %3326 = vmatprep.subr.bf16.mxu0 0
        %3327 = vmatpush1.bf16.msra.mxu0 %v2825
        %3328 = vmatprep.subr.bf16.mxu0 0
        %3329 = vmatpush1.bf16.msra.mxu0 %v2826
        %3330 = vmatprep.subr.bf16.mxu0 0
        %3331 = vmatpush1.bf16.msra.mxu0 %v2827
        %3332 = vmatprep.subr.bf16.mxu0 0
        %3333 = vmatpush1.bf16.msra.mxu0 %v2828
        %3334 = vmatprep.subr.bf16.mxu0 0
        %3335 = vmatpush1.bf16.msra.mxu0 %v2829
        %3336 = vmatprep.subr.bf16.mxu0 0
        %3337 = vmatpush1.bf16.msra.mxu0 %v2830
        %3338 = vmatprep.subr.bf16.mxu0 0
        %3339 = vmatpush1.bf16.msra.mxu0 %v2831
        %3340 = vmatprep.subr.bf16.mxu0 0
        %3341 = vmatpush1.bf16.msra.mxu0 %v2832
        %3342 = vmatprep.subr.bf16.mxu0 0
        %3343 = vmatpush1.bf16.msra.mxu0 %v2833
        %3344 = vmatprep.subr.bf16.mxu0 0
        %3345 = vmatpush1.bf16.msra.mxu0 %v2834
        %3346 = vmatprep.subr.bf16.mxu0 0
        %3347 = vmatpush1.bf16.msra.mxu0 %v2835
        %3348 = vmatprep.mubr.bf16.mxu0 %v2000
        %3349 = vmatmul.mubr.bf16.gmra.mrb[0].mxu0 %v1998
        %v3350 = vpop.f32.mrb[0].mxu0
        %v3351 = vadd.f32 %v3311, %v3350
        %v3352 = vpop.f32.mrb[0].mxu0
        %v3353 = vpop.f32.mrb[0].mxu0
        %v3354 = vpop.f32.mrb[0].mxu0
        %3355 = vdwg.mxu0
        %3356 = vmatprep.subr.bf16.mxu0 0
        %3357 = vmatpush1.bf16.msra.mxu0 %v2836
        %3358 = vmatprep.subr.bf16.mxu0 0
        %3359 = vmatpush1.bf16.msra.mxu0 %v2837
        %3360 = vmatprep.subr.bf16.mxu0 0
        %3361 = vmatpush1.bf16.msra.mxu0 %v2838
        %3362 = vmatprep.subr.bf16.mxu0 0
        %3363 = vmatpush1.bf16.msra.mxu0 %v2839
        %3364 = vmatprep.subr.bf16.mxu0 0
        %3365 = vmatpush1.bf16.msra.mxu0 %v2840
        %3366 = vmatprep.subr.bf16.mxu0 0
        %3367 = vmatpush1.bf16.msra.mxu0 %v2841
        %3368 = vmatprep.subr.bf16.mxu0 0
        %3369 = vmatpush1.bf16.msra.mxu0 %v2842
        %3370 = vmatprep.subr.bf16.mxu0 0
        %3371 = vmatpush1.bf16.msra.mxu0 %v2843
        %3372 = vmatprep.subr.bf16.mxu0 0
        %3373 = vmatpush1.bf16.msra.mxu0 %v2844
        %3374 = vmatprep.subr.bf16.mxu0 0
        %3375 = vmatpush1.bf16.msra.mxu0 %v2845
        %3376 = vmatprep.subr.bf16.mxu0 0
        %3377 = vmatpush1.bf16.msra.mxu0 %v2846
        %3378 = vmatprep.subr.bf16.mxu0 0
        %3379 = vmatpush1.bf16.msra.mxu0 %v2847
        %3380 = vmatprep.subr.bf16.mxu0 0
        %3381 = vmatpush1.bf16.msra.mxu0 %v2848
        %3382 = vmatprep.subr.bf16.mxu0 0
        %3383 = vmatpush1.bf16.msra.mxu0 %v2849
        %3384 = vmatprep.subr.bf16.mxu0 0
        %3385 = vmatpush1.bf16.msra.mxu0 %v2850
        %3386 = vmatprep.subr.bf16.mxu0 0
        %3387 = vmatpush1.bf16.msra.mxu0 %v2851
        %3388 = vmatprep.mubr.bf16.mxu0 %v2037
        %3389 = vmatmul.mubr.bf16.gmra.mrb[0].mxu0 %v2023
        %v3390 = vpop.f32.mrb[0].mxu0
        %v3391 = vadd.f32 %v3351, %v3390
        %v3392 = vpop.f32.mrb[0].mxu0
        %v3393 = vpop.f32.mrb[0].mxu0
        %v3394 = vpop.f32.mrb[0].mxu0
        %3395 = vdwg.mxu0
        %3396 = vmatprep.subr.bf16.mxu0 0
        %3397 = vmatpush1.bf16.msra.mxu0 %v2852
        %3398 = vmatprep.subr.bf16.mxu0 0
        %3399 = vmatpush1.bf16.msra.mxu0 %v2853
        %3400 = vmatprep.subr.bf16.mxu0 0
        %3401 = vmatpush1.bf16.msra.mxu0 %v2854
        %3402 = vmatprep.subr.bf16.mxu0 0
        %3403 = vmatpush1.bf16.msra.mxu0 %v2855
        %3404 = vmatprep.subr.bf16.mxu0 0
        %3405 = vmatpush1.bf16.msra.mxu0 %v2856
        %3406 = vmatprep.subr.bf16.mxu0 0
        %3407 = vmatpush1.bf16.msra.mxu0 %v2857
        %3408 = vmatprep.subr.bf16.mxu0 0
        %3409 = vmatpush1.bf16.msra.mxu0 %v2858
        %3410 = vmatprep.subr.bf16.mxu0 0
        %3411 = vmatpush1.bf16.msra.mxu0 %v2859
        %3412 = vmatprep.subr.bf16.mxu0 0
        %3413 = vmatpush1.bf16.msra.mxu0 %v2860
        %3414 = vmatprep.subr.bf16.mxu0 0
        %3415 = vmatpush1.bf16.msra.mxu0 %v2861
        %3416 = vmatprep.subr.bf16.mxu0 0
        %3417 = vmatpush1.bf16.msra.mxu0 %v2862
        %3418 = vmatprep.subr.bf16.mxu0 0
        %3419 = vmatpush1.bf16.msra.mxu0 %v2863
        %3420 = vmatprep.subr.bf16.mxu0 0
        %3421 = vmatpush1.bf16.msra.mxu0 %v2864
        %3422 = vmatprep.subr.bf16.mxu0 0
        %3423 = vmatpush1.bf16.msra.mxu0 %v2865
        %3424 = vmatprep.subr.bf16.mxu0 0
        %3425 = vmatpush1.bf16.msra.mxu0 %v2866
        %3426 = vmatprep.subr.bf16.mxu0 0
        %3427 = vmatpush1.bf16.msra.mxu0 %v2867
        %3428 = vmatprep.mubr.bf16.mxu0 %v2039
        %3429 = vmatmul.mubr.bf16.gmra.mrb[0].mxu0 %v2038
        %v3430 = vpop.f32.mrb[0].mxu0
        %v3431 = vadd.f32 %v3391, %v3430
        %v3432 = vpop.f32.mrb[0].mxu0
        %v3433 = vpop.f32.mrb[0].mxu0
        %v3434 = vpop.f32.mrb[0].mxu0
        %3435 = vdwg.mxu0
        %3436 = vmatprep.subr.bf16.mxu0 0
        %3437 = vmatpush1.bf16.msra.mxu0 %v2868
        %3438 = vmatprep.subr.bf16.mxu0 0
        %3439 = vmatpush1.bf16.msra.mxu0 %v2869
        %3440 = vmatprep.subr.bf16.mxu0 0
        %3441 = vmatpush1.bf16.msra.mxu0 0
        %3442 = vmatprep.subr.bf16.mxu0 0
        %3443 = vmatpush1.bf16.msra.mxu0 0
        %3444 = vmatprep.subr.bf16.mxu0 0
        %3445 = vmatpush1.bf16.msra.mxu0 0
        %3446 = vmatprep.subr.bf16.mxu0 0
        %3447 = vmatpush1.bf16.msra.mxu0 0
        %3448 = vmatprep.subr.bf16.mxu0 0
        %3449 = vmatpush1.bf16.msra.mxu0 0
        %3450 = vmatprep.subr.bf16.mxu0 0
        %3451 = vmatpush1.bf16.msra.mxu0 0
        %3452 = vmatprep.subr.bf16.mxu0 0
        %3453 = vmatpush1.bf16.msra.mxu0 0
        %3454 = vmatprep.subr.bf16.mxu0 0
        %3455 = vmatpush1.bf16.msra.mxu0 0
        %3456 = vmatprep.subr.bf16.mxu0 0
        %3457 = vmatpush1.bf16.msra.mxu0 0
        %3458 = vmatprep.subr.bf16.mxu0 0
        %3459 = vmatpush1.bf16.msra.mxu0 0
        %3460 = vmatprep.subr.bf16.mxu0 0
        %3461 = vmatpush1.bf16.msra.mxu0 0
        %3462 = vmatprep.subr.bf16.mxu0 0
        %3463 = vmatpush1.bf16.msra.mxu0 0
        %3464 = vmatprep.subr.bf16.mxu0 0
        %3465 = vmatpush1.bf16.msra.mxu0 0
        %3466 = vmatprep.subr.bf16.mxu0 0
        %3467 = vmatpush1.bf16.msra.mxu0 0
        %3468 = vmatprep.mubr.bf16.mxu0 0
        %3469 = vmatmul.mubr.bf16.gmra.mrb[0].mxu0 %v3034
        %v3470 = vpop.f32.mrb[0].mxu0
        %v3471 = vadd.f32 %v3431, %v3470
        %v3472 = vpop.f32.mrb[0].mxu0
        %v3473 = vpop.f32.mrb[0].mxu0
        %v3474 = vpop.f32.mrb[0].mxu0
        %3475 = vdwg.mxu0
        %v3476 = vmax.f32 %v3471, 0.0
        %v3477 = vpack.c.bf16 %v3476, %v3476
        %v3478 = vld [vmem:[%s1559] sm:$0xf]
        %v3479 = vld [vmem:[%s1559 + $0x4] sm:$0xf]
        %v3480 = vld [vmem:[%s1559 + $0x8] sm:$0xf]
        %v3481 = vld [vmem:[%s1559 + $0xc] sm:$0xf]
        %v3482 = vld [vmem:[%s1559 + $0x10] sm:$0xf]
        %v3483 = vld [vmem:[%s1559 + $0x14] sm:$0xf]
        %v3484 = vld [vmem:[%s1559 + $0x18] sm:$0xf]
        %v3485 = vld [vmem:[%s1559 + $0x1c] sm:$0xf]
        %v3486 = vld [vmem:[%s1559 + $0x20] sm:$0xf]
        %v3487 = vld [vmem:[%s1559 + $0x24] sm:$0xf]
        %v3488 = vld [vmem:[%s1559 + $0x28] sm:$0xf]
        %v3489 = vld [vmem:[%s1559 + $0x2c] sm:$0xf]
        %v3490 = vld [vmem:[%s1559 + $0x30] sm:$0xf]
        %v3491 = vld [vmem:[%s1559 + $0x34] sm:$0xf]
        %v3492 = vld [vmem:[%s1559 + $0x38] sm:$0xf]
        %v3493 = vld [vmem:[%s1559 + $0x3c] sm:$0xf]
        %v3510 = vunpack.c.l.b16 %v3478
        %v3511 = vunpack.c.l.b16 %v3479
        %v3512 = vunpack.c.l.b16 %v3480
        %v3513 = vunpack.c.l.b16 %v3481
        %v3514 = vunpack.c.l.b16 %v3482
        %v3515 = vunpack.c.l.b16 %v3483
        %v3516 = vunpack.c.l.b16 %v3484
        %v3517 = vunpack.c.l.b16 %v3485
        %v3518 = vunpack.c.l.b16 %v3486
        %v3519 = vunpack.c.l.b16 %v3487
        %v3520 = vunpack.c.l.b16 %v3488
        %v3521 = vunpack.c.l.b16 %v3489
        %v3522 = vunpack.c.l.b16 %v3490
        %v3523 = vunpack.c.l.b16 %v3491
        %v3524 = vunpack.c.l.b16 %v3492
        %v3525 = vunpack.c.l.b16 %v3493
        %v3526 = vpack.c.b16 %v3511, %v3510
        %v3527 = vpack.c.b16 %v3513, %v3512
        %v3528 = vpack.c.b16 %v3515, %v3514
        %v3529 = vpack.c.b16 %v3517, %v3516
        %v3530 = vpack.c.b16 %v3519, %v3518
        %v3531 = vpack.c.b16 %v3521, %v3520
        %v3532 = vpack.c.b16 %v3523, %v3522
        %v3533 = vpack.c.b16 %v3525, %v3524
        %3542 = vmatprep.subr.bf16.mxu0 0
        %3543 = vmatpush1.bf16.msra.mxu0 %v3526
        %3544 = vmatprep.subr.bf16.mxu0 0
        %3545 = vmatpush1.bf16.msra.mxu0 %v3527
        %3546 = vmatprep.subr.bf16.mxu0 0
        %3547 = vmatpush1.bf16.msra.mxu0 %v3528
        %3548 = vmatprep.subr.bf16.mxu0 0
        %3549 = vmatpush1.bf16.msra.mxu0 %v3529
        %3550 = vmatprep.subr.bf16.mxu0 0
        %3551 = vmatpush1.bf16.msra.mxu0 %v3530
        %3552 = vmatprep.subr.bf16.mxu0 0
        %3553 = vmatpush1.bf16.msra.mxu0 %v3531
        %3554 = vmatprep.subr.bf16.mxu0 0
        %3555 = vmatpush1.bf16.msra.mxu0 %v3532
        %3556 = vmatprep.subr.bf16.mxu0 0
        %3557 = vmatpush1.bf16.msra.mxu0 %v3533
        %3558 = vmatprep.subr.bf16.mxu0 0
        %3559 = vmatpush1.bf16.msra.mxu0 0
        %3560 = vmatprep.subr.bf16.mxu0 0
        %3561 = vmatpush1.bf16.msra.mxu0 0
        %3562 = vmatprep.subr.bf16.mxu0 0
        %3563 = vmatpush1.bf16.msra.mxu0 0
        %3564 = vmatprep.subr.bf16.mxu0 0
        %3565 = vmatpush1.bf16.msra.mxu0 0
        %3566 = vmatprep.subr.bf16.mxu0 0
        %3567 = vmatpush1.bf16.msra.mxu0 0
        %3568 = vmatprep.subr.bf16.mxu0 0
        %3569 = vmatpush1.bf16.msra.mxu0 0
        %3570 = vmatprep.subr.bf16.mxu0 0
        %3571 = vmatpush1.bf16.msra.mxu0 0
        %3572 = vmatprep.subr.bf16.mxu0 0
        %3573 = vmatpush1.bf16.msra.mxu0 0
        %3574 = vmatprep.mubr.bf16.mxu0 0
        %3575 = vmatmul.mubr.bf16.gmra.mrb[0].mxu0 %v3477
        %v3576 = vpop.f32.mrb[0].mxu0
        %v3577 = vadd.f32 0.0, %v3576
        %v3578 = vpop.f32.mrb[0].mxu0
        %v3579 = vpop.f32.mrb[0].mxu0
        %v3580 = vpop.f32.mrb[0].mxu0
        %3581 = vdwg.mxu0
        %3582 = vst [vmem:[%s1564] sm:$0x3] %v3577
        %p3583 = scmp.lt.s32.totalorder %s15, 1
        %s3584 = scalar_select %p3583, %s15, 1
        %s3585 = smul.addr %s3584, 2
        %s3586 = scalar_lea.vmem %s4, %s3585
        // Predicated region
        $region78: #{dqn_forward.5} parent=72 // pred_check
          %p3587 = pneg %p132
        $region79: #{dqn_forward.5} parent=72 // pred_check_branch
          %3589 = sbr.rel (%p3587) target = $region81
        $region80: #{dqn_forward.5} parent=72 // pred_region
          _
        $region81: #{dqn_forward.5} parent=72 // pred_fallthru
          _
      $region73: #{dqn_forward.5} parent=5 // pred_fallthru
        _
      %p3590 = scmp.le.s32.totalorder 2, %s10
      // Predicated region
      $region82: #{dqn_forward.5} parent=5 // pred_check
        %p3591 = pneg %p3590
      $region83: #{dqn_forward.5} parent=5 // pred_check_branch
        %3593 = sbr.rel (%p3591) target = $region85
      $region84: #{dqn_forward.5} parent=5 // pred_region
        %s3594 = ssub.s32 %s10, 2
        // Predicated region
        $region86: #{dqn_forward.5} parent=84 // pred_check
          %p3595 = pneg %p138
        $region87: #{dqn_forward.5} parent=84 // pred_check_branch
          %3597 = sbr.rel (%p3595) target = $region89
        $region88: #{dqn_forward.5} parent=84 // pred_region
          %p3598 = scmp.lt.s32.totalorder %s16, 1
          %s3599 = scalar_select %p3598, %s16, 1
          %s3600 = smul.addr %s3599, 2
          %s3601 = scalar_lea.vmem %s4, %s3600
        $region89: #{dqn_forward.5} parent=84 // pred_fallthru
          _
      $region85: #{dqn_forward.5} parent=5 // pred_fallthru
        _
    $region6: #{dqn_forward.5} parent=1 // loop_footer
      %s14 = sadd.s32 1, %s10
    $region7: #{dqn_forward.5} parent=1 // loop_footer_branch
      %9 = sbr.rel target = $region3
    $region8: #{dqn_forward.5} parent=1 // loop_exit
      _

</llo_original>
